<compile_context>
chip_gen: v7x
topology: tpu7x:2x2x1
jax: 0.10.0
libtpu: 0.0.40
codegen_flags: <defaults>
</compile_context>

<pallas_src>
import functools

import jax
import jax.numpy as jnp
from jax.experimental import pallas as pl
from jax.experimental.pallas import tpu as pltpu


def _round_up(x: int, m: int) -> int:
    return (x + m - 1) // m * m


def _pick_time_chunk(T: int, max_chunk: int = 8) -> int:
    """Largest divisor of T that is <= max_chunk (bounded in-kernel unroll)."""
    for tt in range(min(T, max_chunk), 0, -1):
        if T % tt == 0:
            return tt
    return 1


def _lstm_chunk_kernel(xw_ref, whh_ref, h_ref, c_ref):
    """One time-chunk of the LSTM recurrence.

    xw_ref : (TT, Bp, 4*Hp) bf16  precomputed x @ W_ih^T + (b_ih + b_hh), gate-padded
    whh_ref: (Hp, 4*Hp)     bf16  recurrent weights (transposed, gate-padded)
    h_ref  : (Bp, Hp)       f32   OUTPUT block (constant index -> resident across the
                                  whole time grid; doubles as the running h state)
    c_ref  : (Bp, Hp)       f32   scratch: running cell state (persists across grid)
    """
    Hp = whh_ref.shape[0]
    TT = xw_ref.shape[0]

    @pl.when(pl.program_id(0) == 0)
    def _():
        h_ref[...] = jnp.zeros_like(h_ref)
        c_ref[...] = jnp.zeros_like(c_ref)

    def step(t, carry):
        h, c = carry
        # The only truly sequential matmul: (Bp,Hp)@(Hp,4Hp), bf16 operands, f32 acc.
        gates = xw_ref[t].astype(jnp.float32) + jnp.dot(
            h.astype(whh_ref.dtype), whh_ref[...],
            preferred_element_type=jnp.float32)            # (Bp, 4Hp) f32

        # Lane-aligned gate slices (Hp is a multiple of 128). PyTorch order [i,f,g,o].
        # TODO(synk): on v6e/v7x run sigmoid/tanh in bf16 (EUP is the saturating slot);
        # kept f32 here because v5e has no bf16 EUP/VPU.
        i = jax.nn.sigmoid(gates[:, 0 * Hp:1 * Hp])
        f = jax.nn.sigmoid(gates[:, 1 * Hp:2 * Hp])
        g = jnp.tanh(gates[:, 2 * Hp:3 * Hp])
        o = jax.nn.sigmoid(gates[:, 3 * Hp:4 * Hp])

        c = f * c + i * g
        h = o * jnp.tanh(c)
        return (h, c)

    # h/c are carried as values (vregs) across the bounded unroll; the refs are only
    # touched once per chunk.
    h, c = jax.lax.fori_loop(0, TT, step, (h_ref[...], c_ref[...]), unroll=True)
    h_ref[...] = h
    c_ref[...] = c


@functools.partial(jax.jit, static_argnames=("buffered_weights",))
def simple_lstm_baseline(seq, emb_table, w_ih, w_hh, b_ih, b_hh, w_pred, b_pred,
                         *, buffered_weights=True):
    """Forward pass of SimpleLSTMBaseline (num_linear=1 -> no extra linear layers).

    seq:       (T, B) int32 token ids (seq-first, PyTorch LSTM default)
    emb_table: (V, E) f32
    w_ih:      (4H, E), w_hh: (4H, H), b_ih/b_hh: (4H,)   -- PyTorch LSTM param shapes
    w_pred:    (1, H),  b_pred: (1,)
    returns:   (B, 1) f32
    """
    T, B = seq.shape
    E = emb_table.shape[1]
    H = w_hh.shape[1]
    Bp = _round_up(B, 8)      # sublane alignment
    Hp = _round_up(H, 128)    # lane alignment (per gate)
    TT = _pick_time_chunk(T)  # time-chunk streamed per grid step (bounded unroll)

    # ---- Plain-JAX glue: embedding gather + hoisted input projection (XLA MXU).
    # Batch padding is applied to the token ids (cheapest place); padded batch rows
    # are independent and simply discarded at the end.
    seq_p = jnp.pad(seq, ((0, 0), (0, Bp - B)))
    x = jnp.take(emb_table, seq_p, axis=0).astype(jnp.float32)          # (T, Bp, E)

    # Gate padding H -> Hp is folded into the (small) projection weights/bias so the
    # big matmul emits xw already in (T, Bp, 4*Hp) layout -- no pad pass over the
    # largest tensor. Zero-padded gate columns keep padded hidden units at exactly 0
    # for all t (g = tanh(0) = 0 => c_pad = h_pad = 0 forever).
    w_ih_p = jnp.pad(w_ih.reshape(4, H, E),
                     ((0, 0), (0, Hp - H), (0, 0))).reshape(4 * Hp, E)
    bias_p = jnp.pad((b_ih + b_hh).reshape(4, H),
                     ((0, 0), (0, Hp - H))).reshape(4 * Hp)

    xw = jnp.dot(x.reshape(T * Bp, E), w_ih_p.T,
                 preferred_element_type=jnp.float32) + bias_p           # (T*Bp, 4Hp)
    # bf16 stream: xw is the dominant HBM read (read exactly once by the kernel).
    xw = xw.reshape(T, Bp, 4 * Hp).astype(jnp.bfloat16)

    whh = jnp.pad(w_hh.T.reshape(H, 4, H),
                  ((0, Hp - H), (0, 0), (0, Hp - H)))
    whh = whh.reshape(Hp, 4 * Hp).astype(jnp.bfloat16)                  # bf16 MXU operand

    # ---- Pallas kernel: stream the time axis through the grid.
    # Recurrent weights have a constant block index; single-buffer them to avoid a
    # wasted second VMEM copy + redundant DMA (per perf review).
    if buffered_weights:
        whh_spec = pl.BlockSpec((Hp, 4 * Hp), lambda t: (0, 0),
                                pipeline_mode=pl.Buffered(1))
    else:
        whh_spec = pl.BlockSpec((Hp, 4 * Hp), lambda t: (0, 0))

    grid_spec = pltpu.PrefetchScalarGridSpec(
        num_scalar_prefetch=0,
        grid=(T // TT,),
        in_specs=[
            pl.BlockSpec((TT, Bp, 4 * Hp), lambda t: (t, 0, 0)),   # streamed bf16 chunk
            whh_spec,                                              # resident weights
        ],
        out_specs=pl.BlockSpec((Bp, Hp), lambda t: (0, 0)),        # resident h state
        scratch_shapes=[
            pltpu.VMEM((Bp, Hp), jnp.float32),                     # c state
        ],
    )
    # TODO(synk): for Bp >= 16 on v7x, add a leading "parallel" batch grid axis to
    # shard the (batch-parallel) recurrence across the two TensorCores.
    # TODO(synk): if HBM-bound and E << 4H, fuse the input projection into the kernel
    # (stream x in bf16 per chunk) so the 4H-wide slab never touches HBM.

    h_last = pl.pallas_call(
        _lstm_chunk_kernel,
        out_shape=jax.ShapeDtypeStruct((Bp, Hp), jnp.float32),
        grid_spec=grid_spec,
        compiler_params=pltpu.CompilerParams(
            dimension_semantics=("arbitrary",)),   # serial time recurrence
    )(xw, whh)

    # ---- Plain-JAX tail: feature = hdn[-1]; preds = predictor(feature).
    # Note: MXU occupancy of the per-step (Bp,Hp)@(Hp,4Hp) matmul is gated by Bp;
    # packing more sequences per call (Bp >= 64) matters more than micro-tuning.
    feature = h_last[:B, :H]
    return feature @ w_pred.T + b_pred


def _reference(seq, emb_table, w_ih, w_hh, b_ih, b_hh, w_pred, b_pred):
    """Pure-JAX reference matching torch.nn.LSTM semantics (f32 throughout)."""
    x = jnp.take(emb_table, seq, axis=0)  # (T, B, E)
    T, B, _ = x.shape
    H = w_hh.shape[1]
    h = jnp.zeros((B, H), jnp.float32)
    c = jnp.zeros((B, H), jnp.float32)

    def step(carry, x_t):
        h, c = carry
        gates = x_t @ w_ih.T + b_ih + h @ w_hh.T + b_hh
        i, f, g, o = jnp.split(gates, 4, axis=-1)
        i, f, o = jax.nn.sigmoid(i), jax.nn.sigmoid(f), jax.nn.sigmoid(o)
        g = jnp.tanh(g)
        c = f * c + i * g
        h = o * jnp.tanh(c)
        return (h, c), h

    (h, c), _ = jax.lax.scan(step, (h, c), x)
    return h @ w_pred.T + b_pred


if __name__ == "__main__":
    # Small deterministic setup: vocab=64, emb=32, hidden=32, seq=16, batch=4.
    # (B=4, H=32 exercise the Bp=8 / Hp=128 padding path; T=16 with TT=8 exercises
    #  the multi-chunk time streaming and the pl.when init path.)
    V, E, H, T, B = 64, 32, 32, 16, 4

    key = jax.random.PRNGKey(0)
    keys = jax.random.split(key, 8)
    seq = jax.random.randint(keys[0], (T, B), 0, V, dtype=jnp.int32)
    emb_table = jax.random.normal(keys[1], (V, E), jnp.float32) * 0.1
    w_ih = jax.random.normal(keys[2], (4 * H, E), jnp.float32) * 0.1
    w_hh = jax.random.normal(keys[3], (4 * H, H), jnp.float32) * 0.1
    b_ih = jax.random.normal(keys[4], (4 * H,), jnp.float32) * 0.1
    b_hh = jax.random.normal(keys[5], (4 * H,), jnp.float32) * 0.1
    w_pred = jax.random.normal(keys[6], (1, H), jnp.float32) * 0.1
    b_pred = jax.random.normal(keys[7], (1,), jnp.float32) * 0.1

    args = (seq, emb_table, w_ih, w_hh, b_ih, b_hh, w_pred, b_pred)
    try:
        preds = jax.block_until_ready(
            simple_lstm_baseline(*args, buffered_weights=True))
    except Exception:
        # Fallback if single-buffered weights (pl.Buffered(1)) are unsupported on
        # this jax/libtpu build; semantics identical, only VMEM usage differs.
        preds = jax.block_until_ready(
            simple_lstm_baseline(*args, buffered_weights=False))

    ref = _reference(*args)
    assert preds.shape == (B, 1)
    # bf16 xw stream + bf16 recurrent weights (f32 accumulation) -> looser tolerance.
    assert jnp.allclose(preds, ref, rtol=2e-2, atol=2e-2), (preds, ref)

    print("KERNEL_OK")
</pallas_src>

<mosaic_0001>
module attributes {stable_mosaic.version = 11 : i64} {
  func.func @_lstm_chunk_kernel(%arg0: i32, %arg1: memref<8x8x512xbf16, #tpu.memory_space<vmem>>, %arg2: memref<128x512xbf16, #tpu.memory_space<vmem>>, %arg3: memref<8x128xf32, #tpu.memory_space<vmem>>, %arg4: memref<8x128xf32, #tpu.memory_space<vmem>>) attributes {dimension_semantics = [#tpu.dimension_semantics<arbitrary>], iteration_bounds = array<i64: 2>, scalar_prefetch = 0 : i64, scratch_operands = 1 : i64, tpu.core_type = #tpu.core_type<tc>, window_params = [{transform_indices = @transform_0, window_bounds = array<i64: 8, 8, 512>}, {pipeline_mode = #tpu.pipeline_mode<synchronous>, transform_indices = @transform_1, window_bounds = array<i64: 128, 512>}, {pipeline_mode = #tpu.pipeline_mode<synchronous>, transform_indices = @transform_2, window_bounds = array<i64: 8, 128>}]} {
    %c0_i32 = arith.constant 0 : i32
    %0 = arith.cmpi eq, %arg0, %c0_i32 : i32
    %1 = arith.extui %0 : i1 to i32
    %c0_i32_0 = arith.constant 0 : i32
    %2 = arith.cmpi ne, %1, %c0_i32_0 : i32
    scf.if %2 {
      %cst_72 = arith.constant 0.000000e+00 : f32
      %271 = vector.broadcast %cst_72 : f32 to vector<8x128xf32>
      %c0_73 = arith.constant 0 : index
      %c0_74 = arith.constant 0 : index
      %272 = vector.load %arg3[%c0_73, %c0_74] : memref<8x128xf32, #tpu.memory_space<vmem>>, vector<8x128xf32>
      tpu.vector_store %arg3[%c0_73, %c0_74], %271 {strides = array<i32>} : memref<8x128xf32, #tpu.memory_space<vmem>>, vector<8x128xf32>,
      %cst_75 = arith.constant 0.000000e+00 : f32
      %273 = vector.broadcast %cst_75 : f32 to vector<8x128xf32>
      %c0_76 = arith.constant 0 : index
      %c0_77 = arith.constant 0 : index
      %274 = vector.load %arg4[%c0_76, %c0_77] : memref<8x128xf32, #tpu.memory_space<vmem>>, vector<8x128xf32>
      tpu.vector_store %arg4[%c0_76, %c0_77], %273 {strides = array<i32>} : memref<8x128xf32, #tpu.memory_space<vmem>>, vector<8x128xf32>,
    } else {
    }
    %c0 = arith.constant 0 : index
    %c0_1 = arith.constant 0 : index
    %3 = vector.load %arg3[%c0, %c0_1] : memref<8x128xf32, #tpu.memory_space<vmem>>, vector<8x128xf32>
    %c0_2 = arith.constant 0 : index
    %c0_3 = arith.constant 0 : index
    %4 = vector.load %arg4[%c0_2, %c0_3] : memref<8x128xf32, #tpu.memory_space<vmem>>, vector<8x128xf32>
    %c0_i32_4 = arith.constant 0 : i32
    %5 = arith.index_cast %c0_i32_4 : i32 to index
    %c0_5 = arith.constant 0 : index
    %c0_6 = arith.constant 0 : index
    %6 = vector.load %arg1[%5, %c0_5, %c0_6] : memref<8x8x512xbf16, #tpu.memory_space<vmem>>, vector<1x8x512xbf16>
    %7 = vector.shape_cast %6 : vector<1x8x512xbf16> to vector<8x512xbf16>
    %8 = arith.extf %7 : vector<8x512xbf16> to vector<8x512xf32>
    %9 = arith.truncf %3 : vector<8x128xf32> to vector<8x128xbf16>
    %c0_7 = arith.constant 0 : index
    %c0_8 = arith.constant 0 : index
    %10 = vector.load %arg2[%c0_7, %c0_8] : memref<128x512xbf16, #tpu.memory_space<vmem>>, vector<128x512xbf16>
    %cst = arith.constant dense<0.000000e+00> : vector<8x512xf32>
    %11 = tpu.matmul %9, %10, %cst {dimension_numbers = #tpu.dot_dimension_numbers<[1], [0], [0], [1], [0, 0, 1, 1], [], []>} : vector<8x128xbf16>, vector<128x512xbf16>, vector<8x512xf32> -> vector<8x512xf32>
    %12 = arith.addf %8, %11 : vector<8x512xf32>
    %13 = vector.extract_strided_slice %12 {offsets = [0, 0], sizes = [8, 128], strides = [1, 1]} : vector<8x512xf32> to vector<8x128xf32>
    %14 = arith.negf %13 : vector<8x128xf32>
    %15 = math.exp %14 : vector<8x128xf32>
    %cst_9 = arith.constant 1.000000e+00 : f32
    %16 = vector.broadcast %cst_9 : f32 to vector<8x128xf32>
    %17 = arith.addf %16, %15 : vector<8x128xf32>
    %18 = arith.divf %16, %17 : vector<8x128xf32>
    %19 = vector.extract_strided_slice %12 {offsets = [0, 128], sizes = [8, 128], strides = [1, 1]} : vector<8x512xf32> to vector<8x128xf32>
    %20 = arith.negf %19 : vector<8x128xf32>
    %21 = math.exp %20 : vector<8x128xf32>
    %cst_10 = arith.constant 1.000000e+00 : f32
    %22 = vector.broadcast %cst_10 : f32 to vector<8x128xf32>
    %23 = arith.addf %22, %21 : vector<8x128xf32>
    %24 = arith.divf %22, %23 : vector<8x128xf32>
    %25 = vector.extract_strided_slice %12 {offsets = [0, 256], sizes = [8, 128], strides = [1, 1]} : vector<8x512xf32> to vector<8x128xf32>
    %26 = math.tanh %25 : vector<8x128xf32>
    %27 = vector.extract_strided_slice %12 {offsets = [0, 384], sizes = [8, 128], strides = [1, 1]} : vector<8x512xf32> to vector<8x128xf32>
    %28 = arith.negf %27 : vector<8x128xf32>
    %29 = math.exp %28 : vector<8x128xf32>
    %cst_11 = arith.constant 1.000000e+00 : f32
    %30 = vector.broadcast %cst_11 : f32 to vector<8x128xf32>
    %31 = arith.addf %30, %29 : vector<8x128xf32>
    %32 = arith.divf %30, %31 : vector<8x128xf32>
    %33 = arith.mulf %24, %4 : vector<8x128xf32>
    %34 = arith.mulf %18, %26 : vector<8x128xf32>
    %35 = arith.addf %33, %34 : vector<8x128xf32>
    %36 = math.tanh %35 : vector<8x128xf32>
    %37 = arith.mulf %32, %36 : vector<8x128xf32>
    %c1_i32 = arith.constant 1 : i32
    %38 = arith.index_cast %c1_i32 : i32 to index
    %c0_12 = arith.constant 0 : index
    %c0_13 = arith.constant 0 : index
    %39 = vector.load %arg1[%38, %c0_12, %c0_13] : memref<8x8x512xbf16, #tpu.memory_space<vmem>>, vector<1x8x512xbf16>
    %40 = vector.shape_cast %39 : vector<1x8x512xbf16> to vector<8x512xbf16>
    %41 = arith.extf %40 : vector<8x512xbf16> to vector<8x512xf32>
    %42 = arith.truncf %37 : vector<8x128xf32> to vector<8x128xbf16>
    %c0_14 = arith.constant 0 : index
    %c0_15 = arith.constant 0 : index
    %43 = vector.load %arg2[%c0_14, %c0_15] : memref<128x512xbf16, #tpu.memory_space<vmem>>, vector<128x512xbf16>
    %cst_16 = arith.constant dense<0.000000e+00> : vector<8x512xf32>
    %44 = tpu.matmul %42, %43, %cst_16 {dimension_numbers = #tpu.dot_dimension_numbers<[1], [0], [0], [1], [0, 0, 1, 1], [], []>} : vector<8x128xbf16>, vector<128x512xbf16>, vector<8x512xf32> -> vector<8x512xf32>
    %45 = arith.addf %41, %44 : vector<8x512xf32>
    %46 = vector.extract_strided_slice %45 {offsets = [0, 0], sizes = [8, 128], strides = [1, 1]} : vector<8x512xf32> to vector<8x128xf32>
    %47 = arith.negf %46 : vector<8x128xf32>
    %48 = math.exp %47 : vector<8x128xf32>
    %cst_17 = arith.constant 1.000000e+00 : f32
    %49 = vector.broadcast %cst_17 : f32 to vector<8x128xf32>
    %50 = arith.addf %49, %48 : vector<8x128xf32>
    %51 = arith.divf %49, %50 : vector<8x128xf32>
    %52 = vector.extract_strided_slice %45 {offsets = [0, 128], sizes = [8, 128], strides = [1, 1]} : vector<8x512xf32> to vector<8x128xf32>
    %53 = arith.negf %52 : vector<8x128xf32>
    %54 = math.exp %53 : vector<8x128xf32>
    %cst_18 = arith.constant 1.000000e+00 : f32
    %55 = vector.broadcast %cst_18 : f32 to vector<8x128xf32>
    %56 = arith.addf %55, %54 : vector<8x128xf32>
    %57 = arith.divf %55, %56 : vector<8x128xf32>
    %58 = vector.extract_strided_slice %45 {offsets = [0, 256], sizes = [8, 128], strides = [1, 1]} : vector<8x512xf32> to vector<8x128xf32>
    %59 = math.tanh %58 : vector<8x128xf32>
    %60 = vector.extract_strided_slice %45 {offsets = [0, 384], sizes = [8, 128], strides = [1, 1]} : vector<8x512xf32> to vector<8x128xf32>
    %61 = arith.negf %60 : vector<8x128xf32>
    %62 = math.exp %61 : vector<8x128xf32>
    %cst_19 = arith.constant 1.000000e+00 : f32
    %63 = vector.broadcast %cst_19 : f32 to vector<8x128xf32>
    %64 = arith.addf %63, %62 : vector<8x128xf32>
    %65 = arith.divf %63, %64 : vector<8x128xf32>
    %66 = arith.mulf %57, %35 : vector<8x128xf32>
    %67 = arith.mulf %51, %59 : vector<8x128xf32>
    %68 = arith.addf %66, %67 : vector<8x128xf32>
    %69 = math.tanh %68 : vector<8x128xf32>
    %70 = arith.mulf %65, %69 : vector<8x128xf32>
    %c2_i32 = arith.constant 2 : i32
    %71 = arith.index_cast %c2_i32 : i32 to index
    %c0_20 = arith.constant 0 : index
    %c0_21 = arith.constant 0 : index
    %72 = vector.load %arg1[%71, %c0_20, %c0_21] : memref<8x8x512xbf16, #tpu.memory_space<vmem>>, vector<1x8x512xbf16>
    %73 = vector.shape_cast %72 : vector<1x8x512xbf16> to vector<8x512xbf16>
    %74 = arith.extf %73 : vector<8x512xbf16> to vector<8x512xf32>
    %75 = arith.truncf %70 : vector<8x128xf32> to vector<8x128xbf16>
    %c0_22 = arith.constant 0 : index
    %c0_23 = arith.constant 0 : index
    %76 = vector.load %arg2[%c0_22, %c0_23] : memref<128x512xbf16, #tpu.memory_space<vmem>>, vector<128x512xbf16>
    %cst_24 = arith.constant dense<0.000000e+00> : vector<8x512xf32>
    %77 = tpu.matmul %75, %76, %cst_24 {dimension_numbers = #tpu.dot_dimension_numbers<[1], [0], [0], [1], [0, 0, 1, 1], [], []>} : vector<8x128xbf16>, vector<128x512xbf16>, vector<8x512xf32> -> vector<8x512xf32>
    %78 = arith.addf %74, %77 : vector<8x512xf32>
    %79 = vector.extract_strided_slice %78 {offsets = [0, 0], sizes = [8, 128], strides = [1, 1]} : vector<8x512xf32> to vector<8x128xf32>
    %80 = arith.negf %79 : vector<8x128xf32>
    %81 = math.exp %80 : vector<8x128xf32>
    %cst_25 = arith.constant 1.000000e+00 : f32
    %82 = vector.broadcast %cst_25 : f32 to vector<8x128xf32>
    %83 = arith.addf %82, %81 : vector<8x128xf32>
    %84 = arith.divf %82, %83 : vector<8x128xf32>
    %85 = vector.extract_strided_slice %78 {offsets = [0, 128], sizes = [8, 128], strides = [1, 1]} : vector<8x512xf32> to vector<8x128xf32>
    %86 = arith.negf %85 : vector<8x128xf32>
    %87 = math.exp %86 : vector<8x128xf32>
    %cst_26 = arith.constant 1.000000e+00 : f32
    %88 = vector.broadcast %cst_26 : f32 to vector<8x128xf32>
    %89 = arith.addf %88, %87 : vector<8x128xf32>
    %90 = arith.divf %88, %89 : vector<8x128xf32>
    %91 = vector.extract_strided_slice %78 {offsets = [0, 256], sizes = [8, 128], strides = [1, 1]} : vector<8x512xf32> to vector<8x128xf32>
    %92 = math.tanh %91 : vector<8x128xf32>
    %93 = vector.extract_strided_slice %78 {offsets = [0, 384], sizes = [8, 128], strides = [1, 1]} : vector<8x512xf32> to vector<8x128xf32>
    %94 = arith.negf %93 : vector<8x128xf32>
    %95 = math.exp %94 : vector<8x128xf32>
    %cst_27 = arith.constant 1.000000e+00 : f32
    %96 = vector.broadcast %cst_27 : f32 to vector<8x128xf32>
    %97 = arith.addf %96, %95 : vector<8x128xf32>
    %98 = arith.divf %96, %97 : vector<8x128xf32>
    %99 = arith.mulf %90, %68 : vector<8x128xf32>
    %100 = arith.mulf %84, %92 : vector<8x128xf32>
    %101 = arith.addf %99, %100 : vector<8x128xf32>
    %102 = math.tanh %101 : vector<8x128xf32>
    %103 = arith.mulf %98, %102 : vector<8x128xf32>
    %c3_i32 = arith.constant 3 : i32
    %104 = arith.index_cast %c3_i32 : i32 to index
    %c0_28 = arith.constant 0 : index
    %c0_29 = arith.constant 0 : index
    %105 = vector.load %arg1[%104, %c0_28, %c0_29] : memref<8x8x512xbf16, #tpu.memory_space<vmem>>, vector<1x8x512xbf16>
    %106 = vector.shape_cast %105 : vector<1x8x512xbf16> to vector<8x512xbf16>
    %107 = arith.extf %106 : vector<8x512xbf16> to vector<8x512xf32>
    %108 = arith.truncf %103 : vector<8x128xf32> to vector<8x128xbf16>
    %c0_30 = arith.constant 0 : index
    %c0_31 = arith.constant 0 : index
    %109 = vector.load %arg2[%c0_30, %c0_31] : memref<128x512xbf16, #tpu.memory_space<vmem>>, vector<128x512xbf16>
    %cst_32 = arith.constant dense<0.000000e+00> : vector<8x512xf32>
    %110 = tpu.matmul %108, %109, %cst_32 {dimension_numbers = #tpu.dot_dimension_numbers<[1], [0], [0], [1], [0, 0, 1, 1], [], []>} : vector<8x128xbf16>, vector<128x512xbf16>, vector<8x512xf32> -> vector<8x512xf32>
    %111 = arith.addf %107, %110 : vector<8x512xf32>
    %112 = vector.extract_strided_slice %111 {offsets = [0, 0], sizes = [8, 128], strides = [1, 1]} : vector<8x512xf32> to vector<8x128xf32>
    %113 = arith.negf %112 : vector<8x128xf32>
    %114 = math.exp %113 : vector<8x128xf32>
    %cst_33 = arith.constant 1.000000e+00 : f32
    %115 = vector.broadcast %cst_33 : f32 to vector<8x128xf32>
    %116 = arith.addf %115, %114 : vector<8x128xf32>
    %117 = arith.divf %115, %116 : vector<8x128xf32>
    %118 = vector.extract_strided_slice %111 {offsets = [0, 128], sizes = [8, 128], strides = [1, 1]} : vector<8x512xf32> to vector<8x128xf32>
    %119 = arith.negf %118 : vector<8x128xf32>
    %120 = math.exp %119 : vector<8x128xf32>
    %cst_34 = arith.constant 1.000000e+00 : f32
    %121 = vector.broadcast %cst_34 : f32 to vector<8x128xf32>
    %122 = arith.addf %121, %120 : vector<8x128xf32>
    %123 = arith.divf %121, %122 : vector<8x128xf32>
    %124 = vector.extract_strided_slice %111 {offsets = [0, 256], sizes = [8, 128], strides = [1, 1]} : vector<8x512xf32> to vector<8x128xf32>
    %125 = math.tanh %124 : vector<8x128xf32>
    %126 = vector.extract_strided_slice %111 {offsets = [0, 384], sizes = [8, 128], strides = [1, 1]} : vector<8x512xf32> to vector<8x128xf32>
    %127 = arith.negf %126 : vector<8x128xf32>
    %128 = math.exp %127 : vector<8x128xf32>
    %cst_35 = arith.constant 1.000000e+00 : f32
    %129 = vector.broadcast %cst_35 : f32 to vector<8x128xf32>
    %130 = arith.addf %129, %128 : vector<8x128xf32>
    %131 = arith.divf %129, %130 : vector<8x128xf32>
    %132 = arith.mulf %123, %101 : vector<8x128xf32>
    %133 = arith.mulf %117, %125 : vector<8x128xf32>
    %134 = arith.addf %132, %133 : vector<8x128xf32>
    %135 = math.tanh %134 : vector<8x128xf32>
    %136 = arith.mulf %131, %135 : vector<8x128xf32>
    %c4_i32 = arith.constant 4 : i32
    %137 = arith.index_cast %c4_i32 : i32 to index
    %c0_36 = arith.constant 0 : index
    %c0_37 = arith.constant 0 : index
    %138 = vector.load %arg1[%137, %c0_36, %c0_37] : memref<8x8x512xbf16, #tpu.memory_space<vmem>>, vector<1x8x512xbf16>
    %139 = vector.shape_cast %138 : vector<1x8x512xbf16> to vector<8x512xbf16>
    %140 = arith.extf %139 : vector<8x512xbf16> to vector<8x512xf32>
    %141 = arith.truncf %136 : vector<8x128xf32> to vector<8x128xbf16>
    %c0_38 = arith.constant 0 : index
    %c0_39 = arith.constant 0 : index
    %142 = vector.load %arg2[%c0_38, %c0_39] : memref<128x512xbf16, #tpu.memory_space<vmem>>, vector<128x512xbf16>
    %cst_40 = arith.constant dense<0.000000e+00> : vector<8x512xf32>
    %143 = tpu.matmul %141, %142, %cst_40 {dimension_numbers = #tpu.dot_dimension_numbers<[1], [0], [0], [1], [0, 0, 1, 1], [], []>} : vector<8x128xbf16>, vector<128x512xbf16>, vector<8x512xf32> -> vector<8x512xf32>
    %144 = arith.addf %140, %143 : vector<8x512xf32>
    %145 = vector.extract_strided_slice %144 {offsets = [0, 0], sizes = [8, 128], strides = [1, 1]} : vector<8x512xf32> to vector<8x128xf32>
    %146 = arith.negf %145 : vector<8x128xf32>
    %147 = math.exp %146 : vector<8x128xf32>
    %cst_41 = arith.constant 1.000000e+00 : f32
    %148 = vector.broadcast %cst_41 : f32 to vector<8x128xf32>
    %149 = arith.addf %148, %147 : vector<8x128xf32>
    %150 = arith.divf %148, %149 : vector<8x128xf32>
    %151 = vector.extract_strided_slice %144 {offsets = [0, 128], sizes = [8, 128], strides = [1, 1]} : vector<8x512xf32> to vector<8x128xf32>
    %152 = arith.negf %151 : vector<8x128xf32>
    %153 = math.exp %152 : vector<8x128xf32>
    %cst_42 = arith.constant 1.000000e+00 : f32
    %154 = vector.broadcast %cst_42 : f32 to vector<8x128xf32>
    %155 = arith.addf %154, %153 : vector<8x128xf32>
    %156 = arith.divf %154, %155 : vector<8x128xf32>
    %157 = vector.extract_strided_slice %144 {offsets = [0, 256], sizes = [8, 128], strides = [1, 1]} : vector<8x512xf32> to vector<8x128xf32>
    %158 = math.tanh %157 : vector<8x128xf32>
    %159 = vector.extract_strided_slice %144 {offsets = [0, 384], sizes = [8, 128], strides = [1, 1]} : vector<8x512xf32> to vector<8x128xf32>
    %160 = arith.negf %159 : vector<8x128xf32>
    %161 = math.exp %160 : vector<8x128xf32>
    %cst_43 = arith.constant 1.000000e+00 : f32
    %162 = vector.broadcast %cst_43 : f32 to vector<8x128xf32>
    %163 = arith.addf %162, %161 : vector<8x128xf32>
    %164 = arith.divf %162, %163 : vector<8x128xf32>
    %165 = arith.mulf %156, %134 : vector<8x128xf32>
    %166 = arith.mulf %150, %158 : vector<8x128xf32>
    %167 = arith.addf %165, %166 : vector<8x128xf32>
    %168 = math.tanh %167 : vector<8x128xf32>
    %169 = arith.mulf %164, %168 : vector<8x128xf32>
    %c5_i32 = arith.constant 5 : i32
    %170 = arith.index_cast %c5_i32 : i32 to index
    %c0_44 = arith.constant 0 : index
    %c0_45 = arith.constant 0 : index
    %171 = vector.load %arg1[%170, %c0_44, %c0_45] : memref<8x8x512xbf16, #tpu.memory_space<vmem>>, vector<1x8x512xbf16>
    %172 = vector.shape_cast %171 : vector<1x8x512xbf16> to vector<8x512xbf16>
    %173 = arith.extf %172 : vector<8x512xbf16> to vector<8x512xf32>
    %174 = arith.truncf %169 : vector<8x128xf32> to vector<8x128xbf16>
    %c0_46 = arith.constant 0 : index
    %c0_47 = arith.constant 0 : index
    %175 = vector.load %arg2[%c0_46, %c0_47] : memref<128x512xbf16, #tpu.memory_space<vmem>>, vector<128x512xbf16>
    %cst_48 = arith.constant dense<0.000000e+00> : vector<8x512xf32>
    %176 = tpu.matmul %174, %175, %cst_48 {dimension_numbers = #tpu.dot_dimension_numbers<[1], [0], [0], [1], [0, 0, 1, 1], [], []>} : vector<8x128xbf16>, vector<128x512xbf16>, vector<8x512xf32> -> vector<8x512xf32>
    %177 = arith.addf %173, %176 : vector<8x512xf32>
    %178 = vector.extract_strided_slice %177 {offsets = [0, 0], sizes = [8, 128], strides = [1, 1]} : vector<8x512xf32> to vector<8x128xf32>
    %179 = arith.negf %178 : vector<8x128xf32>
    %180 = math.exp %179 : vector<8x128xf32>
    %cst_49 = arith.constant 1.000000e+00 : f32
    %181 = vector.broadcast %cst_49 : f32 to vector<8x128xf32>
    %182 = arith.addf %181, %180 : vector<8x128xf32>
    %183 = arith.divf %181, %182 : vector<8x128xf32>
    %184 = vector.extract_strided_slice %177 {offsets = [0, 128], sizes = [8, 128], strides = [1, 1]} : vector<8x512xf32> to vector<8x128xf32>
    %185 = arith.negf %184 : vector<8x128xf32>
    %186 = math.exp %185 : vector<8x128xf32>
    %cst_50 = arith.constant 1.000000e+00 : f32
    %187 = vector.broadcast %cst_50 : f32 to vector<8x128xf32>
    %188 = arith.addf %187, %186 : vector<8x128xf32>
    %189 = arith.divf %187, %188 : vector<8x128xf32>
    %190 = vector.extract_strided_slice %177 {offsets = [0, 256], sizes = [8, 128], strides = [1, 1]} : vector<8x512xf32> to vector<8x128xf32>
    %191 = math.tanh %190 : vector<8x128xf32>
    %192 = vector.extract_strided_slice %177 {offsets = [0, 384], sizes = [8, 128], strides = [1, 1]} : vector<8x512xf32> to vector<8x128xf32>
    %193 = arith.negf %192 : vector<8x128xf32>
    %194 = math.exp %193 : vector<8x128xf32>
    %cst_51 = arith.constant 1.000000e+00 : f32
    %195 = vector.broadcast %cst_51 : f32 to vector<8x128xf32>
    %196 = arith.addf %195, %194 : vector<8x128xf32>
    %197 = arith.divf %195, %196 : vector<8x128xf32>
    %198 = arith.mulf %189, %167 : vector<8x128xf32>
    %199 = arith.mulf %183, %191 : vector<8x128xf32>
    %200 = arith.addf %198, %199 : vector<8x128xf32>
    %201 = math.tanh %200 : vector<8x128xf32>
    %202 = arith.mulf %197, %201 : vector<8x128xf32>
    %c6_i32 = arith.constant 6 : i32
    %203 = arith.index_cast %c6_i32 : i32 to index
    %c0_52 = arith.constant 0 : index
    %c0_53 = arith.constant 0 : index
    %204 = vector.load %arg1[%203, %c0_52, %c0_53] : memref<8x8x512xbf16, #tpu.memory_space<vmem>>, vector<1x8x512xbf16>
    %205 = vector.shape_cast %204 : vector<1x8x512xbf16> to vector<8x512xbf16>
    %206 = arith.extf %205 : vector<8x512xbf16> to vector<8x512xf32>
    %207 = arith.truncf %202 : vector<8x128xf32> to vector<8x128xbf16>
    %c0_54 = arith.constant 0 : index
    %c0_55 = arith.constant 0 : index
    %208 = vector.load %arg2[%c0_54, %c0_55] : memref<128x512xbf16, #tpu.memory_space<vmem>>, vector<128x512xbf16>
    %cst_56 = arith.constant dense<0.000000e+00> : vector<8x512xf32>
    %209 = tpu.matmul %207, %208, %cst_56 {dimension_numbers = #tpu.dot_dimension_numbers<[1], [0], [0], [1], [0, 0, 1, 1], [], []>} : vector<8x128xbf16>, vector<128x512xbf16>, vector<8x512xf32> -> vector<8x512xf32>
    %210 = arith.addf %206, %209 : vector<8x512xf32>
    %211 = vector.extract_strided_slice %210 {offsets = [0, 0], sizes = [8, 128], strides = [1, 1]} : vector<8x512xf32> to vector<8x128xf32>
    %212 = arith.negf %211 : vector<8x128xf32>
    %213 = math.exp %212 : vector<8x128xf32>
    %cst_57 = arith.constant 1.000000e+00 : f32
    %214 = vector.broadcast %cst_57 : f32 to vector<8x128xf32>
    %215 = arith.addf %214, %213 : vector<8x128xf32>
    %216 = arith.divf %214, %215 : vector<8x128xf32>
    %217 = vector.extract_strided_slice %210 {offsets = [0, 128], sizes = [8, 128], strides = [1, 1]} : vector<8x512xf32> to vector<8x128xf32>
    %218 = arith.negf %217 : vector<8x128xf32>
    %219 = math.exp %218 : vector<8x128xf32>
    %cst_58 = arith.constant 1.000000e+00 : f32
    %220 = vector.broadcast %cst_58 : f32 to vector<8x128xf32>
    %221 = arith.addf %220, %219 : vector<8x128xf32>
    %222 = arith.divf %220, %221 : vector<8x128xf32>
    %223 = vector.extract_strided_slice %210 {offsets = [0, 256], sizes = [8, 128], strides = [1, 1]} : vector<8x512xf32> to vector<8x128xf32>
    %224 = math.tanh %223 : vector<8x128xf32>
    %225 = vector.extract_strided_slice %210 {offsets = [0, 384], sizes = [8, 128], strides = [1, 1]} : vector<8x512xf32> to vector<8x128xf32>
    %226 = arith.negf %225 : vector<8x128xf32>
    %227 = math.exp %226 : vector<8x128xf32>
    %cst_59 = arith.constant 1.000000e+00 : f32
    %228 = vector.broadcast %cst_59 : f32 to vector<8x128xf32>
    %229 = arith.addf %228, %227 : vector<8x128xf32>
    %230 = arith.divf %228, %229 : vector<8x128xf32>
    %231 = arith.mulf %222, %200 : vector<8x128xf32>
    %232 = arith.mulf %216, %224 : vector<8x128xf32>
    %233 = arith.addf %231, %232 : vector<8x128xf32>
    %234 = math.tanh %233 : vector<8x128xf32>
    %235 = arith.mulf %230, %234 : vector<8x128xf32>
    %c7_i32 = arith.constant 7 : i32
    %236 = arith.index_cast %c7_i32 : i32 to index
    %c0_60 = arith.constant 0 : index
    %c0_61 = arith.constant 0 : index
    %237 = vector.load %arg1[%236, %c0_60, %c0_61] : memref<8x8x512xbf16, #tpu.memory_space<vmem>>, vector<1x8x512xbf16>
    %238 = vector.shape_cast %237 : vector<1x8x512xbf16> to vector<8x512xbf16>
    %239 = arith.extf %238 : vector<8x512xbf16> to vector<8x512xf32>
    %240 = arith.truncf %235 : vector<8x128xf32> to vector<8x128xbf16>
    %c0_62 = arith.constant 0 : index
    %c0_63 = arith.constant 0 : index
    %241 = vector.load %arg2[%c0_62, %c0_63] : memref<128x512xbf16, #tpu.memory_space<vmem>>, vector<128x512xbf16>
    %cst_64 = arith.constant dense<0.000000e+00> : vector<8x512xf32>
    %242 = tpu.matmul %240, %241, %cst_64 {dimension_numbers = #tpu.dot_dimension_numbers<[1], [0], [0], [1], [0, 0, 1, 1], [], []>} : vector<8x128xbf16>, vector<128x512xbf16>, vector<8x512xf32> -> vector<8x512xf32>
    %243 = arith.addf %239, %242 : vector<8x512xf32>
    %244 = vector.extract_strided_slice %243 {offsets = [0, 0], sizes = [8, 128], strides = [1, 1]} : vector<8x512xf32> to vector<8x128xf32>
    %245 = arith.negf %244 : vector<8x128xf32>
    %246 = math.exp %245 : vector<8x128xf32>
    %cst_65 = arith.constant 1.000000e+00 : f32
    %247 = vector.broadcast %cst_65 : f32 to vector<8x128xf32>
    %248 = arith.addf %247, %246 : vector<8x128xf32>
    %249 = arith.divf %247, %248 : vector<8x128xf32>
    %250 = vector.extract_strided_slice %243 {offsets = [0, 128], sizes = [8, 128], strides = [1, 1]} : vector<8x512xf32> to vector<8x128xf32>
    %251 = arith.negf %250 : vector<8x128xf32>
    %252 = math.exp %251 : vector<8x128xf32>
    %cst_66 = arith.constant 1.000000e+00 : f32
    %253 = vector.broadcast %cst_66 : f32 to vector<8x128xf32>
    %254 = arith.addf %253, %252 : vector<8x128xf32>
    %255 = arith.divf %253, %254 : vector<8x128xf32>
    %256 = vector.extract_strided_slice %243 {offsets = [0, 256], sizes = [8, 128], strides = [1, 1]} : vector<8x512xf32> to vector<8x128xf32>
    %257 = math.tanh %256 : vector<8x128xf32>
    %258 = vector.extract_strided_slice %243 {offsets = [0, 384], sizes = [8, 128], strides = [1, 1]} : vector<8x512xf32> to vector<8x128xf32>
    %259 = arith.negf %258 : vector<8x128xf32>
    %260 = math.exp %259 : vector<8x128xf32>
    %cst_67 = arith.constant 1.000000e+00 : f32
    %261 = vector.broadcast %cst_67 : f32 to vector<8x128xf32>
    %262 = arith.addf %261, %260 : vector<8x128xf32>
    %263 = arith.divf %261, %262 : vector<8x128xf32>
    %264 = arith.mulf %255, %233 : vector<8x128xf32>
    %265 = arith.mulf %249, %257 : vector<8x128xf32>
    %266 = arith.addf %264, %265 : vector<8x128xf32>
    %267 = math.tanh %266 : vector<8x128xf32>
    %268 = arith.mulf %263, %267 : vector<8x128xf32>
    %c8_i32 = arith.constant 8 : i32
    %c0_68 = arith.constant 0 : index
    %c0_69 = arith.constant 0 : index
    %269 = vector.load %arg3[%c0_68, %c0_69] : memref<8x128xf32, #tpu.memory_space<vmem>>, vector<8x128xf32>
    tpu.vector_store %arg3[%c0_68, %c0_69], %268 {strides = array<i32>} : memref<8x128xf32, #tpu.memory_space<vmem>>, vector<8x128xf32>,
    %c0_70 = arith.constant 0 : index
    %c0_71 = arith.constant 0 : index
    %270 = vector.load %arg4[%c0_70, %c0_71] : memref<8x128xf32, #tpu.memory_space<vmem>>, vector<8x128xf32>
    tpu.vector_store %arg4[%c0_70, %c0_71], %266 {strides = array<i32>} : memref<8x128xf32, #tpu.memory_space<vmem>>, vector<8x128xf32>,
    return
  }
  func.func @transform_0(%arg0: i32) -> (i32, i32, i32) {
    %c0_i32 = arith.constant 0 : i32
    %c0_i32_0 = arith.constant 0 : i32
    %c0_i32_1 = arith.constant 0 : i32
    return %arg0, %c0_i32, %c0_i32_0 : i32, i32, i32
  }
  func.func @transform_1(%arg0: i32) -> (i32, i32) {
    %c0_i32 = arith.constant 0 : i32
    %c0_i32_0 = arith.constant 0 : i32
    %c0_i32_1 = arith.constant 0 : i32
    return %c0_i32, %c0_i32_0 : i32, i32
  }
  func.func @transform_2(%arg0: i32) -> (i32, i32) {
    %c0_i32 = arith.constant 0 : i32
    %c0_i32_0 = arith.constant 0 : i32
    %c0_i32_1 = arith.constant 0 : i32
    return %c0_i32, %c0_i32_0 : i32, i32
  }
}

module attributes {stable_mosaic.version = 11 : i64} {
  func.func @_lstm_chunk_kernel(%arg0: i32, %arg1: memref<8x8x512xbf16, #tpu.memory_space<vmem>>, %arg2: memref<128x512xbf16, #tpu.memory_space<vmem>>, %arg3: memref<8x128xf32, #tpu.memory_space<vmem>>, %arg4: memref<8x128xf32, #tpu.memory_space<vmem>>) attributes {dimension_semantics = [#tpu.dimension_semantics<arbitrary>], iteration_bounds = array<i64: 2>, scalar_prefetch = 0 : i64, scratch_operands = 1 : i64, tpu.core_type = #tpu.core_type<tc>, window_params = [{transform_indices = @transform_0, window_bounds = array<i64: 8, 8, 512>}, {pipeline_mode = #tpu.pipeline_mode<synchronous>, transform_indices = @transform_1, window_bounds = array<i64: 128, 512>}, {pipeline_mode = #tpu.pipeline_mode<synchronous>, transform_indices = @transform_2, window_bounds = array<i64: 8, 128>}]} {
    %c0_i32 = arith.constant 0 : i32
    %0 = arith.cmpi eq, %arg0, %c0_i32 : i32
    %1 = arith.extui %0 : i1 to i32
    %c0_i32_0 = arith.constant 0 : i32
    %2 = arith.cmpi ne, %1, %c0_i32_0 : i32
    scf.if %2 {
      %cst_72 = arith.constant 0.000000e+00 : f32
      %271 = vector.broadcast %cst_72 : f32 to vector<8x128xf32>
      %c0_73 = arith.constant 0 : index
      %c0_74 = arith.constant 0 : index
      %272 = vector.load %arg3[%c0_73, %c0_74] : memref<8x128xf32, #tpu.memory_space<vmem>>, vector<8x128xf32>
      tpu.vector_store %arg3[%c0_73, %c0_74], %271 {strides = array<i32>} : memref<8x128xf32, #tpu.memory_space<vmem>>, vector<8x128xf32>,
      %cst_75 = arith.constant 0.000000e+00 : f32
      %273 = vector.broadcast %cst_75 : f32 to vector<8x128xf32>
      %c0_76 = arith.constant 0 : index
      %c0_77 = arith.constant 0 : index
      %274 = vector.load %arg4[%c0_76, %c0_77] : memref<8x128xf32, #tpu.memory_space<vmem>>, vector<8x128xf32>
      tpu.vector_store %arg4[%c0_76, %c0_77], %273 {strides = array<i32>} : memref<8x128xf32, #tpu.memory_space<vmem>>, vector<8x128xf32>,
    } else {
    }
    %c0 = arith.constant 0 : index
    %c0_1 = arith.constant 0 : index
    %3 = vector.load %arg3[%c0, %c0_1] : memref<8x128xf32, #tpu.memory_space<vmem>>, vector<8x128xf32>
    %c0_2 = arith.constant 0 : index
    %c0_3 = arith.constant 0 : index
    %4 = vector.load %arg4[%c0_2, %c0_3] : memref<8x128xf32, #tpu.memory_space<vmem>>, vector<8x128xf32>
    %c0_i32_4 = arith.constant 0 : i32
    %5 = arith.index_cast %c0_i32_4 : i32 to index
    %c0_5 = arith.constant 0 : index
    %c0_6 = arith.constant 0 : index
    %6 = vector.load %arg1[%5, %c0_5, %c0_6] : memref<8x8x512xbf16, #tpu.memory_space<vmem>>, vector<1x8x512xbf16>
    %7 = vector.shape_cast %6 : vector<1x8x512xbf16> to vector<8x512xbf16>
    %8 = arith.extf %7 : vector<8x512xbf16> to vector<8x512xf32>
    %9 = arith.truncf %3 : vector<8x128xf32> to vector<8x128xbf16>
    %c0_7 = arith.constant 0 : index
    %c0_8 = arith.constant 0 : index
    %10 = vector.load %arg2[%c0_7, %c0_8] : memref<128x512xbf16, #tpu.memory_space<vmem>>, vector<128x512xbf16>
    %cst = arith.constant dense<0.000000e+00> : vector<8x512xf32>
    %11 = tpu.matmul %9, %10, %cst {dimension_numbers = #tpu.dot_dimension_numbers<[1], [0], [0], [1], [0, 0, 1, 1], [], []>} : vector<8x128xbf16>, vector<128x512xbf16>, vector<8x512xf32> -> vector<8x512xf32>
    %12 = arith.addf %8, %11 : vector<8x512xf32>
    %13 = vector.extract_strided_slice %12 {offsets = [0, 0], sizes = [8, 128], strides = [1, 1]} : vector<8x512xf32> to vector<8x128xf32>
    %14 = arith.negf %13 : vector<8x128xf32>
    %15 = math.exp %14 : vector<8x128xf32>
    %cst_9 = arith.constant 1.000000e+00 : f32
    %16 = vector.broadcast %cst_9 : f32 to vector<8x128xf32>
    %17 = arith.addf %16, %15 : vector<8x128xf32>
    %18 = arith.divf %16, %17 : vector<8x128xf32>
    %19 = vector.extract_strided_slice %12 {offsets = [0, 128], sizes = [8, 128], strides = [1, 1]} : vector<8x512xf32> to vector<8x128xf32>
    %20 = arith.negf %19 : vector<8x128xf32>
    %21 = math.exp %20 : vector<8x128xf32>
    %cst_10 = arith.constant 1.000000e+00 : f32
    %22 = vector.broadcast %cst_10 : f32 to vector<8x128xf32>
    %23 = arith.addf %22, %21 : vector<8x128xf32>
    %24 = arith.divf %22, %23 : vector<8x128xf32>
    %25 = vector.extract_strided_slice %12 {offsets = [0, 256], sizes = [8, 128], strides = [1, 1]} : vector<8x512xf32> to vector<8x128xf32>
    %26 = math.tanh %25 : vector<8x128xf32>
    %27 = vector.extract_strided_slice %12 {offsets = [0, 384], sizes = [8, 128], strides = [1, 1]} : vector<8x512xf32> to vector<8x128xf32>
    %28 = arith.negf %27 : vector<8x128xf32>
    %29 = math.exp %28 : vector<8x128xf32>
    %cst_11 = arith.constant 1.000000e+00 : f32
    %30 = vector.broadcast %cst_11 : f32 to vector<8x128xf32>
    %31 = arith.addf %30, %29 : vector<8x128xf32>
    %32 = arith.divf %30, %31 : vector<8x128xf32>
    %33 = arith.mulf %24, %4 : vector<8x128xf32>
    %34 = arith.mulf %18, %26 : vector<8x128xf32>
    %35 = arith.addf %33, %34 : vector<8x128xf32>
    %36 = math.tanh %35 : vector<8x128xf32>
    %37 = arith.mulf %32, %36 : vector<8x128xf32>
    %c1_i32 = arith.constant 1 : i32
    %38 = arith.index_cast %c1_i32 : i32 to index
    %c0_12 = arith.constant 0 : index
    %c0_13 = arith.constant 0 : index
    %39 = vector.load %arg1[%38, %c0_12, %c0_13] : memref<8x8x512xbf16, #tpu.memory_space<vmem>>, vector<1x8x512xbf16>
    %40 = vector.shape_cast %39 : vector<1x8x512xbf16> to vector<8x512xbf16>
    %41 = arith.extf %40 : vector<8x512xbf16> to vector<8x512xf32>
    %42 = arith.truncf %37 : vector<8x128xf32> to vector<8x128xbf16>
    %c0_14 = arith.constant 0 : index
    %c0_15 = arith.constant 0 : index
    %43 = vector.load %arg2[%c0_14, %c0_15] : memref<128x512xbf16, #tpu.memory_space<vmem>>, vector<128x512xbf16>
    %cst_16 = arith.constant dense<0.000000e+00> : vector<8x512xf32>
    %44 = tpu.matmul %42, %43, %cst_16 {dimension_numbers = #tpu.dot_dimension_numbers<[1], [0], [0], [1], [0, 0, 1, 1], [], []>} : vector<8x128xbf16>, vector<128x512xbf16>, vector<8x512xf32> -> vector<8x512xf32>
    %45 = arith.addf %41, %44 : vector<8x512xf32>
    %46 = vector.extract_strided_slice %45 {offsets = [0, 0], sizes = [8, 128], strides = [1, 1]} : vector<8x512xf32> to vector<8x128xf32>
    %47 = arith.negf %46 : vector<8x128xf32>
    %48 = math.exp %47 : vector<8x128xf32>
    %cst_17 = arith.constant 1.000000e+00 : f32
    %49 = vector.broadcast %cst_17 : f32 to vector<8x128xf32>
    %50 = arith.addf %49, %48 : vector<8x128xf32>
    %51 = arith.divf %49, %50 : vector<8x128xf32>
    %52 = vector.extract_strided_slice %45 {offsets = [0, 128], sizes = [8, 128], strides = [1, 1]} : vector<8x512xf32> to vector<8x128xf32>
    %53 = arith.negf %52 : vector<8x128xf32>
    %54 = math.exp %53 : vector<8x128xf32>
    %cst_18 = arith.constant 1.000000e+00 : f32
    %55 = vector.broadcast %cst_18 : f32 to vector<8x128xf32>
    %56 = arith.addf %55, %54 : vector<8x128xf32>
    %57 = arith.divf %55, %56 : vector<8x128xf32>
    %58 = vector.extract_strided_slice %45 {offsets = [0, 256], sizes = [8, 128], strides = [1, 1]} : vector<8x512xf32> to vector<8x128xf32>
    %59 = math.tanh %58 : vector<8x128xf32>
    %60 = vector.extract_strided_slice %45 {offsets = [0, 384], sizes = [8, 128], strides = [1, 1]} : vector<8x512xf32> to vector<8x128xf32>
    %61 = arith.negf %60 : vector<8x128xf32>
    %62 = math.exp %61 : vector<8x128xf32>
    %cst_19 = arith.constant 1.000000e+00 : f32
    %63 = vector.broadcast %cst_19 : f32 to vector<8x128xf32>
    %64 = arith.addf %63, %62 : vector<8x128xf32>
    %65 = arith.divf %63, %64 : vector<8x128xf32>
    %66 = arith.mulf %57, %35 : vector<8x128xf32>
    %67 = arith.mulf %51, %59 : vector<8x128xf32>
    %68 = arith.addf %66, %67 : vector<8x128xf32>
    %69 = math.tanh %68 : vector<8x128xf32>
    %70 = arith.mulf %65, %69 : vector<8x128xf32>
    %c2_i32 = arith.constant 2 : i32
    %71 = arith.index_cast %c2_i32 : i32 to index
    %c0_20 = arith.constant 0 : index
    %c0_21 = arith.constant 0 : index
    %72 = vector.load %arg1[%71, %c0_20, %c0_21] : memref<8x8x512xbf16, #tpu.memory_space<vmem>>, vector<1x8x512xbf16>
    %73 = vector.shape_cast %72 : vector<1x8x512xbf16> to vector<8x512xbf16>
    %74 = arith.extf %73 : vector<8x512xbf16> to vector<8x512xf32>
    %75 = arith.truncf %70 : vector<8x128xf32> to vector<8x128xbf16>
    %c0_22 = arith.constant 0 : index
    %c0_23 = arith.constant 0 : index
    %76 = vector.load %arg2[%c0_22, %c0_23] : memref<128x512xbf16, #tpu.memory_space<vmem>>, vector<128x512xbf16>
    %cst_24 = arith.constant dense<0.000000e+00> : vector<8x512xf32>
    %77 = tpu.matmul %75, %76, %cst_24 {dimension_numbers = #tpu.dot_dimension_numbers<[1], [0], [0], [1], [0, 0, 1, 1], [], []>} : vector<8x128xbf16>, vector<128x512xbf16>, vector<8x512xf32> -> vector<8x512xf32>
    %78 = arith.addf %74, %77 : vector<8x512xf32>
    %79 = vector.extract_strided_slice %78 {offsets = [0, 0], sizes = [8, 128], strides = [1, 1]} : vector<8x512xf32> to vector<8x128xf32>
    %80 = arith.negf %79 : vector<8x128xf32>
    %81 = math.exp %80 : vector<8x128xf32>
    %cst_25 = arith.constant 1.000000e+00 : f32
    %82 = vector.broadcast %cst_25 : f32 to vector<8x128xf32>
    %83 = arith.addf %82, %81 : vector<8x128xf32>
    %84 = arith.divf %82, %83 : vector<8x128xf32>
    %85 = vector.extract_strided_slice %78 {offsets = [0, 128], sizes = [8, 128], strides = [1, 1]} : vector<8x512xf32> to vector<8x128xf32>
    %86 = arith.negf %85 : vector<8x128xf32>
    %87 = math.exp %86 : vector<8x128xf32>
    %cst_26 = arith.constant 1.000000e+00 : f32
    %88 = vector.broadcast %cst_26 : f32 to vector<8x128xf32>
    %89 = arith.addf %88, %87 : vector<8x128xf32>
    %90 = arith.divf %88, %89 : vector<8x128xf32>
    %91 = vector.extract_strided_slice %78 {offsets = [0, 256], sizes = [8, 128], strides = [1, 1]} : vector<8x512xf32> to vector<8x128xf32>
    %92 = math.tanh %91 : vector<8x128xf32>
    %93 = vector.extract_strided_slice %78 {offsets = [0, 384], sizes = [8, 128], strides = [1, 1]} : vector<8x512xf32> to vector<8x128xf32>
    %94 = arith.negf %93 : vector<8x128xf32>
    %95 = math.exp %94 : vector<8x128xf32>
    %cst_27 = arith.constant 1.000000e+00 : f32
    %96 = vector.broadcast %cst_27 : f32 to vector<8x128xf32>
    %97 = arith.addf %96, %95 : vector<8x128xf32>
    %98 = arith.divf %96, %97 : vector<8x128xf32>
    %99 = arith.mulf %90, %68 : vector<8x128xf32>
    %100 = arith.mulf %84, %92 : vector<8x128xf32>
    %101 = arith.addf %99, %100 : vector<8x128xf32>
    %102 = math.tanh %101 : vector<8x128xf32>
    %103 = arith.mulf %98, %102 : vector<8x128xf32>
    %c3_i32 = arith.constant 3 : i32
    %104 = arith.index_cast %c3_i32 : i32 to index
    %c0_28 = arith.constant 0 : index
    %c0_29 = arith.constant 0 : index
    %105 = vector.load %arg1[%104, %c0_28, %c0_29] : memref<8x8x512xbf16, #tpu.memory_space<vmem>>, vector<1x8x512xbf16>
    %106 = vector.shape_cast %105 : vector<1x8x512xbf16> to vector<8x512xbf16>
    %107 = arith.extf %106 : vector<8x512xbf16> to vector<8x512xf32>
    %108 = arith.truncf %103 : vector<8x128xf32> to vector<8x128xbf16>
    %c0_30 = arith.constant 0 : index
    %c0_31 = arith.constant 0 : index
    %109 = vector.load %arg2[%c0_30, %c0_31] : memref<128x512xbf16, #tpu.memory_space<vmem>>, vector<128x512xbf16>
    %cst_32 = arith.constant dense<0.000000e+00> : vector<8x512xf32>
    %110 = tpu.matmul %108, %109, %cst_32 {dimension_numbers = #tpu.dot_dimension_numbers<[1], [0], [0], [1], [0, 0, 1, 1], [], []>} : vector<8x128xbf16>, vector<128x512xbf16>, vector<8x512xf32> -> vector<8x512xf32>
    %111 = arith.addf %107, %110 : vector<8x512xf32>
    %112 = vector.extract_strided_slice %111 {offsets = [0, 0], sizes = [8, 128], strides = [1, 1]} : vector<8x512xf32> to vector<8x128xf32>
    %113 = arith.negf %112 : vector<8x128xf32>
    %114 = math.exp %113 : vector<8x128xf32>
    %cst_33 = arith.constant 1.000000e+00 : f32
    %115 = vector.broadcast %cst_33 : f32 to vector<8x128xf32>
    %116 = arith.addf %115, %114 : vector<8x128xf32>
    %117 = arith.divf %115, %116 : vector<8x128xf32>
    %118 = vector.extract_strided_slice %111 {offsets = [0, 128], sizes = [8, 128], strides = [1, 1]} : vector<8x512xf32> to vector<8x128xf32>
    %119 = arith.negf %118 : vector<8x128xf32>
    %120 = math.exp %119 : vector<8x128xf32>
    %cst_34 = arith.constant 1.000000e+00 : f32
    %121 = vector.broadcast %cst_34 : f32 to vector<8x128xf32>
    %122 = arith.addf %121, %120 : vector<8x128xf32>
    %123 = arith.divf %121, %122 : vector<8x128xf32>
    %124 = vector.extract_strided_slice %111 {offsets = [0, 256], sizes = [8, 128], strides = [1, 1]} : vector<8x512xf32> to vector<8x128xf32>
    %125 = math.tanh %124 : vector<8x128xf32>
    %126 = vector.extract_strided_slice %111 {offsets = [0, 384], sizes = [8, 128], strides = [1, 1]} : vector<8x512xf32> to vector<8x128xf32>
    %127 = arith.negf %126 : vector<8x128xf32>
    %128 = math.exp %127 : vector<8x128xf32>
    %cst_35 = arith.constant 1.000000e+00 : f32
    %129 = vector.broadcast %cst_35 : f32 to vector<8x128xf32>
    %130 = arith.addf %129, %128 : vector<8x128xf32>
    %131 = arith.divf %129, %130 : vector<8x128xf32>
    %132 = arith.mulf %123, %101 : vector<8x128xf32>
    %133 = arith.mulf %117, %125 : vector<8x128xf32>
    %134 = arith.addf %132, %133 : vector<8x128xf32>
    %135 = math.tanh %134 : vector<8x128xf32>
    %136 = arith.mulf %131, %135 : vector<8x128xf32>
    %c4_i32 = arith.constant 4 : i32
    %137 = arith.index_cast %c4_i32 : i32 to index
    %c0_36 = arith.constant 0 : index
    %c0_37 = arith.constant 0 : index
    %138 = vector.load %arg1[%137, %c0_36, %c0_37] : memref<8x8x512xbf16, #tpu.memory_space<vmem>>, vector<1x8x512xbf16>
    %139 = vector.shape_cast %138 : vector<1x8x512xbf16> to vector<8x512xbf16>
    %140 = arith.extf %139 : vector<8x512xbf16> to vector<8x512xf32>
    %141 = arith.truncf %136 : vector<8x128xf32> to vector<8x128xbf16>
    %c0_38 = arith.constant 0 : index
    %c0_39 = arith.constant 0 : index
    %142 = vector.load %arg2[%c0_38, %c0_39] : memref<128x512xbf16, #tpu.memory_space<vmem>>, vector<128x512xbf16>
    %cst_40 = arith.constant dense<0.000000e+00> : vector<8x512xf32>
    %143 = tpu.matmul %141, %142, %cst_40 {dimension_numbers = #tpu.dot_dimension_numbers<[1], [0], [0], [1], [0, 0, 1, 1], [], []>} : vector<8x128xbf16>, vector<128x512xbf16>, vector<8x512xf32> -> vector<8x512xf32>
    %144 = arith.addf %140, %143 : vector<8x512xf32>
    %145 = vector.extract_strided_slice %144 {offsets = [0, 0], sizes = [8, 128], strides = [1, 1]} : vector<8x512xf32> to vector<8x128xf32>
    %146 = arith.negf %145 : vector<8x128xf32>
    %147 = math.exp %146 : vector<8x128xf32>
    %cst_41 = arith.constant 1.000000e+00 : f32
    %148 = vector.broadcast %cst_41 : f32 to vector<8x128xf32>
    %149 = arith.addf %148, %147 : vector<8x128xf32>
    %150 = arith.divf %148, %149 : vector<8x128xf32>
    %151 = vector.extract_strided_slice %144 {offsets = [0, 128], sizes = [8, 128], strides = [1, 1]} : vector<8x512xf32> to vector<8x128xf32>
    %152 = arith.negf %151 : vector<8x128xf32>
    %153 = math.exp %152 : vector<8x128xf32>
    %cst_42 = arith.constant 1.000000e+00 : f32
    %154 = vector.broadcast %cst_42 : f32 to vector<8x128xf32>
    %155 = arith.addf %154, %153 : vector<8x128xf32>
    %156 = arith.divf %154, %155 : vector<8x128xf32>
    %157 = vector.extract_strided_slice %144 {offsets = [0, 256], sizes = [8, 128], strides = [1, 1]} : vector<8x512xf32> to vector<8x128xf32>
    %158 = math.tanh %157 : vector<8x128xf32>
    %159 = vector.extract_strided_slice %144 {offsets = [0, 384], sizes = [8, 128], strides = [1, 1]} : vector<8x512xf32> to vector<8x128xf32>
    %160 = arith.negf %159 : vector<8x128xf32>
    %161 = math.exp %160 : vector<8x128xf32>
    %cst_43 = arith.constant 1.000000e+00 : f32
    %162 = vector.broadcast %cst_43 : f32 to vector<8x128xf32>
    %163 = arith.addf %162, %161 : vector<8x128xf32>
    %164 = arith.divf %162, %163 : vector<8x128xf32>
    %165 = arith.mulf %156, %134 : vector<8x128xf32>
    %166 = arith.mulf %150, %158 : vector<8x128xf32>
    %167 = arith.addf %165, %166 : vector<8x128xf32>
    %168 = math.tanh %167 : vector<8x128xf32>
    %169 = arith.mulf %164, %168 : vector<8x128xf32>
    %c5_i32 = arith.constant 5 : i32
    %170 = arith.index_cast %c5_i32 : i32 to index
    %c0_44 = arith.constant 0 : index
    %c0_45 = arith.constant 0 : index
    %171 = vector.load %arg1[%170, %c0_44, %c0_45] : memref<8x8x512xbf16, #tpu.memory_space<vmem>>, vector<1x8x512xbf16>
    %172 = vector.shape_cast %171 : vector<1x8x512xbf16> to vector<8x512xbf16>
    %173 = arith.extf %172 : vector<8x512xbf16> to vector<8x512xf32>
    %174 = arith.truncf %169 : vector<8x128xf32> to vector<8x128xbf16>
    %c0_46 = arith.constant 0 : index
    %c0_47 = arith.constant 0 : index
    %175 = vector.load %arg2[%c0_46, %c0_47] : memref<128x512xbf16, #tpu.memory_space<vmem>>, vector<128x512xbf16>
    %cst_48 = arith.constant dense<0.000000e+00> : vector<8x512xf32>
    %176 = tpu.matmul %174, %175, %cst_48 {dimension_numbers = #tpu.dot_dimension_numbers<[1], [0], [0], [1], [0, 0, 1, 1], [], []>} : vector<8x128xbf16>, vector<128x512xbf16>, vector<8x512xf32> -> vector<8x512xf32>
    %177 = arith.addf %173, %176 : vector<8x512xf32>
    %178 = vector.extract_strided_slice %177 {offsets = [0, 0], sizes = [8, 128], strides = [1, 1]} : vector<8x512xf32> to vector<8x128xf32>
    %179 = arith.negf %178 : vector<8x128xf32>
    %180 = math.exp %179 : vector<8x128xf32>
    %cst_49 = arith.constant 1.000000e+00 : f32
    %181 = vector.broadcast %cst_49 : f32 to vector<8x128xf32>
    %182 = arith.addf %181, %180 : vector<8x128xf32>
    %183 = arith.divf %181, %182 : vector<8x128xf32>
    %184 = vector.extract_strided_slice %177 {offsets = [0, 128], sizes = [8, 128], strides = [1, 1]} : vector<8x512xf32> to vector<8x128xf32>
    %185 = arith.negf %184 : vector<8x128xf32>
    %186 = math.exp %185 : vector<8x128xf32>
    %cst_50 = arith.constant 1.000000e+00 : f32
    %187 = vector.broadcast %cst_50 : f32 to vector<8x128xf32>
    %188 = arith.addf %187, %186 : vector<8x128xf32>
    %189 = arith.divf %187, %188 : vector<8x128xf32>
    %190 = vector.extract_strided_slice %177 {offsets = [0, 256], sizes = [8, 128], strides = [1, 1]} : vector<8x512xf32> to vector<8x128xf32>
    %191 = math.tanh %190 : vector<8x128xf32>
    %192 = vector.extract_strided_slice %177 {offsets = [0, 384], sizes = [8, 128], strides = [1, 1]} : vector<8x512xf32> to vector<8x128xf32>
    %193 = arith.negf %192 : vector<8x128xf32>
    %194 = math.exp %193 : vector<8x128xf32>
    %cst_51 = arith.constant 1.000000e+00 : f32
    %195 = vector.broadcast %cst_51 : f32 to vector<8x128xf32>
    %196 = arith.addf %195, %194 : vector<8x128xf32>
    %197 = arith.divf %195, %196 : vector<8x128xf32>
    %198 = arith.mulf %189, %167 : vector<8x128xf32>
    %199 = arith.mulf %183, %191 : vector<8x128xf32>
    %200 = arith.addf %198, %199 : vector<8x128xf32>
    %201 = math.tanh %200 : vector<8x128xf32>
    %202 = arith.mulf %197, %201 : vector<8x128xf32>
    %c6_i32 = arith.constant 6 : i32
    %203 = arith.index_cast %c6_i32 : i32 to index
    %c0_52 = arith.constant 0 : index
    %c0_53 = arith.constant 0 : index
    %204 = vector.load %arg1[%203, %c0_52, %c0_53] : memref<8x8x512xbf16, #tpu.memory_space<vmem>>, vector<1x8x512xbf16>
    %205 = vector.shape_cast %204 : vector<1x8x512xbf16> to vector<8x512xbf16>
    %206 = arith.extf %205 : vector<8x512xbf16> to vector<8x512xf32>
    %207 = arith.truncf %202 : vector<8x128xf32> to vector<8x128xbf16>
    %c0_54 = arith.constant 0 : index
    %c0_55 = arith.constant 0 : index
    %208 = vector.load %arg2[%c0_54, %c0_55] : memref<128x512xbf16, #tpu.memory_space<vmem>>, vector<128x512xbf16>
    %cst_56 = arith.constant dense<0.000000e+00> : vector<8x512xf32>
    %209 = tpu.matmul %207, %208, %cst_56 {dimension_numbers = #tpu.dot_dimension_numbers<[1], [0], [0], [1], [0, 0, 1, 1], [], []>} : vector<8x128xbf16>, vector<128x512xbf16>, vector<8x512xf32> -> vector<8x512xf32>
    %210 = arith.addf %206, %209 : vector<8x512xf32>
    %211 = vector.extract_strided_slice %210 {offsets = [0, 0], sizes = [8, 128], strides = [1, 1]} : vector<8x512xf32> to vector<8x128xf32>
    %212 = arith.negf %211 : vector<8x128xf32>
    %213 = math.exp %212 : vector<8x128xf32>
    %cst_57 = arith.constant 1.000000e+00 : f32
    %214 = vector.broadcast %cst_57 : f32 to vector<8x128xf32>
    %215 = arith.addf %214, %213 : vector<8x128xf32>
    %216 = arith.divf %214, %215 : vector<8x128xf32>
    %217 = vector.extract_strided_slice %210 {offsets = [0, 128], sizes = [8, 128], strides = [1, 1]} : vector<8x512xf32> to vector<8x128xf32>
    %218 = arith.negf %217 : vector<8x128xf32>
    %219 = math.exp %218 : vector<8x128xf32>
    %cst_58 = arith.constant 1.000000e+00 : f32
    %220 = vector.broadcast %cst_58 : f32 to vector<8x128xf32>
    %221 = arith.addf %220, %219 : vector<8x128xf32>
    %222 = arith.divf %220, %221 : vector<8x128xf32>
    %223 = vector.extract_strided_slice %210 {offsets = [0, 256], sizes = [8, 128], strides = [1, 1]} : vector<8x512xf32> to vector<8x128xf32>
    %224 = math.tanh %223 : vector<8x128xf32>
    %225 = vector.extract_strided_slice %210 {offsets = [0, 384], sizes = [8, 128], strides = [1, 1]} : vector<8x512xf32> to vector<8x128xf32>
    %226 = arith.negf %225 : vector<8x128xf32>
    %227 = math.exp %226 : vector<8x128xf32>
    %cst_59 = arith.constant 1.000000e+00 : f32
    %228 = vector.broadcast %cst_59 : f32 to vector<8x128xf32>
    %229 = arith.addf %228, %227 : vector<8x128xf32>
    %230 = arith.divf %228, %229 : vector<8x128xf32>
    %231 = arith.mulf %222, %200 : vector<8x128xf32>
    %232 = arith.mulf %216, %224 : vector<8x128xf32>
    %233 = arith.addf %231, %232 : vector<8x128xf32>
    %234 = math.tanh %233 : vector<8x128xf32>
    %235 = arith.mulf %230, %234 : vector<8x128xf32>
    %c7_i32 = arith.constant 7 : i32
    %236 = arith.index_cast %c7_i32 : i32 to index
    %c0_60 = arith.constant 0 : index
    %c0_61 = arith.constant 0 : index
    %237 = vector.load %arg1[%236, %c0_60, %c0_61] : memref<8x8x512xbf16, #tpu.memory_space<vmem>>, vector<1x8x512xbf16>
    %238 = vector.shape_cast %237 : vector<1x8x512xbf16> to vector<8x512xbf16>
    %239 = arith.extf %238 : vector<8x512xbf16> to vector<8x512xf32>
    %240 = arith.truncf %235 : vector<8x128xf32> to vector<8x128xbf16>
    %c0_62 = arith.constant 0 : index
    %c0_63 = arith.constant 0 : index
    %241 = vector.load %arg2[%c0_62, %c0_63] : memref<128x512xbf16, #tpu.memory_space<vmem>>, vector<128x512xbf16>
    %cst_64 = arith.constant dense<0.000000e+00> : vector<8x512xf32>
    %242 = tpu.matmul %240, %241, %cst_64 {dimension_numbers = #tpu.dot_dimension_numbers<[1], [0], [0], [1], [0, 0, 1, 1], [], []>} : vector<8x128xbf16>, vector<128x512xbf16>, vector<8x512xf32> -> vector<8x512xf32>
    %243 = arith.addf %239, %242 : vector<8x512xf32>
    %244 = vector.extract_strided_slice %243 {offsets = [0, 0], sizes = [8, 128], strides = [1, 1]} : vector<8x512xf32> to vector<8x128xf32>
    %245 = arith.negf %244 : vector<8x128xf32>
    %246 = math.exp %245 : vector<8x128xf32>
    %cst_65 = arith.constant 1.000000e+00 : f32
    %247 = vector.broadcast %cst_65 : f32 to vector<8x128xf32>
    %248 = arith.addf %247, %246 : vector<8x128xf32>
    %249 = arith.divf %247, %248 : vector<8x128xf32>
    %250 = vector.extract_strided_slice %243 {offsets = [0, 128], sizes = [8, 128], strides = [1, 1]} : vector<8x512xf32> to vector<8x128xf32>
    %251 = arith.negf %250 : vector<8x128xf32>
    %252 = math.exp %251 : vector<8x128xf32>
    %cst_66 = arith.constant 1.000000e+00 : f32
    %253 = vector.broadcast %cst_66 : f32 to vector<8x128xf32>
    %254 = arith.addf %253, %252 : vector<8x128xf32>
    %255 = arith.divf %253, %254 : vector<8x128xf32>
    %256 = vector.extract_strided_slice %243 {offsets = [0, 256], sizes = [8, 128], strides = [1, 1]} : vector<8x512xf32> to vector<8x128xf32>
    %257 = math.tanh %256 : vector<8x128xf32>
    %258 = vector.extract_strided_slice %243 {offsets = [0, 384], sizes = [8, 128], strides = [1, 1]} : vector<8x512xf32> to vector<8x128xf32>
    %259 = arith.negf %258 : vector<8x128xf32>
    %260 = math.exp %259 : vector<8x128xf32>
    %cst_67 = arith.constant 1.000000e+00 : f32
    %261 = vector.broadcast %cst_67 : f32 to vector<8x128xf32>
    %262 = arith.addf %261, %260 : vector<8x128xf32>
    %263 = arith.divf %261, %262 : vector<8x128xf32>
    %264 = arith.mulf %255, %233 : vector<8x128xf32>
    %265 = arith.mulf %249, %257 : vector<8x128xf32>
    %266 = arith.addf %264, %265 : vector<8x128xf32>
    %267 = math.tanh %266 : vector<8x128xf32>
    %268 = arith.mulf %263, %267 : vector<8x128xf32>
    %c8_i32 = arith.constant 8 : i32
    %c0_68 = arith.constant 0 : index
    %c0_69 = arith.constant 0 : index
    %269 = vector.load %arg3[%c0_68, %c0_69] : memref<8x128xf32, #tpu.memory_space<vmem>>, vector<8x128xf32>
    tpu.vector_store %arg3[%c0_68, %c0_69], %268 {strides = array<i32>} : memref<8x128xf32, #tpu.memory_space<vmem>>, vector<8x128xf32>,
    %c0_70 = arith.constant 0 : index
    %c0_71 = arith.constant 0 : index
    %270 = vector.load %arg4[%c0_70, %c0_71] : memref<8x128xf32, #tpu.memory_space<vmem>>, vector<8x128xf32>
    tpu.vector_store %arg4[%c0_70, %c0_71], %266 {strides = array<i32>} : memref<8x128xf32, #tpu.memory_space<vmem>>, vector<8x128xf32>,
    return
  }
  func.func @transform_0(%arg0: i32) -> (i32, i32, i32) {
    %c0_i32 = arith.constant 0 : i32
    %c0_i32_0 = arith.constant 0 : i32
    %c0_i32_1 = arith.constant 0 : i32
    return %arg0, %c0_i32, %c0_i32_0 : i32, i32, i32
  }
  func.func @transform_1(%arg0: i32) -> (i32, i32) {
    %c0_i32 = arith.constant 0 : i32
    %c0_i32_0 = arith.constant 0 : i32
    %c0_i32_1 = arith.constant 0 : i32
    return %c0_i32, %c0_i32_0 : i32, i32
  }
  func.func @transform_2(%arg0: i32) -> (i32, i32) {
    %c0_i32 = arith.constant 0 : i32
    %c0_i32_0 = arith.constant 0 : i32
    %c0_i32_1 = arith.constant 0 : i32
    return %c0_i32, %c0_i32_0 : i32, i32
  }
}

</mosaic_0001>

<llo_original>
// kernel: simple_lstm_baseline.1
$region0: #{simple_lstm_baseline.1}
  #allocation0 [shape = 'u32[]', space=smem, size = 0x4, offset = 0x4, fixed_abs, tag = 'smem constant byte address 0x4 - core index']
  #allocation1 [shape = 'u32[144,128]{1,0:T(1,128)}', space=vmem, size = 0x12000, scoped, tag = 'internal scratch']
  #allocation2 [shape = 'f32[8,128]{1,0:T(8,128)}', space=vmem, size = 0x1000, scoped, tag = 'scratch operand']
  %s0 = inlined_call_operand.vmem [shape: bf16[16,8,512], index: 0, kind: input, shape index: {}]
  %s1 = inlined_call_operand.vmem [shape: bf16[128,512], index: 1, kind: input, shape index: {}]
  %s2 = inlined_call_operand.vmem [shape: f32[8,128], index: 2, kind: output, shape index: {}]
  %s3 = sld [smem:[#allocation0]]
  $region45: #{simple_lstm_baseline.1} parent=0
    _
  %s5 = ssub.s32 1, %s3
  %s6 = scalar_select 0, %s5, %s3
  loop: start=0, step=1, limit=4
  $region2: #{simple_lstm_baseline.1} parent=0 // loop_pre_header
    _
  $region3: #{simple_lstm_baseline.1} parent=0 // loop_header
    %s8 = sphi 0, %s12
    %p9 = scmp.ge.s32.totalorder %s8, 4
    %s18 = sphi 0, %s20
    %s21 = sphi 0, %s18
    %s22 = sphi 0, %s21
    %s38 = sphi 0, %s22
    %s42 = sphi 0, %s42
    %s44 = sphi 0, %s42
    %s45 = sphi 0, %s44
    %s59 = sphi 0, %s45
    %s63 = sphi 0, %s63
    %s65 = sphi 0, %s63
    %s66 = sphi 0, %s65
    %s80 = sphi 0, %s66
  $region4: #{simple_lstm_baseline.1} parent=0 // loop_header_branch
    %11 = sbr.rel (%p9) target = $region8
  $region5: #{simple_lstm_baseline.1} parent=0 // loop_body
    %s13 = ssub.s32 %s8, 1
    %s14 = ssub.s32 %s8, 2
    %s15 = sadd.s32 %s8, 1
    %s16 = ssub.s32 %s8, %s15
    %p17 = scmp.eq.s32.totalorder %s16, 0
    %s19 = sadd.s32 %s18, 1
    %s20 = scalar_select %p17, %s18, %s19
    %p23 = pneg %p17
    %p24 = scmp.eq.s32.totalorder %s8, 1
    %p25 = por %p23, %p24
    %p26 = scmp.ne.s32.totalorder %s18, %s21
    %p27 = scmp.eq.s32.totalorder %s8, 0
    %p28 = por %p26, %p27
    %p29 = scmp.ne.s32.totalorder %s18, %s21
    %p30 = scmp.eq.s32.totalorder %s13, 1
    %p31 = por %p29, %p30
    %p32 = scmp.ne.s32.totalorder %s21, %s22
    %p33 = scmp.eq.s32.totalorder %s13, 0
    %p34 = por %p32, %p33
    %p35 = scmp.ne.s32.totalorder %s21, %s22
    %p36 = scmp.eq.s32.totalorder %s14, 1
    %p37 = por %p35, %p36
    %p39 = scmp.ne.s32.totalorder %s22, %s38
    %p40 = scmp.eq.s32.totalorder %s14, 0
    %p41 = por %p39, %p40
    %s43 = sadd.s32 %s42, 1
    %p46 = scmp.eq.s32.totalorder %s8, 1
    %p47 = scmp.ne.s32.totalorder %s42, %s44
    %p48 = scmp.eq.s32.totalorder %s8, 0
    %p49 = por %p47, %p48
    %p50 = scmp.ne.s32.totalorder %s42, %s44
    %p51 = scmp.eq.s32.totalorder %s13, 1
    %p52 = por %p50, %p51
    %p53 = scmp.ne.s32.totalorder %s44, %s45
    %p54 = scmp.eq.s32.totalorder %s13, 0
    %p55 = por %p53, %p54
    %p56 = scmp.ne.s32.totalorder %s44, %s45
    %p57 = scmp.eq.s32.totalorder %s14, 1
    %p58 = por %p56, %p57
    %p60 = scmp.ne.s32.totalorder %s45, %s59
    %p61 = scmp.eq.s32.totalorder %s14, 0
    %p62 = por %p60, %p61
    %s64 = sadd.s32 %s63, 1
    %p67 = scmp.eq.s32.totalorder %s8, 1
    %p68 = scmp.ne.s32.totalorder %s63, %s65
    %p69 = scmp.eq.s32.totalorder %s8, 0
    %p70 = por %p68, %p69
    %p71 = scmp.ne.s32.totalorder %s63, %s65
    %p72 = scmp.eq.s32.totalorder %s13, 1
    %p73 = por %p71, %p72
    %p74 = scmp.ne.s32.totalorder %s65, %s66
    %p75 = scmp.eq.s32.totalorder %s13, 0
    %p76 = por %p74, %p75
    %p77 = scmp.ne.s32.totalorder %s65, %s66
    %p78 = scmp.eq.s32.totalorder %s14, 1
    %p79 = por %p77, %p78
    %p81 = scmp.ne.s32.totalorder %s66, %s80
    %p82 = scmp.eq.s32.totalorder %s14, 0
    %p83 = por %p81, %p82
    %p84 = scmp.le.s32.totalorder 1, %s8
    %p85 = scmp.lt.s32.totalorder %s8, 3
    %p86 = pnand %p84, %p85
    %p87 = pneg %p86
    // Predicated region
    $region9: #{simple_lstm_baseline.1} parent=5 // pred_check
      _
    $region10: #{simple_lstm_baseline.1} parent=5 // pred_check_branch
      %89 = sbr.rel (%p86) target = $region12
    $region11: #{simple_lstm_baseline.1} parent=5 // pred_region
      %s90 = ssub.s32 %s8, 1
      // Predicated region
      $region13: #{simple_lstm_baseline.1} parent=11 // pred_check
        %p91 = pneg %p55
      $region14: #{simple_lstm_baseline.1} parent=11 // pred_check_branch
        %93 = sbr.rel (%p91) target = $region16
      $region15: #{simple_lstm_baseline.1} parent=11 // pred_region
        _
      $region16: #{simple_lstm_baseline.1} parent=11 // pred_fallthru
        _
    $region12: #{simple_lstm_baseline.1} parent=5 // pred_fallthru
      _
    %p94 = scmp.lt.s32.totalorder %s8, 2
    // Predicated region
    $region17: #{simple_lstm_baseline.1} parent=5 // pred_check
      %p95 = pneg %p94
    $region18: #{simple_lstm_baseline.1} parent=5 // pred_check_branch
      %97 = sbr.rel (%p95) target = $region20
    $region19: #{simple_lstm_baseline.1} parent=5 // pred_region
      // Predicated region
      $region21: #{simple_lstm_baseline.1} parent=19 // pred_check
        %p98 = pneg %p28
      $region22: #{simple_lstm_baseline.1} parent=19 // pred_check_branch
        %100 = sbr.rel (%p98) target = $region24
      $region23: #{simple_lstm_baseline.1} parent=19 // pred_region
        %s101 = smul.u32 8, %s8
        %p102 = scmp.lt.s32.totalorder %s101, 15
        %s103 = scalar_select %p102, %s101, 15
        %s104 = smul.addr %s103, 4
        %s105 = smul.addr %s104, 4
        %s106 = scalar_lea.vmem %s0, %s105
        %s107 = smul.u32 8, %s8
      $region24: #{simple_lstm_baseline.1} parent=19 // pred_fallthru
        _
    $region20: #{simple_lstm_baseline.1} parent=5 // pred_fallthru
      _
    %p108 = scmp.le.s32.totalorder 1, %s8
    %p109 = scmp.lt.s32.totalorder %s8, 3
    %p110 = pnand %p108, %p109
    %p111 = pneg %p110
    // Predicated region
    $region25: #{simple_lstm_baseline.1} parent=5 // pred_check
      _
    $region26: #{simple_lstm_baseline.1} parent=5 // pred_check_branch
      %113 = sbr.rel (%p110) target = $region28
    $region27: #{simple_lstm_baseline.1} parent=5 // pred_region
      %s114 = ssub.s32 %s8, 1
      %s115 = smul.u32 8, %s13
      %p116 = scmp.lt.s32.totalorder %s115, 15
      %s117 = scalar_select %p116, %s115, 15
      %s118 = smul.addr %s117, 4
      %s119 = smul.addr %s118, 4
      %s120 = scalar_lea.vmem %s0, %s119
      %p121 = pneg %p34
      %p122 = pneg %p31
      %p123 = pneg %p55
      %p124 = pneg %p52
      %p125 = pneg %p76
      %p126 = pneg %p73
      %s127 = smul.u32 8, %s13
      %p128 = scmp.lt.s32.totalorder %s127, 15
      %s129 = scalar_select %p128, %s127, 15
      %s130 = smul.addr %s129, 4
      %s131 = smul.addr %s130, 4
      %s132 = scalar_lea.vmem %s0, %s131
      %s133 = smul.u32 8, %s13
      %p135 = scmp.eq.s32.totalorder %s13, 0
      // Predicated region
      $region29: #{simple_lstm_baseline.1} parent=27 // pred_check
        %p136 = pneg %p135
      $region30: #{simple_lstm_baseline.1} parent=27 // pred_check_branch
        %138 = sbr.rel (%p136) target = $region32
      $region31: #{simple_lstm_baseline.1} parent=27 // pred_region
        %139 = vst [vmem:[%s2] sm:$0xff] 0.0
        %140 = vst [vmem:[#allocation2] sm:$0xff] 0.0
      $region32: #{simple_lstm_baseline.1} parent=27 // pred_fallthru
        _
      %v141 = vld [vmem:[%s2] sm:$0xff]
      %v142 = vld [vmem:[#allocation2] sm:$0xff]
      %v143 = vld [vmem:[%s132] sm:$0xff]
      %v144 = vld [vmem:[%s132 + $0x8] sm:$0xff]
      %v145 = vunpack.c.l.bf16 %v143
      %v146 = vunpack.c.h.bf16 %v143
      %v147 = vunpack.c.l.bf16 %v144
      %v148 = vunpack.c.h.bf16 %v144
      %v149 = vpack.c.bf16 %v141, %v141
      %v150 = vld [vmem:[%s1] sm:$0xff]
      %v151 = vld [vmem:[%s1 + $0x8] sm:$0xff]
      %v152 = vld [vmem:[%s1 + $0x10] sm:$0xff]
      %v153 = vld [vmem:[%s1 + $0x18] sm:$0xff]
      %v154 = vld [vmem:[%s1 + $0x20] sm:$0xff]
      %v155 = vld [vmem:[%s1 + $0x28] sm:$0xff]
      %v156 = vld [vmem:[%s1 + $0x30] sm:$0xff]
      %v157 = vld [vmem:[%s1 + $0x38] sm:$0xff]
      %v158 = vld [vmem:[%s1 + $0x40] sm:$0xff]
      %v159 = vld [vmem:[%s1 + $0x48] sm:$0xff]
      %v160 = vld [vmem:[%s1 + $0x50] sm:$0xff]
      %v161 = vld [vmem:[%s1 + $0x58] sm:$0xff]
      %v162 = vld [vmem:[%s1 + $0x60] sm:$0xff]
      %v163 = vld [vmem:[%s1 + $0x68] sm:$0xff]
      %v164 = vld [vmem:[%s1 + $0x70] sm:$0xff]
      %v165 = vld [vmem:[%s1 + $0x78] sm:$0xff]
      %v166 = vld [vmem:[%s1 + $0x80] sm:$0xff]
      %v167 = vld [vmem:[%s1 + $0x88] sm:$0xff]
      %v168 = vld [vmem:[%s1 + $0x90] sm:$0xff]
      %v169 = vld [vmem:[%s1 + $0x98] sm:$0xff]
      %v170 = vld [vmem:[%s1 + $0xa0] sm:$0xff]
      %v171 = vld [vmem:[%s1 + $0xa8] sm:$0xff]
      %v172 = vld [vmem:[%s1 + $0xb0] sm:$0xff]
      %v173 = vld [vmem:[%s1 + $0xb8] sm:$0xff]
      %v174 = vld [vmem:[%s1 + $0xc0] sm:$0xff]
      %v175 = vld [vmem:[%s1 + $0xc8] sm:$0xff]
      %v176 = vld [vmem:[%s1 + $0xd0] sm:$0xff]
      %v177 = vld [vmem:[%s1 + $0xd8] sm:$0xff]
      %v178 = vld [vmem:[%s1 + $0xe0] sm:$0xff]
      %v179 = vld [vmem:[%s1 + $0xe8] sm:$0xff]
      %v180 = vld [vmem:[%s1 + $0xf0] sm:$0xff]
      %v181 = vld [vmem:[%s1 + $0xf8] sm:$0xff]
      %v214 = vunpack.c.l.b16 %v150
      %v215 = vunpack.c.h.b16 %v150
      %v216 = vunpack.c.l.b16 %v151
      %v217 = vunpack.c.h.b16 %v151
      %v218 = vunpack.c.l.b16 %v152
      %v219 = vunpack.c.h.b16 %v152
      %v220 = vunpack.c.l.b16 %v153
      %v221 = vunpack.c.h.b16 %v153
      %v222 = vunpack.c.l.b16 %v154
      %v223 = vunpack.c.h.b16 %v154
      %v224 = vunpack.c.l.b16 %v155
      %v225 = vunpack.c.h.b16 %v155
      %v226 = vunpack.c.l.b16 %v156
      %v227 = vunpack.c.h.b16 %v156
      %v228 = vunpack.c.l.b16 %v157
      %v229 = vunpack.c.h.b16 %v157
      %v230 = vunpack.c.l.b16 %v158
      %v231 = vunpack.c.h.b16 %v158
      %v232 = vunpack.c.l.b16 %v159
      %v233 = vunpack.c.h.b16 %v159
      %v234 = vunpack.c.l.b16 %v160
      %v235 = vunpack.c.h.b16 %v160
      %v236 = vunpack.c.l.b16 %v161
      %v237 = vunpack.c.h.b16 %v161
      %v238 = vunpack.c.l.b16 %v162
      %v239 = vunpack.c.h.b16 %v162
      %v240 = vunpack.c.l.b16 %v163
      %v241 = vunpack.c.h.b16 %v163
      %v242 = vunpack.c.l.b16 %v164
      %v243 = vunpack.c.h.b16 %v164
      %v244 = vunpack.c.l.b16 %v165
      %v245 = vunpack.c.h.b16 %v165
      %v246 = vunpack.c.l.b16 %v166
      %v247 = vunpack.c.h.b16 %v166
      %v248 = vunpack.c.l.b16 %v167
      %v249 = vunpack.c.h.b16 %v167
      %v250 = vunpack.c.l.b16 %v168
      %v251 = vunpack.c.h.b16 %v168
      %v252 = vunpack.c.l.b16 %v169
      %v253 = vunpack.c.h.b16 %v169
      %v254 = vunpack.c.l.b16 %v170
      %v255 = vunpack.c.h.b16 %v170
      %v256 = vunpack.c.l.b16 %v171
      %v257 = vunpack.c.h.b16 %v171
      %v258 = vunpack.c.l.b16 %v172
      %v259 = vunpack.c.h.b16 %v172
      %v260 = vunpack.c.l.b16 %v173
      %v261 = vunpack.c.h.b16 %v173
      %v262 = vunpack.c.l.b16 %v174
      %v263 = vunpack.c.h.b16 %v174
      %v264 = vunpack.c.l.b16 %v175
      %v265 = vunpack.c.h.b16 %v175
      %v266 = vunpack.c.l.b16 %v176
      %v267 = vunpack.c.h.b16 %v176
      %v268 = vunpack.c.l.b16 %v177
      %v269 = vunpack.c.h.b16 %v177
      %v270 = vunpack.c.l.b16 %v178
      %v271 = vunpack.c.h.b16 %v178
      %v272 = vunpack.c.l.b16 %v179
      %v273 = vunpack.c.h.b16 %v179
      %v274 = vunpack.c.l.b16 %v180
      %v275 = vunpack.c.h.b16 %v180
      %v276 = vunpack.c.l.b16 %v181
      %v277 = vunpack.c.h.b16 %v181
      %v278 = vpack.c.b16 %v218, %v214
      %v279 = vpack.c.b16 %v219, %v215
      %v280 = vpack.c.b16 %v220, %v216
      %v281 = vpack.c.b16 %v221, %v217
      %v282 = vpack.c.b16 %v226, %v222
      %v283 = vpack.c.b16 %v227, %v223
      %v284 = vpack.c.b16 %v228, %v224
      %v285 = vpack.c.b16 %v229, %v225
      %v286 = vpack.c.b16 %v234, %v230
      %v287 = vpack.c.b16 %v235, %v231
      %v288 = vpack.c.b16 %v236, %v232
      %v289 = vpack.c.b16 %v237, %v233
      %v290 = vpack.c.b16 %v242, %v238
      %v291 = vpack.c.b16 %v243, %v239
      %v292 = vpack.c.b16 %v244, %v240
      %v293 = vpack.c.b16 %v245, %v241
      %v294 = vpack.c.b16 %v250, %v246
      %v295 = vpack.c.b16 %v251, %v247
      %v296 = vpack.c.b16 %v252, %v248
      %v297 = vpack.c.b16 %v253, %v249
      %v298 = vpack.c.b16 %v258, %v254
      %v299 = vpack.c.b16 %v259, %v255
      %v300 = vpack.c.b16 %v260, %v256
      %v301 = vpack.c.b16 %v261, %v257
      %v302 = vpack.c.b16 %v266, %v262
      %v303 = vpack.c.b16 %v267, %v263
      %v304 = vpack.c.b16 %v268, %v264
      %v305 = vpack.c.b16 %v269, %v265
      %v306 = vpack.c.b16 %v274, %v270
      %v307 = vpack.c.b16 %v275, %v271
      %v308 = vpack.c.b16 %v276, %v272
      %v309 = vpack.c.b16 %v277, %v273
      %342 = vmatprep.subr.bf16.mxu0 %v279
      %343 = vmatpush1.bf16.msra.mxu0 %v278
      %344 = vmatprep.subr.bf16.mxu0 %v283
      %345 = vmatpush1.bf16.msra.mxu0 %v282
      %346 = vmatprep.subr.bf16.mxu0 %v287
      %347 = vmatpush1.bf16.msra.mxu0 %v286
      %348 = vmatprep.subr.bf16.mxu0 %v291
      %349 = vmatpush1.bf16.msra.mxu0 %v290
      %350 = vmatprep.subr.bf16.mxu0 %v295
      %351 = vmatpush1.bf16.msra.mxu0 %v294
      %352 = vmatprep.subr.bf16.mxu0 %v299
      %353 = vmatpush1.bf16.msra.mxu0 %v298
      %354 = vmatprep.subr.bf16.mxu0 %v303
      %355 = vmatpush1.bf16.msra.mxu0 %v302
      %356 = vmatprep.subr.bf16.mxu0 %v307
      %357 = vmatpush1.bf16.msra.mxu0 %v306
      %358 = vmatprep.subr.bf16.mxu0 0
      %359 = vmatpush1.bf16.msra.mxu0 0
      %360 = vmatprep.subr.bf16.mxu0 0
      %361 = vmatpush1.bf16.msra.mxu0 0
      %362 = vmatprep.subr.bf16.mxu0 0
      %363 = vmatpush1.bf16.msra.mxu0 0
      %364 = vmatprep.subr.bf16.mxu0 0
      %365 = vmatpush1.bf16.msra.mxu0 0
      %366 = vmatprep.subr.bf16.mxu0 0
      %367 = vmatpush1.bf16.msra.mxu0 0
      %368 = vmatprep.subr.bf16.mxu0 0
      %369 = vmatpush1.bf16.msra.mxu0 0
      %370 = vmatprep.subr.bf16.mxu0 0
      %371 = vmatpush1.bf16.msra.mxu0 0
      %372 = vmatprep.subr.bf16.mxu0 0
      %373 = vmatpush1.bf16.msra.mxu0 0
      %374 = vmatprep.mubr.bf16.mxu0 0
      %375 = vmatmul.mubr.bf16.gmra.mrb[0].mxu0 %v149
      %v376 = vpop.f32.mrb[0].mxu0
      %v377 = vadd.f32 0.0, %v376
      %v378 = vpop.f32.mrb[0].mxu0
      %v379 = vadd.f32 0.0, %v378
      %v380 = vpop.f32.mrb[0].mxu0
      %v381 = vpop.f32.mrb[0].mxu0
      %382 = vdwg.mxu0
      %383 = vmatprep.subr.bf16.mxu0 %v281
      %384 = vmatpush1.bf16.msra.mxu0 %v280
      %385 = vmatprep.subr.bf16.mxu0 %v285
      %386 = vmatpush1.bf16.msra.mxu0 %v284
      %387 = vmatprep.subr.bf16.mxu0 %v289
      %388 = vmatpush1.bf16.msra.mxu0 %v288
      %389 = vmatprep.subr.bf16.mxu0 %v293
      %390 = vmatpush1.bf16.msra.mxu0 %v292
      %391 = vmatprep.subr.bf16.mxu0 %v297
      %392 = vmatpush1.bf16.msra.mxu0 %v296
      %393 = vmatprep.subr.bf16.mxu0 %v301
      %394 = vmatpush1.bf16.msra.mxu0 %v300
      %395 = vmatprep.subr.bf16.mxu0 %v305
      %396 = vmatpush1.bf16.msra.mxu0 %v304
      %397 = vmatprep.subr.bf16.mxu0 %v309
      %398 = vmatpush1.bf16.msra.mxu0 %v308
      %399 = vmatprep.subr.bf16.mxu0 0
      %400 = vmatpush1.bf16.msra.mxu0 0
      %401 = vmatprep.subr.bf16.mxu0 0
      %402 = vmatpush1.bf16.msra.mxu0 0
      %403 = vmatprep.subr.bf16.mxu0 0
      %404 = vmatpush1.bf16.msra.mxu0 0
      %405 = vmatprep.subr.bf16.mxu0 0
      %406 = vmatpush1.bf16.msra.mxu0 0
      %407 = vmatprep.subr.bf16.mxu0 0
      %408 = vmatpush1.bf16.msra.mxu0 0
      %409 = vmatprep.subr.bf16.mxu0 0
      %410 = vmatpush1.bf16.msra.mxu0 0
      %411 = vmatprep.subr.bf16.mxu0 0
      %412 = vmatpush1.bf16.msra.mxu0 0
      %413 = vmatprep.subr.bf16.mxu0 0
      %414 = vmatpush1.bf16.msra.mxu0 0
      %415 = vmatprep.mubr.bf16.mxu0 0
      %416 = vmatmul.mubr.bf16.gmra.mrb[0].mxu0 %v149
      %v417 = vpop.f32.mrb[0].mxu0
      %v418 = vadd.f32 0.0, %v417
      %v419 = vpop.f32.mrb[0].mxu0
      %v420 = vadd.f32 0.0, %v419
      %v421 = vpop.f32.mrb[0].mxu0
      %v422 = vpop.f32.mrb[0].mxu0
      %423 = vdwg.mxu0
      %v424 = vadd.f32 %v145, %v377
      %v425 = vadd.f32 %v146, %v379
      %v426 = vadd.f32 %v147, %v418
      %v427 = vadd.f32 %v148, %v420
      %v428 = vxor.u32 %v424, 2147483648
      %v429 = vmul.f32 %v428, 1.442695
      %v430 = vpow.pop %v429
      %v431 = vadd.f32 %v430, 1.0
      %v432 = vrcp.pop %v431
      %v433 = vmul.f32 1.0, %v432
      %v434 = vxor.u32 %v425, 2147483648
      %v435 = vmul.f32 %v434, 1.442695
      %v436 = vpow.pop %v435
      %v437 = vadd.f32 %v436, 1.0
      %v438 = vrcp.pop %v437
      %v439 = vmul.f32 1.0, %v438
      %v440 = vtanh.pop %v426
      %v441 = vxor.u32 %v427, 2147483648
      %v442 = vmul.f32 %v441, 1.442695
      %v443 = vpow.pop %v442
      %v444 = vadd.f32 %v443, 1.0
      %v445 = vrcp.pop %v444
      %v446 = vmul.f32 1.0, %v445
      %v447 = vmul.f32 %v439, %v142
      %v448 = vmul.f32 %v433, %v440
      %v449 = vadd.f32 %v447, %v448
      %v450 = vtanh.pop %v449
      %v451 = vmul.f32 %v446, %v450
      %s452 = scalar_lea.vmem %s132, 16
      %v453 = vld [vmem:[%s452] sm:$0xff]
      %v454 = vld [vmem:[%s452 + $0x8] sm:$0xff]
      %v455 = vunpack.c.l.bf16 %v453
      %v456 = vunpack.c.h.bf16 %v453
      %v457 = vunpack.c.l.bf16 %v454
      %v458 = vunpack.c.h.bf16 %v454
      %v459 = vpack.c.bf16 %v451, %v451
      %460 = vmatprep.subr.bf16.mxu0 %v279
      %461 = vmatpush1.bf16.msra.mxu0 %v278
      %462 = vmatprep.subr.bf16.mxu0 %v283
      %463 = vmatpush1.bf16.msra.mxu0 %v282
      %464 = vmatprep.subr.bf16.mxu0 %v287
      %465 = vmatpush1.bf16.msra.mxu0 %v286
      %466 = vmatprep.subr.bf16.mxu0 %v291
      %467 = vmatpush1.bf16.msra.mxu0 %v290
      %468 = vmatprep.subr.bf16.mxu0 %v295
      %469 = vmatpush1.bf16.msra.mxu0 %v294
      %470 = vmatprep.subr.bf16.mxu0 %v299
      %471 = vmatpush1.bf16.msra.mxu0 %v298
      %472 = vmatprep.subr.bf16.mxu0 %v303
      %473 = vmatpush1.bf16.msra.mxu0 %v302
      %474 = vmatprep.subr.bf16.mxu0 %v307
      %475 = vmatpush1.bf16.msra.mxu0 %v306
      %476 = vmatprep.subr.bf16.mxu0 0
      %477 = vmatpush1.bf16.msra.mxu0 0
      %478 = vmatprep.subr.bf16.mxu0 0
      %479 = vmatpush1.bf16.msra.mxu0 0
      %480 = vmatprep.subr.bf16.mxu0 0
      %481 = vmatpush1.bf16.msra.mxu0 0
      %482 = vmatprep.subr.bf16.mxu0 0
      %483 = vmatpush1.bf16.msra.mxu0 0
      %484 = vmatprep.subr.bf16.mxu0 0
      %485 = vmatpush1.bf16.msra.mxu0 0
      %486 = vmatprep.subr.bf16.mxu0 0
      %487 = vmatpush1.bf16.msra.mxu0 0
      %488 = vmatprep.subr.bf16.mxu0 0
      %489 = vmatpush1.bf16.msra.mxu0 0
      %490 = vmatprep.subr.bf16.mxu0 0
      %491 = vmatpush1.bf16.msra.mxu0 0
      %492 = vmatprep.mubr.bf16.mxu0 0
      %493 = vmatmul.mubr.bf16.gmra.mrb[0].mxu0 %v459
      %v494 = vpop.f32.mrb[0].mxu0
      %v495 = vadd.f32 0.0, %v494
      %v496 = vpop.f32.mrb[0].mxu0
      %v497 = vadd.f32 0.0, %v496
      %v498 = vpop.f32.mrb[0].mxu0
      %v499 = vpop.f32.mrb[0].mxu0
      %500 = vdwg.mxu0
      %501 = vmatprep.subr.bf16.mxu0 %v281
      %502 = vmatpush1.bf16.msra.mxu0 %v280
      %503 = vmatprep.subr.bf16.mxu0 %v285
      %504 = vmatpush1.bf16.msra.mxu0 %v284
      %505 = vmatprep.subr.bf16.mxu0 %v289
      %506 = vmatpush1.bf16.msra.mxu0 %v288
      %507 = vmatprep.subr.bf16.mxu0 %v293
      %508 = vmatpush1.bf16.msra.mxu0 %v292
      %509 = vmatprep.subr.bf16.mxu0 %v297
      %510 = vmatpush1.bf16.msra.mxu0 %v296
      %511 = vmatprep.subr.bf16.mxu0 %v301
      %512 = vmatpush1.bf16.msra.mxu0 %v300
      %513 = vmatprep.subr.bf16.mxu0 %v305
      %514 = vmatpush1.bf16.msra.mxu0 %v304
      %515 = vmatprep.subr.bf16.mxu0 %v309
      %516 = vmatpush1.bf16.msra.mxu0 %v308
      %517 = vmatprep.subr.bf16.mxu0 0
      %518 = vmatpush1.bf16.msra.mxu0 0
      %519 = vmatprep.subr.bf16.mxu0 0
      %520 = vmatpush1.bf16.msra.mxu0 0
      %521 = vmatprep.subr.bf16.mxu0 0
      %522 = vmatpush1.bf16.msra.mxu0 0
      %523 = vmatprep.subr.bf16.mxu0 0
      %524 = vmatpush1.bf16.msra.mxu0 0
      %525 = vmatprep.subr.bf16.mxu0 0
      %526 = vmatpush1.bf16.msra.mxu0 0
      %527 = vmatprep.subr.bf16.mxu0 0
      %528 = vmatpush1.bf16.msra.mxu0 0
      %529 = vmatprep.subr.bf16.mxu0 0
      %530 = vmatpush1.bf16.msra.mxu0 0
      %531 = vmatprep.subr.bf16.mxu0 0
      %532 = vmatpush1.bf16.msra.mxu0 0
      %533 = vmatprep.mubr.bf16.mxu0 0
      %534 = vmatmul.mubr.bf16.gmra.mrb[0].mxu0 %v459
      %v535 = vpop.f32.mrb[0].mxu0
      %v536 = vadd.f32 0.0, %v535
      %v537 = vpop.f32.mrb[0].mxu0
      %v538 = vadd.f32 0.0, %v537
      %v539 = vpop.f32.mrb[0].mxu0
      %v540 = vpop.f32.mrb[0].mxu0
      %541 = vdwg.mxu0
      %v542 = vadd.f32 %v455, %v495
      %v543 = vadd.f32 %v456, %v497
      %v544 = vadd.f32 %v457, %v536
      %v545 = vadd.f32 %v458, %v538
      %v546 = vxor.u32 %v542, 2147483648
      %v547 = vmul.f32 %v546, 1.442695
      %v548 = vpow.pop %v547
      %v549 = vadd.f32 %v548, 1.0
      %v550 = vrcp.pop %v549
      %v551 = vmul.f32 1.0, %v550
      %v552 = vxor.u32 %v543, 2147483648
      %v553 = vmul.f32 %v552, 1.442695
      %v554 = vpow.pop %v553
      %v555 = vadd.f32 %v554, 1.0
      %v556 = vrcp.pop %v555
      %v557 = vmul.f32 1.0, %v556
      %v558 = vtanh.pop %v544
      %v559 = vxor.u32 %v545, 2147483648
      %v560 = vmul.f32 %v559, 1.442695
      %v561 = vpow.pop %v560
      %v562 = vadd.f32 %v561, 1.0
      %v563 = vrcp.pop %v562
      %v564 = vmul.f32 1.0, %v563
      %v565 = vmul.f32 %v557, %v449
      %v566 = vmul.f32 %v551, %v558
      %v567 = vadd.f32 %v565, %v566
      %v568 = vtanh.pop %v567
      %v569 = vmul.f32 %v564, %v568
      %s570 = scalar_lea.vmem %s132, 32
      %v571 = vld [vmem:[%s570] sm:$0xff]
      %v572 = vld [vmem:[%s570 + $0x8] sm:$0xff]
      %v573 = vunpack.c.l.bf16 %v571
      %v574 = vunpack.c.h.bf16 %v571
      %v575 = vunpack.c.l.bf16 %v572
      %v576 = vunpack.c.h.bf16 %v572
      %v577 = vpack.c.bf16 %v569, %v569
      %578 = vmatprep.subr.bf16.mxu0 %v279
      %579 = vmatpush1.bf16.msra.mxu0 %v278
      %580 = vmatprep.subr.bf16.mxu0 %v283
      %581 = vmatpush1.bf16.msra.mxu0 %v282
      %582 = vmatprep.subr.bf16.mxu0 %v287
      %583 = vmatpush1.bf16.msra.mxu0 %v286
      %584 = vmatprep.subr.bf16.mxu0 %v291
      %585 = vmatpush1.bf16.msra.mxu0 %v290
      %586 = vmatprep.subr.bf16.mxu0 %v295
      %587 = vmatpush1.bf16.msra.mxu0 %v294
      %588 = vmatprep.subr.bf16.mxu0 %v299
      %589 = vmatpush1.bf16.msra.mxu0 %v298
      %590 = vmatprep.subr.bf16.mxu0 %v303
      %591 = vmatpush1.bf16.msra.mxu0 %v302
      %592 = vmatprep.subr.bf16.mxu0 %v307
      %593 = vmatpush1.bf16.msra.mxu0 %v306
      %594 = vmatprep.subr.bf16.mxu0 0
      %595 = vmatpush1.bf16.msra.mxu0 0
      %596 = vmatprep.subr.bf16.mxu0 0
      %597 = vmatpush1.bf16.msra.mxu0 0
      %598 = vmatprep.subr.bf16.mxu0 0
      %599 = vmatpush1.bf16.msra.mxu0 0
      %600 = vmatprep.subr.bf16.mxu0 0
      %601 = vmatpush1.bf16.msra.mxu0 0
      %602 = vmatprep.subr.bf16.mxu0 0
      %603 = vmatpush1.bf16.msra.mxu0 0
      %604 = vmatprep.subr.bf16.mxu0 0
      %605 = vmatpush1.bf16.msra.mxu0 0
      %606 = vmatprep.subr.bf16.mxu0 0
      %607 = vmatpush1.bf16.msra.mxu0 0
      %608 = vmatprep.subr.bf16.mxu0 0
      %609 = vmatpush1.bf16.msra.mxu0 0
      %610 = vmatprep.mubr.bf16.mxu0 0
      %611 = vmatmul.mubr.bf16.gmra.mrb[0].mxu0 %v577
      %v612 = vpop.f32.mrb[0].mxu0
      %v613 = vadd.f32 0.0, %v612
      %v614 = vpop.f32.mrb[0].mxu0
      %v615 = vadd.f32 0.0, %v614
      %v616 = vpop.f32.mrb[0].mxu0
      %v617 = vpop.f32.mrb[0].mxu0
      %618 = vdwg.mxu0
      %619 = vmatprep.subr.bf16.mxu0 %v281
      %620 = vmatpush1.bf16.msra.mxu0 %v280
      %621 = vmatprep.subr.bf16.mxu0 %v285
      %622 = vmatpush1.bf16.msra.mxu0 %v284
      %623 = vmatprep.subr.bf16.mxu0 %v289
      %624 = vmatpush1.bf16.msra.mxu0 %v288
      %625 = vmatprep.subr.bf16.mxu0 %v293
      %626 = vmatpush1.bf16.msra.mxu0 %v292
      %627 = vmatprep.subr.bf16.mxu0 %v297
      %628 = vmatpush1.bf16.msra.mxu0 %v296
      %629 = vmatprep.subr.bf16.mxu0 %v301
      %630 = vmatpush1.bf16.msra.mxu0 %v300
      %631 = vmatprep.subr.bf16.mxu0 %v305
      %632 = vmatpush1.bf16.msra.mxu0 %v304
      %633 = vmatprep.subr.bf16.mxu0 %v309
      %634 = vmatpush1.bf16.msra.mxu0 %v308
      %635 = vmatprep.subr.bf16.mxu0 0
      %636 = vmatpush1.bf16.msra.mxu0 0
      %637 = vmatprep.subr.bf16.mxu0 0
      %638 = vmatpush1.bf16.msra.mxu0 0
      %639 = vmatprep.subr.bf16.mxu0 0
      %640 = vmatpush1.bf16.msra.mxu0 0
      %641 = vmatprep.subr.bf16.mxu0 0
      %642 = vmatpush1.bf16.msra.mxu0 0
      %643 = vmatprep.subr.bf16.mxu0 0
      %644 = vmatpush1.bf16.msra.mxu0 0
      %645 = vmatprep.subr.bf16.mxu0 0
      %646 = vmatpush1.bf16.msra.mxu0 0
      %647 = vmatprep.subr.bf16.mxu0 0
      %648 = vmatpush1.bf16.msra.mxu0 0
      %649 = vmatprep.subr.bf16.mxu0 0
      %650 = vmatpush1.bf16.msra.mxu0 0
      %651 = vmatprep.mubr.bf16.mxu0 0
      %652 = vmatmul.mubr.bf16.gmra.mrb[0].mxu0 %v577
      %v653 = vpop.f32.mrb[0].mxu0
      %v654 = vadd.f32 0.0, %v653
      %v655 = vpop.f32.mrb[0].mxu0
      %v656 = vadd.f32 0.0, %v655
      %v657 = vpop.f32.mrb[0].mxu0
      %v658 = vpop.f32.mrb[0].mxu0
      %659 = vdwg.mxu0
      %v660 = vadd.f32 %v573, %v613
      %v661 = vadd.f32 %v574, %v615
      %v662 = vadd.f32 %v575, %v654
      %v663 = vadd.f32 %v576, %v656
      %v664 = vxor.u32 %v660, 2147483648
      %v665 = vmul.f32 %v664, 1.442695
      %v666 = vpow.pop %v665
      %v667 = vadd.f32 %v666, 1.0
      %v668 = vrcp.pop %v667
      %v669 = vmul.f32 1.0, %v668
      %v670 = vxor.u32 %v661, 2147483648
      %v671 = vmul.f32 %v670, 1.442695
      %v672 = vpow.pop %v671
      %v673 = vadd.f32 %v672, 1.0
      %v674 = vrcp.pop %v673
      %v675 = vmul.f32 1.0, %v674
      %v676 = vtanh.pop %v662
      %v677 = vxor.u32 %v663, 2147483648
      %v678 = vmul.f32 %v677, 1.442695
      %v679 = vpow.pop %v678
      %v680 = vadd.f32 %v679, 1.0
      %v681 = vrcp.pop %v680
      %v682 = vmul.f32 1.0, %v681
      %v683 = vmul.f32 %v675, %v567
      %v684 = vmul.f32 %v669, %v676
      %v685 = vadd.f32 %v683, %v684
      %v686 = vtanh.pop %v685
      %v687 = vmul.f32 %v682, %v686
      %s688 = scalar_lea.vmem %s132, 48
      %v689 = vld [vmem:[%s688] sm:$0xff]
      %v690 = vld [vmem:[%s688 + $0x8] sm:$0xff]
      %v691 = vunpack.c.l.bf16 %v689
      %v692 = vunpack.c.h.bf16 %v689
      %v693 = vunpack.c.l.bf16 %v690
      %v694 = vunpack.c.h.bf16 %v690
      %v695 = vpack.c.bf16 %v687, %v687
      %696 = vmatprep.subr.bf16.mxu0 %v279
      %697 = vmatpush1.bf16.msra.mxu0 %v278
      %698 = vmatprep.subr.bf16.mxu0 %v283
      %699 = vmatpush1.bf16.msra.mxu0 %v282
      %700 = vmatprep.subr.bf16.mxu0 %v287
      %701 = vmatpush1.bf16.msra.mxu0 %v286
      %702 = vmatprep.subr.bf16.mxu0 %v291
      %703 = vmatpush1.bf16.msra.mxu0 %v290
      %704 = vmatprep.subr.bf16.mxu0 %v295
      %705 = vmatpush1.bf16.msra.mxu0 %v294
      %706 = vmatprep.subr.bf16.mxu0 %v299
      %707 = vmatpush1.bf16.msra.mxu0 %v298
      %708 = vmatprep.subr.bf16.mxu0 %v303
      %709 = vmatpush1.bf16.msra.mxu0 %v302
      %710 = vmatprep.subr.bf16.mxu0 %v307
      %711 = vmatpush1.bf16.msra.mxu0 %v306
      %712 = vmatprep.subr.bf16.mxu0 0
      %713 = vmatpush1.bf16.msra.mxu0 0
      %714 = vmatprep.subr.bf16.mxu0 0
      %715 = vmatpush1.bf16.msra.mxu0 0
      %716 = vmatprep.subr.bf16.mxu0 0
      %717 = vmatpush1.bf16.msra.mxu0 0
      %718 = vmatprep.subr.bf16.mxu0 0
      %719 = vmatpush1.bf16.msra.mxu0 0
      %720 = vmatprep.subr.bf16.mxu0 0
      %721 = vmatpush1.bf16.msra.mxu0 0
      %722 = vmatprep.subr.bf16.mxu0 0
      %723 = vmatpush1.bf16.msra.mxu0 0
      %724 = vmatprep.subr.bf16.mxu0 0
      %725 = vmatpush1.bf16.msra.mxu0 0
      %726 = vmatprep.subr.bf16.mxu0 0
      %727 = vmatpush1.bf16.msra.mxu0 0
      %728 = vmatprep.mubr.bf16.mxu0 0
      %729 = vmatmul.mubr.bf16.gmra.mrb[0].mxu0 %v695
      %v730 = vpop.f32.mrb[0].mxu0
      %v731 = vadd.f32 0.0, %v730
      %v732 = vpop.f32.mrb[0].mxu0
      %v733 = vadd.f32 0.0, %v732
      %v734 = vpop.f32.mrb[0].mxu0
      %v735 = vpop.f32.mrb[0].mxu0
      %736 = vdwg.mxu0
      %737 = vmatprep.subr.bf16.mxu0 %v281
      %738 = vmatpush1.bf16.msra.mxu0 %v280
      %739 = vmatprep.subr.bf16.mxu0 %v285
      %740 = vmatpush1.bf16.msra.mxu0 %v284
      %741 = vmatprep.subr.bf16.mxu0 %v289
      %742 = vmatpush1.bf16.msra.mxu0 %v288
      %743 = vmatprep.subr.bf16.mxu0 %v293
      %744 = vmatpush1.bf16.msra.mxu0 %v292
      %745 = vmatprep.subr.bf16.mxu0 %v297
      %746 = vmatpush1.bf16.msra.mxu0 %v296
      %747 = vmatprep.subr.bf16.mxu0 %v301
      %748 = vmatpush1.bf16.msra.mxu0 %v300
      %749 = vmatprep.subr.bf16.mxu0 %v305
      %750 = vmatpush1.bf16.msra.mxu0 %v304
      %751 = vmatprep.subr.bf16.mxu0 %v309
      %752 = vmatpush1.bf16.msra.mxu0 %v308
      %753 = vmatprep.subr.bf16.mxu0 0
      %754 = vmatpush1.bf16.msra.mxu0 0
      %755 = vmatprep.subr.bf16.mxu0 0
      %756 = vmatpush1.bf16.msra.mxu0 0
      %757 = vmatprep.subr.bf16.mxu0 0
      %758 = vmatpush1.bf16.msra.mxu0 0
      %759 = vmatprep.subr.bf16.mxu0 0
      %760 = vmatpush1.bf16.msra.mxu0 0
      %761 = vmatprep.subr.bf16.mxu0 0
      %762 = vmatpush1.bf16.msra.mxu0 0
      %763 = vmatprep.subr.bf16.mxu0 0
      %764 = vmatpush1.bf16.msra.mxu0 0
      %765 = vmatprep.subr.bf16.mxu0 0
      %766 = vmatpush1.bf16.msra.mxu0 0
      %767 = vmatprep.subr.bf16.mxu0 0
      %768 = vmatpush1.bf16.msra.mxu0 0
      %769 = vmatprep.mubr.bf16.mxu0 0
      %770 = vmatmul.mubr.bf16.gmra.mrb[0].mxu0 %v695
      %v771 = vpop.f32.mrb[0].mxu0
      %v772 = vadd.f32 0.0, %v771
      %v773 = vpop.f32.mrb[0].mxu0
      %v774 = vadd.f32 0.0, %v773
      %v775 = vpop.f32.mrb[0].mxu0
      %v776 = vpop.f32.mrb[0].mxu0
      %777 = vdwg.mxu0
      %v778 = vadd.f32 %v691, %v731
      %v779 = vadd.f32 %v692, %v733
      %v780 = vadd.f32 %v693, %v772
      %v781 = vadd.f32 %v694, %v774
      %v782 = vxor.u32 %v778, 2147483648
      %v783 = vmul.f32 %v782, 1.442695
      %v784 = vpow.pop %v783
      %v785 = vadd.f32 %v784, 1.0
      %v786 = vrcp.pop %v785
      %v787 = vmul.f32 1.0, %v786
      %v788 = vxor.u32 %v779, 2147483648
      %v789 = vmul.f32 %v788, 1.442695
      %v790 = vpow.pop %v789
      %v791 = vadd.f32 %v790, 1.0
      %v792 = vrcp.pop %v791
      %v793 = vmul.f32 1.0, %v792
      %v794 = vtanh.pop %v780
      %v795 = vxor.u32 %v781, 2147483648
      %v796 = vmul.f32 %v795, 1.442695
      %v797 = vpow.pop %v796
      %v798 = vadd.f32 %v797, 1.0
      %v799 = vrcp.pop %v798
      %v800 = vmul.f32 1.0, %v799
      %v801 = vmul.f32 %v793, %v685
      %v802 = vmul.f32 %v787, %v794
      %v803 = vadd.f32 %v801, %v802
      %v804 = vtanh.pop %v803
      %v805 = vmul.f32 %v800, %v804
      %s806 = scalar_lea.vmem %s132, 64
      %v807 = vld [vmem:[%s806] sm:$0xff]
      %v808 = vld [vmem:[%s806 + $0x8] sm:$0xff]
      %v809 = vunpack.c.l.bf16 %v807
      %v810 = vunpack.c.h.bf16 %v807
      %v811 = vunpack.c.l.bf16 %v808
      %v812 = vunpack.c.h.bf16 %v808
      %v813 = vpack.c.bf16 %v805, %v805
      %814 = vmatprep.subr.bf16.mxu0 %v279
      %815 = vmatpush1.bf16.msra.mxu0 %v278
      %816 = vmatprep.subr.bf16.mxu0 %v283
      %817 = vmatpush1.bf16.msra.mxu0 %v282
      %818 = vmatprep.subr.bf16.mxu0 %v287
      %819 = vmatpush1.bf16.msra.mxu0 %v286
      %820 = vmatprep.subr.bf16.mxu0 %v291
      %821 = vmatpush1.bf16.msra.mxu0 %v290
      %822 = vmatprep.subr.bf16.mxu0 %v295
      %823 = vmatpush1.bf16.msra.mxu0 %v294
      %824 = vmatprep.subr.bf16.mxu0 %v299
      %825 = vmatpush1.bf16.msra.mxu0 %v298
      %826 = vmatprep.subr.bf16.mxu0 %v303
      %827 = vmatpush1.bf16.msra.mxu0 %v302
      %828 = vmatprep.subr.bf16.mxu0 %v307
      %829 = vmatpush1.bf16.msra.mxu0 %v306
      %830 = vmatprep.subr.bf16.mxu0 0
      %831 = vmatpush1.bf16.msra.mxu0 0
      %832 = vmatprep.subr.bf16.mxu0 0
      %833 = vmatpush1.bf16.msra.mxu0 0
      %834 = vmatprep.subr.bf16.mxu0 0
      %835 = vmatpush1.bf16.msra.mxu0 0
      %836 = vmatprep.subr.bf16.mxu0 0
      %837 = vmatpush1.bf16.msra.mxu0 0
      %838 = vmatprep.subr.bf16.mxu0 0
      %839 = vmatpush1.bf16.msra.mxu0 0
      %840 = vmatprep.subr.bf16.mxu0 0
      %841 = vmatpush1.bf16.msra.mxu0 0
      %842 = vmatprep.subr.bf16.mxu0 0
      %843 = vmatpush1.bf16.msra.mxu0 0
      %844 = vmatprep.subr.bf16.mxu0 0
      %845 = vmatpush1.bf16.msra.mxu0 0
      %846 = vmatprep.mubr.bf16.mxu0 0
      %847 = vmatmul.mubr.bf16.gmra.mrb[0].mxu0 %v813
      %v848 = vpop.f32.mrb[0].mxu0
      %v849 = vadd.f32 0.0, %v848
      %v850 = vpop.f32.mrb[0].mxu0
      %v851 = vadd.f32 0.0, %v850
      %v852 = vpop.f32.mrb[0].mxu0
      %v853 = vpop.f32.mrb[0].mxu0
      %854 = vdwg.mxu0
      %855 = vmatprep.subr.bf16.mxu0 %v281
      %856 = vmatpush1.bf16.msra.mxu0 %v280
      %857 = vmatprep.subr.bf16.mxu0 %v285
      %858 = vmatpush1.bf16.msra.mxu0 %v284
      %859 = vmatprep.subr.bf16.mxu0 %v289
      %860 = vmatpush1.bf16.msra.mxu0 %v288
      %861 = vmatprep.subr.bf16.mxu0 %v293
      %862 = vmatpush1.bf16.msra.mxu0 %v292
      %863 = vmatprep.subr.bf16.mxu0 %v297
      %864 = vmatpush1.bf16.msra.mxu0 %v296
      %865 = vmatprep.subr.bf16.mxu0 %v301
      %866 = vmatpush1.bf16.msra.mxu0 %v300
      %867 = vmatprep.subr.bf16.mxu0 %v305
      %868 = vmatpush1.bf16.msra.mxu0 %v304
      %869 = vmatprep.subr.bf16.mxu0 %v309
      %870 = vmatpush1.bf16.msra.mxu0 %v308
      %871 = vmatprep.subr.bf16.mxu0 0
      %872 = vmatpush1.bf16.msra.mxu0 0
      %873 = vmatprep.subr.bf16.mxu0 0
      %874 = vmatpush1.bf16.msra.mxu0 0
      %875 = vmatprep.subr.bf16.mxu0 0
      %876 = vmatpush1.bf16.msra.mxu0 0
      %877 = vmatprep.subr.bf16.mxu0 0
      %878 = vmatpush1.bf16.msra.mxu0 0
      %879 = vmatprep.subr.bf16.mxu0 0
      %880 = vmatpush1.bf16.msra.mxu0 0
      %881 = vmatprep.subr.bf16.mxu0 0
      %882 = vmatpush1.bf16.msra.mxu0 0
      %883 = vmatprep.subr.bf16.mxu0 0
      %884 = vmatpush1.bf16.msra.mxu0 0
      %885 = vmatprep.subr.bf16.mxu0 0
      %886 = vmatpush1.bf16.msra.mxu0 0
      %887 = vmatprep.mubr.bf16.mxu0 0
      %888 = vmatmul.mubr.bf16.gmra.mrb[0].mxu0 %v813
      %v889 = vpop.f32.mrb[0].mxu0
      %v890 = vadd.f32 0.0, %v889
      %v891 = vpop.f32.mrb[0].mxu0
      %v892 = vadd.f32 0.0, %v891
      %v893 = vpop.f32.mrb[0].mxu0
      %v894 = vpop.f32.mrb[0].mxu0
      %895 = vdwg.mxu0
      %v896 = vadd.f32 %v809, %v849
      %v897 = vadd.f32 %v810, %v851
      %v898 = vadd.f32 %v811, %v890
      %v899 = vadd.f32 %v812, %v892
      %v900 = vxor.u32 %v896, 2147483648
      %v901 = vmul.f32 %v900, 1.442695
      %v902 = vpow.pop %v901
      %v903 = vadd.f32 %v902, 1.0
      %v904 = vrcp.pop %v903
      %v905 = vmul.f32 1.0, %v904
      %v906 = vxor.u32 %v897, 2147483648
      %v907 = vmul.f32 %v906, 1.442695
      %v908 = vpow.pop %v907
      %v909 = vadd.f32 %v908, 1.0
      %v910 = vrcp.pop %v909
      %v911 = vmul.f32 1.0, %v910
      %v912 = vtanh.pop %v898
      %v913 = vxor.u32 %v899, 2147483648
      %v914 = vmul.f32 %v913, 1.442695
      %v915 = vpow.pop %v914
      %v916 = vadd.f32 %v915, 1.0
      %v917 = vrcp.pop %v916
      %v918 = vmul.f32 1.0, %v917
      %v919 = vmul.f32 %v911, %v803
      %v920 = vmul.f32 %v905, %v912
      %v921 = vadd.f32 %v919, %v920
      %v922 = vtanh.pop %v921
      %v923 = vmul.f32 %v918, %v922
      %s924 = scalar_lea.vmem %s132, 80
      %v925 = vld [vmem:[%s924] sm:$0xff]
      %v926 = vld [vmem:[%s924 + $0x8] sm:$0xff]
      %v927 = vunpack.c.l.bf16 %v925
      %v928 = vunpack.c.h.bf16 %v925
      %v929 = vunpack.c.l.bf16 %v926
      %v930 = vunpack.c.h.bf16 %v926
      %v931 = vpack.c.bf16 %v923, %v923
      %932 = vmatprep.subr.bf16.mxu0 %v279
      %933 = vmatpush1.bf16.msra.mxu0 %v278
      %934 = vmatprep.subr.bf16.mxu0 %v283
      %935 = vmatpush1.bf16.msra.mxu0 %v282
      %936 = vmatprep.subr.bf16.mxu0 %v287
      %937 = vmatpush1.bf16.msra.mxu0 %v286
      %938 = vmatprep.subr.bf16.mxu0 %v291
      %939 = vmatpush1.bf16.msra.mxu0 %v290
      %940 = vmatprep.subr.bf16.mxu0 %v295
      %941 = vmatpush1.bf16.msra.mxu0 %v294
      %942 = vmatprep.subr.bf16.mxu0 %v299
      %943 = vmatpush1.bf16.msra.mxu0 %v298
      %944 = vmatprep.subr.bf16.mxu0 %v303
      %945 = vmatpush1.bf16.msra.mxu0 %v302
      %946 = vmatprep.subr.bf16.mxu0 %v307
      %947 = vmatpush1.bf16.msra.mxu0 %v306
      %948 = vmatprep.subr.bf16.mxu0 0
      %949 = vmatpush1.bf16.msra.mxu0 0
      %950 = vmatprep.subr.bf16.mxu0 0
      %951 = vmatpush1.bf16.msra.mxu0 0
      %952 = vmatprep.subr.bf16.mxu0 0
      %953 = vmatpush1.bf16.msra.mxu0 0
      %954 = vmatprep.subr.bf16.mxu0 0
      %955 = vmatpush1.bf16.msra.mxu0 0
      %956 = vmatprep.subr.bf16.mxu0 0
      %957 = vmatpush1.bf16.msra.mxu0 0
      %958 = vmatprep.subr.bf16.mxu0 0
      %959 = vmatpush1.bf16.msra.mxu0 0
      %960 = vmatprep.subr.bf16.mxu0 0
      %961 = vmatpush1.bf16.msra.mxu0 0
      %962 = vmatprep.subr.bf16.mxu0 0
      %963 = vmatpush1.bf16.msra.mxu0 0
      %964 = vmatprep.mubr.bf16.mxu0 0
      %965 = vmatmul.mubr.bf16.gmra.mrb[0].mxu0 %v931
      %v966 = vpop.f32.mrb[0].mxu0
      %v967 = vadd.f32 0.0, %v966
      %v968 = vpop.f32.mrb[0].mxu0
      %v969 = vadd.f32 0.0, %v968
      %v970 = vpop.f32.mrb[0].mxu0
      %v971 = vpop.f32.mrb[0].mxu0
      %972 = vdwg.mxu0
      %973 = vmatprep.subr.bf16.mxu0 %v281
      %974 = vmatpush1.bf16.msra.mxu0 %v280
      %975 = vmatprep.subr.bf16.mxu0 %v285
      %976 = vmatpush1.bf16.msra.mxu0 %v284
      %977 = vmatprep.subr.bf16.mxu0 %v289
      %978 = vmatpush1.bf16.msra.mxu0 %v288
      %979 = vmatprep.subr.bf16.mxu0 %v293
      %980 = vmatpush1.bf16.msra.mxu0 %v292
      %981 = vmatprep.subr.bf16.mxu0 %v297
      %982 = vmatpush1.bf16.msra.mxu0 %v296
      %983 = vmatprep.subr.bf16.mxu0 %v301
      %984 = vmatpush1.bf16.msra.mxu0 %v300
      %985 = vmatprep.subr.bf16.mxu0 %v305
      %986 = vmatpush1.bf16.msra.mxu0 %v304
      %987 = vmatprep.subr.bf16.mxu0 %v309
      %988 = vmatpush1.bf16.msra.mxu0 %v308
      %989 = vmatprep.subr.bf16.mxu0 0
      %990 = vmatpush1.bf16.msra.mxu0 0
      %991 = vmatprep.subr.bf16.mxu0 0
      %992 = vmatpush1.bf16.msra.mxu0 0
      %993 = vmatprep.subr.bf16.mxu0 0
      %994 = vmatpush1.bf16.msra.mxu0 0
      %995 = vmatprep.subr.bf16.mxu0 0
      %996 = vmatpush1.bf16.msra.mxu0 0
      %997 = vmatprep.subr.bf16.mxu0 0
      %998 = vmatpush1.bf16.msra.mxu0 0
      %999 = vmatprep.subr.bf16.mxu0 0
      %1000 = vmatpush1.bf16.msra.mxu0 0
      %1001 = vmatprep.subr.bf16.mxu0 0
      %1002 = vmatpush1.bf16.msra.mxu0 0
      %1003 = vmatprep.subr.bf16.mxu0 0
      %1004 = vmatpush1.bf16.msra.mxu0 0
      %1005 = vmatprep.mubr.bf16.mxu0 0
      %1006 = vmatmul.mubr.bf16.gmra.mrb[0].mxu0 %v931
      %v1007 = vpop.f32.mrb[0].mxu0
      %v1008 = vadd.f32 0.0, %v1007
      %v1009 = vpop.f32.mrb[0].mxu0
      %v1010 = vadd.f32 0.0, %v1009
      %v1011 = vpop.f32.mrb[0].mxu0
      %v1012 = vpop.f32.mrb[0].mxu0
      %1013 = vdwg.mxu0
      %v1014 = vadd.f32 %v927, %v967
      %v1015 = vadd.f32 %v928, %v969
      %v1016 = vadd.f32 %v929, %v1008
      %v1017 = vadd.f32 %v930, %v1010
      %v1018 = vxor.u32 %v1014, 2147483648
      %v1019 = vmul.f32 %v1018, 1.442695
      %v1020 = vpow.pop %v1019
      %v1021 = vadd.f32 %v1020, 1.0
      %v1022 = vrcp.pop %v1021
      %v1023 = vmul.f32 1.0, %v1022
      %v1024 = vxor.u32 %v1015, 2147483648
      %v1025 = vmul.f32 %v1024, 1.442695
      %v1026 = vpow.pop %v1025
      %v1027 = vadd.f32 %v1026, 1.0
      %v1028 = vrcp.pop %v1027
      %v1029 = vmul.f32 1.0, %v1028
      %v1030 = vtanh.pop %v1016
      %v1031 = vxor.u32 %v1017, 2147483648
      %v1032 = vmul.f32 %v1031, 1.442695
      %v1033 = vpow.pop %v1032
      %v1034 = vadd.f32 %v1033, 1.0
      %v1035 = vrcp.pop %v1034
      %v1036 = vmul.f32 1.0, %v1035
      %v1037 = vmul.f32 %v1029, %v921
      %v1038 = vmul.f32 %v1023, %v1030
      %v1039 = vadd.f32 %v1037, %v1038
      %v1040 = vtanh.pop %v1039
      %v1041 = vmul.f32 %v1036, %v1040
      %s1042 = scalar_lea.vmem %s132, 96
      %v1043 = vld [vmem:[%s1042] sm:$0xff]
      %v1044 = vld [vmem:[%s1042 + $0x8] sm:$0xff]
      %v1045 = vunpack.c.l.bf16 %v1043
      %v1046 = vunpack.c.h.bf16 %v1043
      %v1047 = vunpack.c.l.bf16 %v1044
      %v1048 = vunpack.c.h.bf16 %v1044
      %v1049 = vpack.c.bf16 %v1041, %v1041
      %1050 = vmatprep.subr.bf16.mxu0 %v279
      %1051 = vmatpush1.bf16.msra.mxu0 %v278
      %1052 = vmatprep.subr.bf16.mxu0 %v283
      %1053 = vmatpush1.bf16.msra.mxu0 %v282
      %1054 = vmatprep.subr.bf16.mxu0 %v287
      %1055 = vmatpush1.bf16.msra.mxu0 %v286
      %1056 = vmatprep.subr.bf16.mxu0 %v291
      %1057 = vmatpush1.bf16.msra.mxu0 %v290
      %1058 = vmatprep.subr.bf16.mxu0 %v295
      %1059 = vmatpush1.bf16.msra.mxu0 %v294
      %1060 = vmatprep.subr.bf16.mxu0 %v299
      %1061 = vmatpush1.bf16.msra.mxu0 %v298
      %1062 = vmatprep.subr.bf16.mxu0 %v303
      %1063 = vmatpush1.bf16.msra.mxu0 %v302
      %1064 = vmatprep.subr.bf16.mxu0 %v307
      %1065 = vmatpush1.bf16.msra.mxu0 %v306
      %1066 = vmatprep.subr.bf16.mxu0 0
      %1067 = vmatpush1.bf16.msra.mxu0 0
      %1068 = vmatprep.subr.bf16.mxu0 0
      %1069 = vmatpush1.bf16.msra.mxu0 0
      %1070 = vmatprep.subr.bf16.mxu0 0
      %1071 = vmatpush1.bf16.msra.mxu0 0
      %1072 = vmatprep.subr.bf16.mxu0 0
      %1073 = vmatpush1.bf16.msra.mxu0 0
      %1074 = vmatprep.subr.bf16.mxu0 0
      %1075 = vmatpush1.bf16.msra.mxu0 0
      %1076 = vmatprep.subr.bf16.mxu0 0
      %1077 = vmatpush1.bf16.msra.mxu0 0
      %1078 = vmatprep.subr.bf16.mxu0 0
      %1079 = vmatpush1.bf16.msra.mxu0 0
      %1080 = vmatprep.subr.bf16.mxu0 0
      %1081 = vmatpush1.bf16.msra.mxu0 0
      %1082 = vmatprep.mubr.bf16.mxu0 0
      %1083 = vmatmul.mubr.bf16.gmra.mrb[0].mxu0 %v1049
      %v1084 = vpop.f32.mrb[0].mxu0
      %v1085 = vadd.f32 0.0, %v1084
      %v1086 = vpop.f32.mrb[0].mxu0
      %v1087 = vadd.f32 0.0, %v1086
      %v1088 = vpop.f32.mrb[0].mxu0
      %v1089 = vpop.f32.mrb[0].mxu0
      %1090 = vdwg.mxu0
      %1091 = vmatprep.subr.bf16.mxu0 %v281
      %1092 = vmatpush1.bf16.msra.mxu0 %v280
      %1093 = vmatprep.subr.bf16.mxu0 %v285
      %1094 = vmatpush1.bf16.msra.mxu0 %v284
      %1095 = vmatprep.subr.bf16.mxu0 %v289
      %1096 = vmatpush1.bf16.msra.mxu0 %v288
      %1097 = vmatprep.subr.bf16.mxu0 %v293
      %1098 = vmatpush1.bf16.msra.mxu0 %v292
      %1099 = vmatprep.subr.bf16.mxu0 %v297
      %1100 = vmatpush1.bf16.msra.mxu0 %v296
      %1101 = vmatprep.subr.bf16.mxu0 %v301
      %1102 = vmatpush1.bf16.msra.mxu0 %v300
      %1103 = vmatprep.subr.bf16.mxu0 %v305
      %1104 = vmatpush1.bf16.msra.mxu0 %v304
      %1105 = vmatprep.subr.bf16.mxu0 %v309
      %1106 = vmatpush1.bf16.msra.mxu0 %v308
      %1107 = vmatprep.subr.bf16.mxu0 0
      %1108 = vmatpush1.bf16.msra.mxu0 0
      %1109 = vmatprep.subr.bf16.mxu0 0
      %1110 = vmatpush1.bf16.msra.mxu0 0
      %1111 = vmatprep.subr.bf16.mxu0 0
      %1112 = vmatpush1.bf16.msra.mxu0 0
      %1113 = vmatprep.subr.bf16.mxu0 0
      %1114 = vmatpush1.bf16.msra.mxu0 0
      %1115 = vmatprep.subr.bf16.mxu0 0
      %1116 = vmatpush1.bf16.msra.mxu0 0
      %1117 = vmatprep.subr.bf16.mxu0 0
      %1118 = vmatpush1.bf16.msra.mxu0 0
      %1119 = vmatprep.subr.bf16.mxu0 0
      %1120 = vmatpush1.bf16.msra.mxu0 0
      %1121 = vmatprep.subr.bf16.mxu0 0
      %1122 = vmatpush1.bf16.msra.mxu0 0
      %1123 = vmatprep.mubr.bf16.mxu0 0
      %1124 = vmatmul.mubr.bf16.gmra.mrb[0].mxu0 %v1049
      %v1125 = vpop.f32.mrb[0].mxu0
      %v1126 = vadd.f32 0.0, %v1125
      %v1127 = vpop.f32.mrb[0].mxu0
      %v1128 = vadd.f32 0.0, %v1127
      %v1129 = vpop.f32.mrb[0].mxu0
      %v1130 = vpop.f32.mrb[0].mxu0
      %1131 = vdwg.mxu0
      %v1132 = vadd.f32 %v1045, %v1085
      %v1133 = vadd.f32 %v1046, %v1087
      %v1134 = vadd.f32 %v1047, %v1126
      %v1135 = vadd.f32 %v1048, %v1128
      %v1136 = vxor.u32 %v1132, 2147483648
      %v1137 = vmul.f32 %v1136, 1.442695
      %v1138 = vpow.pop %v1137
      %v1139 = vadd.f32 %v1138, 1.0
      %v1140 = vrcp.pop %v1139
      %v1141 = vmul.f32 1.0, %v1140
      %v1142 = vxor.u32 %v1133, 2147483648
      %v1143 = vmul.f32 %v1142, 1.442695
      %v1144 = vpow.pop %v1143
      %v1145 = vadd.f32 %v1144, 1.0
      %v1146 = vrcp.pop %v1145
      %v1147 = vmul.f32 1.0, %v1146
      %v1148 = vtanh.pop %v1134
      %v1149 = vxor.u32 %v1135, 2147483648
      %v1150 = vmul.f32 %v1149, 1.442695
      %v1151 = vpow.pop %v1150
      %v1152 = vadd.f32 %v1151, 1.0
      %v1153 = vrcp.pop %v1152
      %v1154 = vmul.f32 1.0, %v1153
      %v1155 = vmul.f32 %v1147, %v1039
      %v1156 = vmul.f32 %v1141, %v1148
      %v1157 = vadd.f32 %v1155, %v1156
      %v1158 = vtanh.pop %v1157
      %v1159 = vmul.f32 %v1154, %v1158
      %s1160 = scalar_lea.vmem %s132, 112
      %v1161 = vld [vmem:[%s1160] sm:$0xff]
      %v1162 = vld [vmem:[%s1160 + $0x8] sm:$0xff]
      %v1163 = vunpack.c.l.bf16 %v1161
      %v1164 = vunpack.c.h.bf16 %v1161
      %v1165 = vunpack.c.l.bf16 %v1162
      %v1166 = vunpack.c.h.bf16 %v1162
      %v1167 = vpack.c.bf16 %v1159, %v1159
      %1168 = vmatprep.subr.bf16.mxu0 %v279
      %1169 = vmatpush1.bf16.msra.mxu0 %v278
      %1170 = vmatprep.subr.bf16.mxu0 %v283
      %1171 = vmatpush1.bf16.msra.mxu0 %v282
      %1172 = vmatprep.subr.bf16.mxu0 %v287
      %1173 = vmatpush1.bf16.msra.mxu0 %v286
      %1174 = vmatprep.subr.bf16.mxu0 %v291
      %1175 = vmatpush1.bf16.msra.mxu0 %v290
      %1176 = vmatprep.subr.bf16.mxu0 %v295
      %1177 = vmatpush1.bf16.msra.mxu0 %v294
      %1178 = vmatprep.subr.bf16.mxu0 %v299
      %1179 = vmatpush1.bf16.msra.mxu0 %v298
      %1180 = vmatprep.subr.bf16.mxu0 %v303
      %1181 = vmatpush1.bf16.msra.mxu0 %v302
      %1182 = vmatprep.subr.bf16.mxu0 %v307
      %1183 = vmatpush1.bf16.msra.mxu0 %v306
      %1184 = vmatprep.subr.bf16.mxu0 0
      %1185 = vmatpush1.bf16.msra.mxu0 0
      %1186 = vmatprep.subr.bf16.mxu0 0
      %1187 = vmatpush1.bf16.msra.mxu0 0
      %1188 = vmatprep.subr.bf16.mxu0 0
      %1189 = vmatpush1.bf16.msra.mxu0 0
      %1190 = vmatprep.subr.bf16.mxu0 0
      %1191 = vmatpush1.bf16.msra.mxu0 0
      %1192 = vmatprep.subr.bf16.mxu0 0
      %1193 = vmatpush1.bf16.msra.mxu0 0
      %1194 = vmatprep.subr.bf16.mxu0 0
      %1195 = vmatpush1.bf16.msra.mxu0 0
      %1196 = vmatprep.subr.bf16.mxu0 0
      %1197 = vmatpush1.bf16.msra.mxu0 0
      %1198 = vmatprep.subr.bf16.mxu0 0
      %1199 = vmatpush1.bf16.msra.mxu0 0
      %1200 = vmatprep.mubr.bf16.mxu0 0
      %1201 = vmatmul.mubr.bf16.gmra.mrb[0].mxu0 %v1167
      %v1202 = vpop.f32.mrb[0].mxu0
      %v1203 = vadd.f32 0.0, %v1202
      %v1204 = vpop.f32.mrb[0].mxu0
      %v1205 = vadd.f32 0.0, %v1204
      %v1206 = vpop.f32.mrb[0].mxu0
      %v1207 = vpop.f32.mrb[0].mxu0
      %1208 = vdwg.mxu0
      %1209 = vmatprep.subr.bf16.mxu0 %v281
      %1210 = vmatpush1.bf16.msra.mxu0 %v280
      %1211 = vmatprep.subr.bf16.mxu0 %v285
      %1212 = vmatpush1.bf16.msra.mxu0 %v284
      %1213 = vmatprep.subr.bf16.mxu0 %v289
      %1214 = vmatpush1.bf16.msra.mxu0 %v288
      %1215 = vmatprep.subr.bf16.mxu0 %v293
      %1216 = vmatpush1.bf16.msra.mxu0 %v292
      %1217 = vmatprep.subr.bf16.mxu0 %v297
      %1218 = vmatpush1.bf16.msra.mxu0 %v296
      %1219 = vmatprep.subr.bf16.mxu0 %v301
      %1220 = vmatpush1.bf16.msra.mxu0 %v300
      %1221 = vmatprep.subr.bf16.mxu0 %v305
      %1222 = vmatpush1.bf16.msra.mxu0 %v304
      %1223 = vmatprep.subr.bf16.mxu0 %v309
      %1224 = vmatpush1.bf16.msra.mxu0 %v308
      %1225 = vmatprep.subr.bf16.mxu0 0
      %1226 = vmatpush1.bf16.msra.mxu0 0
      %1227 = vmatprep.subr.bf16.mxu0 0
      %1228 = vmatpush1.bf16.msra.mxu0 0
      %1229 = vmatprep.subr.bf16.mxu0 0
      %1230 = vmatpush1.bf16.msra.mxu0 0
      %1231 = vmatprep.subr.bf16.mxu0 0
      %1232 = vmatpush1.bf16.msra.mxu0 0
      %1233 = vmatprep.subr.bf16.mxu0 0
      %1234 = vmatpush1.bf16.msra.mxu0 0
      %1235 = vmatprep.subr.bf16.mxu0 0
      %1236 = vmatpush1.bf16.msra.mxu0 0
      %1237 = vmatprep.subr.bf16.mxu0 0
      %1238 = vmatpush1.bf16.msra.mxu0 0
      %1239 = vmatprep.subr.bf16.mxu0 0
      %1240 = vmatpush1.bf16.msra.mxu0 0
      %1241 = vmatprep.mubr.bf16.mxu0 0
      %1242 = vmatmul.mubr.bf16.gmra.mrb[0].mxu0 %v1167
      %v1243 = vpop.f32.mrb[0].mxu0
      %v1244 = vadd.f32 0.0, %v1243
      %v1245 = vpop.f32.mrb[0].mxu0
      %v1246 = vadd.f32 0.0, %v1245
      %v1247 = vpop.f32.mrb[0].mxu0
      %v1248 = vpop.f32.mrb[0].mxu0
      %1249 = vdwg.mxu0
      %v1250 = vadd.f32 %v1163, %v1203
      %v1251 = vadd.f32 %v1164, %v1205
      %v1252 = vadd.f32 %v1165, %v1244
      %v1253 = vadd.f32 %v1166, %v1246
      %v1254 = vxor.u32 %v1250, 2147483648
      %v1255 = vmul.f32 %v1254, 1.442695
      %v1256 = vpow.pop %v1255
      %v1257 = vadd.f32 %v1256, 1.0
      %v1258 = vrcp.pop %v1257
      %v1259 = vmul.f32 1.0, %v1258
      %v1260 = vxor.u32 %v1251, 2147483648
      %v1261 = vmul.f32 %v1260, 1.442695
      %v1262 = vpow.pop %v1261
      %v1263 = vadd.f32 %v1262, 1.0
      %v1264 = vrcp.pop %v1263
      %v1265 = vmul.f32 1.0, %v1264
      %v1266 = vtanh.pop %v1252
      %v1267 = vxor.u32 %v1253, 2147483648
      %v1268 = vmul.f32 %v1267, 1.442695
      %v1269 = vpow.pop %v1268
      %v1270 = vadd.f32 %v1269, 1.0
      %v1271 = vrcp.pop %v1270
      %v1272 = vmul.f32 1.0, %v1271
      %v1273 = vmul.f32 %v1265, %v1157
      %v1274 = vmul.f32 %v1259, %v1266
      %v1275 = vadd.f32 %v1273, %v1274
      %v1276 = vtanh.pop %v1275
      %v1277 = vmul.f32 %v1272, %v1276
      %1278 = vst [vmem:[%s2] sm:$0xff] %v1277
      %1279 = vst [vmem:[#allocation2] sm:$0xff] %v1275
      // Predicated region
      $region33: #{simple_lstm_baseline.1} parent=27 // pred_check
        %p1280 = pneg %p73
      $region34: #{simple_lstm_baseline.1} parent=27 // pred_check_branch
        %1282 = sbr.rel (%p1280) target = $region36
      $region35: #{simple_lstm_baseline.1} parent=27 // pred_region
        _
      $region36: #{simple_lstm_baseline.1} parent=27 // pred_fallthru
        _
      // Predicated region
      $region37: #{simple_lstm_baseline.1} parent=27 // pred_check
        %p1283 = pneg %p73
      $region38: #{simple_lstm_baseline.1} parent=27 // pred_check_branch
        %1285 = sbr.rel (%p1283) target = $region40
      $region39: #{simple_lstm_baseline.1} parent=27 // pred_region
        _
      $region40: #{simple_lstm_baseline.1} parent=27 // pred_fallthru
        _
    $region28: #{simple_lstm_baseline.1} parent=5 // pred_fallthru
      _
    %p1286 = scmp.le.s32.totalorder 2, %s8
    // Predicated region
    $region41: #{simple_lstm_baseline.1} parent=5 // pred_check
      %p1287 = pneg %p1286
    $region42: #{simple_lstm_baseline.1} parent=5 // pred_check_branch
      %1289 = sbr.rel (%p1287) target = $region44
    $region43: #{simple_lstm_baseline.1} parent=5 // pred_region
      %s1290 = ssub.s32 %s8, 2
    $region44: #{simple_lstm_baseline.1} parent=5 // pred_fallthru
      _
  $region6: #{simple_lstm_baseline.1} parent=0 // loop_footer
    %s12 = sadd.s32 1, %s8
  $region7: #{simple_lstm_baseline.1} parent=0 // loop_footer_branch
    %7 = sbr.rel target = $region3
  $region8: #{simple_lstm_baseline.1} parent=0 // loop_exit
    _

// kernel: simple_lstm_baseline.1
$region0: #{simple_lstm_baseline.1}
  #allocation0 [shape = 'u32[]', space=smem, size = 0x4, offset = 0x4, fixed_abs, tag = 'smem constant byte address 0x4 - core index']
  #allocation1 [shape = 'u32[144,128]{1,0:T(1,128)}', space=vmem, size = 0x12000, scoped, tag = 'internal scratch']
  #allocation2 [shape = 'f32[8,128]{1,0:T(8,128)}', space=vmem, size = 0x1000, scoped, tag = 'scratch operand']
  %s0 = inlined_call_operand.vmem [shape: bf16[16,8,512], index: 0, kind: input, shape index: {}]
  %s1 = inlined_call_operand.vmem [shape: bf16[128,512], index: 1, kind: input, shape index: {}]
  %s2 = inlined_call_operand.vmem [shape: f32[8,128], index: 2, kind: output, shape index: {}]
  %s3 = sld [smem:[#allocation0]]
  $region45: #{simple_lstm_baseline.1} parent=0
    _
  %s5 = ssub.s32 1, %s3
  %s6 = scalar_select 0, %s5, %s3
  loop: start=0, step=1, limit=4
  $region2: #{simple_lstm_baseline.1} parent=0 // loop_pre_header
    _
  $region3: #{simple_lstm_baseline.1} parent=0 // loop_header
    %s8 = sphi 0, %s12
    %p9 = scmp.ge.s32.totalorder %s8, 4
    %s18 = sphi 0, %s20
    %s21 = sphi 0, %s18
    %s22 = sphi 0, %s21
    %s38 = sphi 0, %s22
    %s42 = sphi 0, %s42
    %s44 = sphi 0, %s42
    %s45 = sphi 0, %s44
    %s59 = sphi 0, %s45
    %s63 = sphi 0, %s63
    %s65 = sphi 0, %s63
    %s66 = sphi 0, %s65
    %s80 = sphi 0, %s66
  $region4: #{simple_lstm_baseline.1} parent=0 // loop_header_branch
    %11 = sbr.rel (%p9) target = $region8
  $region5: #{simple_lstm_baseline.1} parent=0 // loop_body
    %s13 = ssub.s32 %s8, 1
    %s14 = ssub.s32 %s8, 2
    %s15 = sadd.s32 %s8, 1
    %s16 = ssub.s32 %s8, %s15
    %p17 = scmp.eq.s32.totalorder %s16, 0
    %s19 = sadd.s32 %s18, 1
    %s20 = scalar_select %p17, %s18, %s19
    %p23 = pneg %p17
    %p24 = scmp.eq.s32.totalorder %s8, 1
    %p25 = por %p23, %p24
    %p26 = scmp.ne.s32.totalorder %s18, %s21
    %p27 = scmp.eq.s32.totalorder %s8, 0
    %p28 = por %p26, %p27
    %p29 = scmp.ne.s32.totalorder %s18, %s21
    %p30 = scmp.eq.s32.totalorder %s13, 1
    %p31 = por %p29, %p30
    %p32 = scmp.ne.s32.totalorder %s21, %s22
    %p33 = scmp.eq.s32.totalorder %s13, 0
    %p34 = por %p32, %p33
    %p35 = scmp.ne.s32.totalorder %s21, %s22
    %p36 = scmp.eq.s32.totalorder %s14, 1
    %p37 = por %p35, %p36
    %p39 = scmp.ne.s32.totalorder %s22, %s38
    %p40 = scmp.eq.s32.totalorder %s14, 0
    %p41 = por %p39, %p40
    %s43 = sadd.s32 %s42, 1
    %p46 = scmp.eq.s32.totalorder %s8, 1
    %p47 = scmp.ne.s32.totalorder %s42, %s44
    %p48 = scmp.eq.s32.totalorder %s8, 0
    %p49 = por %p47, %p48
    %p50 = scmp.ne.s32.totalorder %s42, %s44
    %p51 = scmp.eq.s32.totalorder %s13, 1
    %p52 = por %p50, %p51
    %p53 = scmp.ne.s32.totalorder %s44, %s45
    %p54 = scmp.eq.s32.totalorder %s13, 0
    %p55 = por %p53, %p54
    %p56 = scmp.ne.s32.totalorder %s44, %s45
    %p57 = scmp.eq.s32.totalorder %s14, 1
    %p58 = por %p56, %p57
    %p60 = scmp.ne.s32.totalorder %s45, %s59
    %p61 = scmp.eq.s32.totalorder %s14, 0
    %p62 = por %p60, %p61
    %s64 = sadd.s32 %s63, 1
    %p67 = scmp.eq.s32.totalorder %s8, 1
    %p68 = scmp.ne.s32.totalorder %s63, %s65
    %p69 = scmp.eq.s32.totalorder %s8, 0
    %p70 = por %p68, %p69
    %p71 = scmp.ne.s32.totalorder %s63, %s65
    %p72 = scmp.eq.s32.totalorder %s13, 1
    %p73 = por %p71, %p72
    %p74 = scmp.ne.s32.totalorder %s65, %s66
    %p75 = scmp.eq.s32.totalorder %s13, 0
    %p76 = por %p74, %p75
    %p77 = scmp.ne.s32.totalorder %s65, %s66
    %p78 = scmp.eq.s32.totalorder %s14, 1
    %p79 = por %p77, %p78
    %p81 = scmp.ne.s32.totalorder %s66, %s80
    %p82 = scmp.eq.s32.totalorder %s14, 0
    %p83 = por %p81, %p82
    %p84 = scmp.le.s32.totalorder 1, %s8
    %p85 = scmp.lt.s32.totalorder %s8, 3
    %p86 = pnand %p84, %p85
    %p87 = pneg %p86
    // Predicated region
    $region9: #{simple_lstm_baseline.1} parent=5 // pred_check
      _
    $region10: #{simple_lstm_baseline.1} parent=5 // pred_check_branch
      %89 = sbr.rel (%p86) target = $region12
    $region11: #{simple_lstm_baseline.1} parent=5 // pred_region
      %s90 = ssub.s32 %s8, 1
      // Predicated region
      $region13: #{simple_lstm_baseline.1} parent=11 // pred_check
        %p91 = pneg %p55
      $region14: #{simple_lstm_baseline.1} parent=11 // pred_check_branch
        %93 = sbr.rel (%p91) target = $region16
      $region15: #{simple_lstm_baseline.1} parent=11 // pred_region
        _
      $region16: #{simple_lstm_baseline.1} parent=11 // pred_fallthru
        _
    $region12: #{simple_lstm_baseline.1} parent=5 // pred_fallthru
      _
    %p94 = scmp.lt.s32.totalorder %s8, 2
    // Predicated region
    $region17: #{simple_lstm_baseline.1} parent=5 // pred_check
      %p95 = pneg %p94
    $region18: #{simple_lstm_baseline.1} parent=5 // pred_check_branch
      %97 = sbr.rel (%p95) target = $region20
    $region19: #{simple_lstm_baseline.1} parent=5 // pred_region
      // Predicated region
      $region21: #{simple_lstm_baseline.1} parent=19 // pred_check
        %p98 = pneg %p28
      $region22: #{simple_lstm_baseline.1} parent=19 // pred_check_branch
        %100 = sbr.rel (%p98) target = $region24
      $region23: #{simple_lstm_baseline.1} parent=19 // pred_region
        %s101 = smul.u32 8, %s8
        %p102 = scmp.lt.s32.totalorder %s101, 15
        %s103 = scalar_select %p102, %s101, 15
        %s104 = smul.addr %s103, 4
        %s105 = smul.addr %s104, 4
        %s106 = scalar_lea.vmem %s0, %s105
        %s107 = smul.u32 8, %s8
      $region24: #{simple_lstm_baseline.1} parent=19 // pred_fallthru
        _
    $region20: #{simple_lstm_baseline.1} parent=5 // pred_fallthru
      _
    %p108 = scmp.le.s32.totalorder 1, %s8
    %p109 = scmp.lt.s32.totalorder %s8, 3
    %p110 = pnand %p108, %p109
    %p111 = pneg %p110
    // Predicated region
    $region25: #{simple_lstm_baseline.1} parent=5 // pred_check
      _
    $region26: #{simple_lstm_baseline.1} parent=5 // pred_check_branch
      %113 = sbr.rel (%p110) target = $region28
    $region27: #{simple_lstm_baseline.1} parent=5 // pred_region
      %s114 = ssub.s32 %s8, 1
      %s115 = smul.u32 8, %s13
      %p116 = scmp.lt.s32.totalorder %s115, 15
      %s117 = scalar_select %p116, %s115, 15
      %s118 = smul.addr %s117, 4
      %s119 = smul.addr %s118, 4
      %s120 = scalar_lea.vmem %s0, %s119
      %p121 = pneg %p34
      %p122 = pneg %p31
      %p123 = pneg %p55
      %p124 = pneg %p52
      %p125 = pneg %p76
      %p126 = pneg %p73
      %s127 = smul.u32 8, %s13
      %p128 = scmp.lt.s32.totalorder %s127, 15
      %s129 = scalar_select %p128, %s127, 15
      %s130 = smul.addr %s129, 4
      %s131 = smul.addr %s130, 4
      %s132 = scalar_lea.vmem %s0, %s131
      %s133 = smul.u32 8, %s13
      %p135 = scmp.eq.s32.totalorder %s13, 0
      // Predicated region
      $region29: #{simple_lstm_baseline.1} parent=27 // pred_check
        %p136 = pneg %p135
      $region30: #{simple_lstm_baseline.1} parent=27 // pred_check_branch
        %138 = sbr.rel (%p136) target = $region32
      $region31: #{simple_lstm_baseline.1} parent=27 // pred_region
        %139 = vst [vmem:[%s2] sm:$0xff] 0.0
        %140 = vst [vmem:[#allocation2] sm:$0xff] 0.0
      $region32: #{simple_lstm_baseline.1} parent=27 // pred_fallthru
        _
      %v141 = vld [vmem:[%s2] sm:$0xff]
      %v142 = vld [vmem:[#allocation2] sm:$0xff]
      %v143 = vld [vmem:[%s132] sm:$0xff]
      %v144 = vld [vmem:[%s132 + $0x8] sm:$0xff]
      %v145 = vunpack.c.l.bf16 %v143
      %v146 = vunpack.c.h.bf16 %v143
      %v147 = vunpack.c.l.bf16 %v144
      %v148 = vunpack.c.h.bf16 %v144
      %v149 = vpack.c.bf16 %v141, %v141
      %v150 = vld [vmem:[%s1] sm:$0xff]
      %v151 = vld [vmem:[%s1 + $0x8] sm:$0xff]
      %v152 = vld [vmem:[%s1 + $0x10] sm:$0xff]
      %v153 = vld [vmem:[%s1 + $0x18] sm:$0xff]
      %v154 = vld [vmem:[%s1 + $0x20] sm:$0xff]
      %v155 = vld [vmem:[%s1 + $0x28] sm:$0xff]
      %v156 = vld [vmem:[%s1 + $0x30] sm:$0xff]
      %v157 = vld [vmem:[%s1 + $0x38] sm:$0xff]
      %v158 = vld [vmem:[%s1 + $0x40] sm:$0xff]
      %v159 = vld [vmem:[%s1 + $0x48] sm:$0xff]
      %v160 = vld [vmem:[%s1 + $0x50] sm:$0xff]
      %v161 = vld [vmem:[%s1 + $0x58] sm:$0xff]
      %v162 = vld [vmem:[%s1 + $0x60] sm:$0xff]
      %v163 = vld [vmem:[%s1 + $0x68] sm:$0xff]
      %v164 = vld [vmem:[%s1 + $0x70] sm:$0xff]
      %v165 = vld [vmem:[%s1 + $0x78] sm:$0xff]
      %v166 = vld [vmem:[%s1 + $0x80] sm:$0xff]
      %v167 = vld [vmem:[%s1 + $0x88] sm:$0xff]
      %v168 = vld [vmem:[%s1 + $0x90] sm:$0xff]
      %v169 = vld [vmem:[%s1 + $0x98] sm:$0xff]
      %v170 = vld [vmem:[%s1 + $0xa0] sm:$0xff]
      %v171 = vld [vmem:[%s1 + $0xa8] sm:$0xff]
      %v172 = vld [vmem:[%s1 + $0xb0] sm:$0xff]
      %v173 = vld [vmem:[%s1 + $0xb8] sm:$0xff]
      %v174 = vld [vmem:[%s1 + $0xc0] sm:$0xff]
      %v175 = vld [vmem:[%s1 + $0xc8] sm:$0xff]
      %v176 = vld [vmem:[%s1 + $0xd0] sm:$0xff]
      %v177 = vld [vmem:[%s1 + $0xd8] sm:$0xff]
      %v178 = vld [vmem:[%s1 + $0xe0] sm:$0xff]
      %v179 = vld [vmem:[%s1 + $0xe8] sm:$0xff]
      %v180 = vld [vmem:[%s1 + $0xf0] sm:$0xff]
      %v181 = vld [vmem:[%s1 + $0xf8] sm:$0xff]
      %v214 = vunpack.c.l.b16 %v150
      %v215 = vunpack.c.h.b16 %v150
      %v216 = vunpack.c.l.b16 %v151
      %v217 = vunpack.c.h.b16 %v151
      %v218 = vunpack.c.l.b16 %v152
      %v219 = vunpack.c.h.b16 %v152
      %v220 = vunpack.c.l.b16 %v153
      %v221 = vunpack.c.h.b16 %v153
      %v222 = vunpack.c.l.b16 %v154
      %v223 = vunpack.c.h.b16 %v154
      %v224 = vunpack.c.l.b16 %v155
      %v225 = vunpack.c.h.b16 %v155
      %v226 = vunpack.c.l.b16 %v156
      %v227 = vunpack.c.h.b16 %v156
      %v228 = vunpack.c.l.b16 %v157
      %v229 = vunpack.c.h.b16 %v157
      %v230 = vunpack.c.l.b16 %v158
      %v231 = vunpack.c.h.b16 %v158
      %v232 = vunpack.c.l.b16 %v159
      %v233 = vunpack.c.h.b16 %v159
      %v234 = vunpack.c.l.b16 %v160
      %v235 = vunpack.c.h.b16 %v160
      %v236 = vunpack.c.l.b16 %v161
      %v237 = vunpack.c.h.b16 %v161
      %v238 = vunpack.c.l.b16 %v162
      %v239 = vunpack.c.h.b16 %v162
      %v240 = vunpack.c.l.b16 %v163
      %v241 = vunpack.c.h.b16 %v163
      %v242 = vunpack.c.l.b16 %v164
      %v243 = vunpack.c.h.b16 %v164
      %v244 = vunpack.c.l.b16 %v165
      %v245 = vunpack.c.h.b16 %v165
      %v246 = vunpack.c.l.b16 %v166
      %v247 = vunpack.c.h.b16 %v166
      %v248 = vunpack.c.l.b16 %v167
      %v249 = vunpack.c.h.b16 %v167
      %v250 = vunpack.c.l.b16 %v168
      %v251 = vunpack.c.h.b16 %v168
      %v252 = vunpack.c.l.b16 %v169
      %v253 = vunpack.c.h.b16 %v169
      %v254 = vunpack.c.l.b16 %v170
      %v255 = vunpack.c.h.b16 %v170
      %v256 = vunpack.c.l.b16 %v171
      %v257 = vunpack.c.h.b16 %v171
      %v258 = vunpack.c.l.b16 %v172
      %v259 = vunpack.c.h.b16 %v172
      %v260 = vunpack.c.l.b16 %v173
      %v261 = vunpack.c.h.b16 %v173
      %v262 = vunpack.c.l.b16 %v174
      %v263 = vunpack.c.h.b16 %v174
      %v264 = vunpack.c.l.b16 %v175
      %v265 = vunpack.c.h.b16 %v175
      %v266 = vunpack.c.l.b16 %v176
      %v267 = vunpack.c.h.b16 %v176
      %v268 = vunpack.c.l.b16 %v177
      %v269 = vunpack.c.h.b16 %v177
      %v270 = vunpack.c.l.b16 %v178
      %v271 = vunpack.c.h.b16 %v178
      %v272 = vunpack.c.l.b16 %v179
      %v273 = vunpack.c.h.b16 %v179
      %v274 = vunpack.c.l.b16 %v180
      %v275 = vunpack.c.h.b16 %v180
      %v276 = vunpack.c.l.b16 %v181
      %v277 = vunpack.c.h.b16 %v181
      %v278 = vpack.c.b16 %v218, %v214
      %v279 = vpack.c.b16 %v219, %v215
      %v280 = vpack.c.b16 %v220, %v216
      %v281 = vpack.c.b16 %v221, %v217
      %v282 = vpack.c.b16 %v226, %v222
      %v283 = vpack.c.b16 %v227, %v223
      %v284 = vpack.c.b16 %v228, %v224
      %v285 = vpack.c.b16 %v229, %v225
      %v286 = vpack.c.b16 %v234, %v230
      %v287 = vpack.c.b16 %v235, %v231
      %v288 = vpack.c.b16 %v236, %v232
      %v289 = vpack.c.b16 %v237, %v233
      %v290 = vpack.c.b16 %v242, %v238
      %v291 = vpack.c.b16 %v243, %v239
      %v292 = vpack.c.b16 %v244, %v240
      %v293 = vpack.c.b16 %v245, %v241
      %v294 = vpack.c.b16 %v250, %v246
      %v295 = vpack.c.b16 %v251, %v247
      %v296 = vpack.c.b16 %v252, %v248
      %v297 = vpack.c.b16 %v253, %v249
      %v298 = vpack.c.b16 %v258, %v254
      %v299 = vpack.c.b16 %v259, %v255
      %v300 = vpack.c.b16 %v260, %v256
      %v301 = vpack.c.b16 %v261, %v257
      %v302 = vpack.c.b16 %v266, %v262
      %v303 = vpack.c.b16 %v267, %v263
      %v304 = vpack.c.b16 %v268, %v264
      %v305 = vpack.c.b16 %v269, %v265
      %v306 = vpack.c.b16 %v274, %v270
      %v307 = vpack.c.b16 %v275, %v271
      %v308 = vpack.c.b16 %v276, %v272
      %v309 = vpack.c.b16 %v277, %v273
      %342 = vmatprep.subr.bf16.mxu0 %v279
      %343 = vmatpush1.bf16.msra.mxu0 %v278
      %344 = vmatprep.subr.bf16.mxu0 %v283
      %345 = vmatpush1.bf16.msra.mxu0 %v282
      %346 = vmatprep.subr.bf16.mxu0 %v287
      %347 = vmatpush1.bf16.msra.mxu0 %v286
      %348 = vmatprep.subr.bf16.mxu0 %v291
      %349 = vmatpush1.bf16.msra.mxu0 %v290
      %350 = vmatprep.subr.bf16.mxu0 %v295
      %351 = vmatpush1.bf16.msra.mxu0 %v294
      %352 = vmatprep.subr.bf16.mxu0 %v299
      %353 = vmatpush1.bf16.msra.mxu0 %v298
      %354 = vmatprep.subr.bf16.mxu0 %v303
      %355 = vmatpush1.bf16.msra.mxu0 %v302
      %356 = vmatprep.subr.bf16.mxu0 %v307
      %357 = vmatpush1.bf16.msra.mxu0 %v306
      %358 = vmatprep.subr.bf16.mxu0 0
      %359 = vmatpush1.bf16.msra.mxu0 0
      %360 = vmatprep.subr.bf16.mxu0 0
      %361 = vmatpush1.bf16.msra.mxu0 0
      %362 = vmatprep.subr.bf16.mxu0 0
      %363 = vmatpush1.bf16.msra.mxu0 0
      %364 = vmatprep.subr.bf16.mxu0 0
      %365 = vmatpush1.bf16.msra.mxu0 0
      %366 = vmatprep.subr.bf16.mxu0 0
      %367 = vmatpush1.bf16.msra.mxu0 0
      %368 = vmatprep.subr.bf16.mxu0 0
      %369 = vmatpush1.bf16.msra.mxu0 0
      %370 = vmatprep.subr.bf16.mxu0 0
      %371 = vmatpush1.bf16.msra.mxu0 0
      %372 = vmatprep.subr.bf16.mxu0 0
      %373 = vmatpush1.bf16.msra.mxu0 0
      %374 = vmatprep.mubr.bf16.mxu0 0
      %375 = vmatmul.mubr.bf16.gmra.mrb[0].mxu0 %v149
      %v376 = vpop.f32.mrb[0].mxu0
      %v377 = vadd.f32 0.0, %v376
      %v378 = vpop.f32.mrb[0].mxu0
      %v379 = vadd.f32 0.0, %v378
      %v380 = vpop.f32.mrb[0].mxu0
      %v381 = vpop.f32.mrb[0].mxu0
      %382 = vdwg.mxu0
      %383 = vmatprep.subr.bf16.mxu0 %v281
      %384 = vmatpush1.bf16.msra.mxu0 %v280
      %385 = vmatprep.subr.bf16.mxu0 %v285
      %386 = vmatpush1.bf16.msra.mxu0 %v284
      %387 = vmatprep.subr.bf16.mxu0 %v289
      %388 = vmatpush1.bf16.msra.mxu0 %v288
      %389 = vmatprep.subr.bf16.mxu0 %v293
      %390 = vmatpush1.bf16.msra.mxu0 %v292
      %391 = vmatprep.subr.bf16.mxu0 %v297
      %392 = vmatpush1.bf16.msra.mxu0 %v296
      %393 = vmatprep.subr.bf16.mxu0 %v301
      %394 = vmatpush1.bf16.msra.mxu0 %v300
      %395 = vmatprep.subr.bf16.mxu0 %v305
      %396 = vmatpush1.bf16.msra.mxu0 %v304
      %397 = vmatprep.subr.bf16.mxu0 %v309
      %398 = vmatpush1.bf16.msra.mxu0 %v308
      %399 = vmatprep.subr.bf16.mxu0 0
      %400 = vmatpush1.bf16.msra.mxu0 0
      %401 = vmatprep.subr.bf16.mxu0 0
      %402 = vmatpush1.bf16.msra.mxu0 0
      %403 = vmatprep.subr.bf16.mxu0 0
      %404 = vmatpush1.bf16.msra.mxu0 0
      %405 = vmatprep.subr.bf16.mxu0 0
      %406 = vmatpush1.bf16.msra.mxu0 0
      %407 = vmatprep.subr.bf16.mxu0 0
      %408 = vmatpush1.bf16.msra.mxu0 0
      %409 = vmatprep.subr.bf16.mxu0 0
      %410 = vmatpush1.bf16.msra.mxu0 0
      %411 = vmatprep.subr.bf16.mxu0 0
      %412 = vmatpush1.bf16.msra.mxu0 0
      %413 = vmatprep.subr.bf16.mxu0 0
      %414 = vmatpush1.bf16.msra.mxu0 0
      %415 = vmatprep.mubr.bf16.mxu0 0
      %416 = vmatmul.mubr.bf16.gmra.mrb[0].mxu0 %v149
      %v417 = vpop.f32.mrb[0].mxu0
      %v418 = vadd.f32 0.0, %v417
      %v419 = vpop.f32.mrb[0].mxu0
      %v420 = vadd.f32 0.0, %v419
      %v421 = vpop.f32.mrb[0].mxu0
      %v422 = vpop.f32.mrb[0].mxu0
      %423 = vdwg.mxu0
      %v424 = vadd.f32 %v145, %v377
      %v425 = vadd.f32 %v146, %v379
      %v426 = vadd.f32 %v147, %v418
      %v427 = vadd.f32 %v148, %v420
      %v428 = vxor.u32 %v424, 2147483648
      %v429 = vmul.f32 %v428, 1.442695
      %v430 = vpow.pop %v429
      %v431 = vadd.f32 %v430, 1.0
      %v432 = vrcp.pop %v431
      %v433 = vmul.f32 1.0, %v432
      %v434 = vxor.u32 %v425, 2147483648
      %v435 = vmul.f32 %v434, 1.442695
      %v436 = vpow.pop %v435
      %v437 = vadd.f32 %v436, 1.0
      %v438 = vrcp.pop %v437
      %v439 = vmul.f32 1.0, %v438
      %v440 = vtanh.pop %v426
      %v441 = vxor.u32 %v427, 2147483648
      %v442 = vmul.f32 %v441, 1.442695
      %v443 = vpow.pop %v442
      %v444 = vadd.f32 %v443, 1.0
      %v445 = vrcp.pop %v444
      %v446 = vmul.f32 1.0, %v445
      %v447 = vmul.f32 %v439, %v142
      %v448 = vmul.f32 %v433, %v440
      %v449 = vadd.f32 %v447, %v448
      %v450 = vtanh.pop %v449
      %v451 = vmul.f32 %v446, %v450
      %s452 = scalar_lea.vmem %s132, 16
      %v453 = vld [vmem:[%s452] sm:$0xff]
      %v454 = vld [vmem:[%s452 + $0x8] sm:$0xff]
      %v455 = vunpack.c.l.bf16 %v453
      %v456 = vunpack.c.h.bf16 %v453
      %v457 = vunpack.c.l.bf16 %v454
      %v458 = vunpack.c.h.bf16 %v454
      %v459 = vpack.c.bf16 %v451, %v451
      %460 = vmatprep.subr.bf16.mxu0 %v279
      %461 = vmatpush1.bf16.msra.mxu0 %v278
      %462 = vmatprep.subr.bf16.mxu0 %v283
      %463 = vmatpush1.bf16.msra.mxu0 %v282
      %464 = vmatprep.subr.bf16.mxu0 %v287
      %465 = vmatpush1.bf16.msra.mxu0 %v286
      %466 = vmatprep.subr.bf16.mxu0 %v291
      %467 = vmatpush1.bf16.msra.mxu0 %v290
      %468 = vmatprep.subr.bf16.mxu0 %v295
      %469 = vmatpush1.bf16.msra.mxu0 %v294
      %470 = vmatprep.subr.bf16.mxu0 %v299
      %471 = vmatpush1.bf16.msra.mxu0 %v298
      %472 = vmatprep.subr.bf16.mxu0 %v303
      %473 = vmatpush1.bf16.msra.mxu0 %v302
      %474 = vmatprep.subr.bf16.mxu0 %v307
      %475 = vmatpush1.bf16.msra.mxu0 %v306
      %476 = vmatprep.subr.bf16.mxu0 0
      %477 = vmatpush1.bf16.msra.mxu0 0
      %478 = vmatprep.subr.bf16.mxu0 0
      %479 = vmatpush1.bf16.msra.mxu0 0
      %480 = vmatprep.subr.bf16.mxu0 0
      %481 = vmatpush1.bf16.msra.mxu0 0
      %482 = vmatprep.subr.bf16.mxu0 0
      %483 = vmatpush1.bf16.msra.mxu0 0
      %484 = vmatprep.subr.bf16.mxu0 0
      %485 = vmatpush1.bf16.msra.mxu0 0
      %486 = vmatprep.subr.bf16.mxu0 0
      %487 = vmatpush1.bf16.msra.mxu0 0
      %488 = vmatprep.subr.bf16.mxu0 0
      %489 = vmatpush1.bf16.msra.mxu0 0
      %490 = vmatprep.subr.bf16.mxu0 0
      %491 = vmatpush1.bf16.msra.mxu0 0
      %492 = vmatprep.mubr.bf16.mxu0 0
      %493 = vmatmul.mubr.bf16.gmra.mrb[0].mxu0 %v459
      %v494 = vpop.f32.mrb[0].mxu0
      %v495 = vadd.f32 0.0, %v494
      %v496 = vpop.f32.mrb[0].mxu0
      %v497 = vadd.f32 0.0, %v496
      %v498 = vpop.f32.mrb[0].mxu0
      %v499 = vpop.f32.mrb[0].mxu0
      %500 = vdwg.mxu0
      %501 = vmatprep.subr.bf16.mxu0 %v281
      %502 = vmatpush1.bf16.msra.mxu0 %v280
      %503 = vmatprep.subr.bf16.mxu0 %v285
      %504 = vmatpush1.bf16.msra.mxu0 %v284
      %505 = vmatprep.subr.bf16.mxu0 %v289
      %506 = vmatpush1.bf16.msra.mxu0 %v288
      %507 = vmatprep.subr.bf16.mxu0 %v293
      %508 = vmatpush1.bf16.msra.mxu0 %v292
      %509 = vmatprep.subr.bf16.mxu0 %v297
      %510 = vmatpush1.bf16.msra.mxu0 %v296
      %511 = vmatprep.subr.bf16.mxu0 %v301
      %512 = vmatpush1.bf16.msra.mxu0 %v300
      %513 = vmatprep.subr.bf16.mxu0 %v305
      %514 = vmatpush1.bf16.msra.mxu0 %v304
      %515 = vmatprep.subr.bf16.mxu0 %v309
      %516 = vmatpush1.bf16.msra.mxu0 %v308
      %517 = vmatprep.subr.bf16.mxu0 0
      %518 = vmatpush1.bf16.msra.mxu0 0
      %519 = vmatprep.subr.bf16.mxu0 0
      %520 = vmatpush1.bf16.msra.mxu0 0
      %521 = vmatprep.subr.bf16.mxu0 0
      %522 = vmatpush1.bf16.msra.mxu0 0
      %523 = vmatprep.subr.bf16.mxu0 0
      %524 = vmatpush1.bf16.msra.mxu0 0
      %525 = vmatprep.subr.bf16.mxu0 0
      %526 = vmatpush1.bf16.msra.mxu0 0
      %527 = vmatprep.subr.bf16.mxu0 0
      %528 = vmatpush1.bf16.msra.mxu0 0
      %529 = vmatprep.subr.bf16.mxu0 0
      %530 = vmatpush1.bf16.msra.mxu0 0
      %531 = vmatprep.subr.bf16.mxu0 0
      %532 = vmatpush1.bf16.msra.mxu0 0
      %533 = vmatprep.mubr.bf16.mxu0 0
      %534 = vmatmul.mubr.bf16.gmra.mrb[0].mxu0 %v459
      %v535 = vpop.f32.mrb[0].mxu0
      %v536 = vadd.f32 0.0, %v535
      %v537 = vpop.f32.mrb[0].mxu0
      %v538 = vadd.f32 0.0, %v537
      %v539 = vpop.f32.mrb[0].mxu0
      %v540 = vpop.f32.mrb[0].mxu0
      %541 = vdwg.mxu0
      %v542 = vadd.f32 %v455, %v495
      %v543 = vadd.f32 %v456, %v497
      %v544 = vadd.f32 %v457, %v536
      %v545 = vadd.f32 %v458, %v538
      %v546 = vxor.u32 %v542, 2147483648
      %v547 = vmul.f32 %v546, 1.442695
      %v548 = vpow.pop %v547
      %v549 = vadd.f32 %v548, 1.0
      %v550 = vrcp.pop %v549
      %v551 = vmul.f32 1.0, %v550
      %v552 = vxor.u32 %v543, 2147483648
      %v553 = vmul.f32 %v552, 1.442695
      %v554 = vpow.pop %v553
      %v555 = vadd.f32 %v554, 1.0
      %v556 = vrcp.pop %v555
      %v557 = vmul.f32 1.0, %v556
      %v558 = vtanh.pop %v544
      %v559 = vxor.u32 %v545, 2147483648
      %v560 = vmul.f32 %v559, 1.442695
      %v561 = vpow.pop %v560
      %v562 = vadd.f32 %v561, 1.0
      %v563 = vrcp.pop %v562
      %v564 = vmul.f32 1.0, %v563
      %v565 = vmul.f32 %v557, %v449
      %v566 = vmul.f32 %v551, %v558
      %v567 = vadd.f32 %v565, %v566
      %v568 = vtanh.pop %v567
      %v569 = vmul.f32 %v564, %v568
      %s570 = scalar_lea.vmem %s132, 32
      %v571 = vld [vmem:[%s570] sm:$0xff]
      %v572 = vld [vmem:[%s570 + $0x8] sm:$0xff]
      %v573 = vunpack.c.l.bf16 %v571
      %v574 = vunpack.c.h.bf16 %v571
      %v575 = vunpack.c.l.bf16 %v572
      %v576 = vunpack.c.h.bf16 %v572
      %v577 = vpack.c.bf16 %v569, %v569
      %578 = vmatprep.subr.bf16.mxu0 %v279
      %579 = vmatpush1.bf16.msra.mxu0 %v278
      %580 = vmatprep.subr.bf16.mxu0 %v283
      %581 = vmatpush1.bf16.msra.mxu0 %v282
      %582 = vmatprep.subr.bf16.mxu0 %v287
      %583 = vmatpush1.bf16.msra.mxu0 %v286
      %584 = vmatprep.subr.bf16.mxu0 %v291
      %585 = vmatpush1.bf16.msra.mxu0 %v290
      %586 = vmatprep.subr.bf16.mxu0 %v295
      %587 = vmatpush1.bf16.msra.mxu0 %v294
      %588 = vmatprep.subr.bf16.mxu0 %v299
      %589 = vmatpush1.bf16.msra.mxu0 %v298
      %590 = vmatprep.subr.bf16.mxu0 %v303
      %591 = vmatpush1.bf16.msra.mxu0 %v302
      %592 = vmatprep.subr.bf16.mxu0 %v307
      %593 = vmatpush1.bf16.msra.mxu0 %v306
      %594 = vmatprep.subr.bf16.mxu0 0
      %595 = vmatpush1.bf16.msra.mxu0 0
      %596 = vmatprep.subr.bf16.mxu0 0
      %597 = vmatpush1.bf16.msra.mxu0 0
      %598 = vmatprep.subr.bf16.mxu0 0
      %599 = vmatpush1.bf16.msra.mxu0 0
      %600 = vmatprep.subr.bf16.mxu0 0
      %601 = vmatpush1.bf16.msra.mxu0 0
      %602 = vmatprep.subr.bf16.mxu0 0
      %603 = vmatpush1.bf16.msra.mxu0 0
      %604 = vmatprep.subr.bf16.mxu0 0
      %605 = vmatpush1.bf16.msra.mxu0 0
      %606 = vmatprep.subr.bf16.mxu0 0
      %607 = vmatpush1.bf16.msra.mxu0 0
      %608 = vmatprep.subr.bf16.mxu0 0
      %609 = vmatpush1.bf16.msra.mxu0 0
      %610 = vmatprep.mubr.bf16.mxu0 0
      %611 = vmatmul.mubr.bf16.gmra.mrb[0].mxu0 %v577
      %v612 = vpop.f32.mrb[0].mxu0
      %v613 = vadd.f32 0.0, %v612
      %v614 = vpop.f32.mrb[0].mxu0
      %v615 = vadd.f32 0.0, %v614
      %v616 = vpop.f32.mrb[0].mxu0
      %v617 = vpop.f32.mrb[0].mxu0
      %618 = vdwg.mxu0
      %619 = vmatprep.subr.bf16.mxu0 %v281
      %620 = vmatpush1.bf16.msra.mxu0 %v280
      %621 = vmatprep.subr.bf16.mxu0 %v285
      %622 = vmatpush1.bf16.msra.mxu0 %v284
      %623 = vmatprep.subr.bf16.mxu0 %v289
      %624 = vmatpush1.bf16.msra.mxu0 %v288
      %625 = vmatprep.subr.bf16.mxu0 %v293
      %626 = vmatpush1.bf16.msra.mxu0 %v292
      %627 = vmatprep.subr.bf16.mxu0 %v297
      %628 = vmatpush1.bf16.msra.mxu0 %v296
      %629 = vmatprep.subr.bf16.mxu0 %v301
      %630 = vmatpush1.bf16.msra.mxu0 %v300
      %631 = vmatprep.subr.bf16.mxu0 %v305
      %632 = vmatpush1.bf16.msra.mxu0 %v304
      %633 = vmatprep.subr.bf16.mxu0 %v309
      %634 = vmatpush1.bf16.msra.mxu0 %v308
      %635 = vmatprep.subr.bf16.mxu0 0
      %636 = vmatpush1.bf16.msra.mxu0 0
      %637 = vmatprep.subr.bf16.mxu0 0
      %638 = vmatpush1.bf16.msra.mxu0 0
      %639 = vmatprep.subr.bf16.mxu0 0
      %640 = vmatpush1.bf16.msra.mxu0 0
      %641 = vmatprep.subr.bf16.mxu0 0
      %642 = vmatpush1.bf16.msra.mxu0 0
      %643 = vmatprep.subr.bf16.mxu0 0
      %644 = vmatpush1.bf16.msra.mxu0 0
      %645 = vmatprep.subr.bf16.mxu0 0
      %646 = vmatpush1.bf16.msra.mxu0 0
      %647 = vmatprep.subr.bf16.mxu0 0
      %648 = vmatpush1.bf16.msra.mxu0 0
      %649 = vmatprep.subr.bf16.mxu0 0
      %650 = vmatpush1.bf16.msra.mxu0 0
      %651 = vmatprep.mubr.bf16.mxu0 0
      %652 = vmatmul.mubr.bf16.gmra.mrb[0].mxu0 %v577
      %v653 = vpop.f32.mrb[0].mxu0
      %v654 = vadd.f32 0.0, %v653
      %v655 = vpop.f32.mrb[0].mxu0
      %v656 = vadd.f32 0.0, %v655
      %v657 = vpop.f32.mrb[0].mxu0
      %v658 = vpop.f32.mrb[0].mxu0
      %659 = vdwg.mxu0
      %v660 = vadd.f32 %v573, %v613
      %v661 = vadd.f32 %v574, %v615
      %v662 = vadd.f32 %v575, %v654
      %v663 = vadd.f32 %v576, %v656
      %v664 = vxor.u32 %v660, 2147483648
      %v665 = vmul.f32 %v664, 1.442695
      %v666 = vpow.pop %v665
      %v667 = vadd.f32 %v666, 1.0
      %v668 = vrcp.pop %v667
      %v669 = vmul.f32 1.0, %v668
      %v670 = vxor.u32 %v661, 2147483648
      %v671 = vmul.f32 %v670, 1.442695
      %v672 = vpow.pop %v671
      %v673 = vadd.f32 %v672, 1.0
      %v674 = vrcp.pop %v673
      %v675 = vmul.f32 1.0, %v674
      %v676 = vtanh.pop %v662
      %v677 = vxor.u32 %v663, 2147483648
      %v678 = vmul.f32 %v677, 1.442695
      %v679 = vpow.pop %v678
      %v680 = vadd.f32 %v679, 1.0
      %v681 = vrcp.pop %v680
      %v682 = vmul.f32 1.0, %v681
      %v683 = vmul.f32 %v675, %v567
      %v684 = vmul.f32 %v669, %v676
      %v685 = vadd.f32 %v683, %v684
      %v686 = vtanh.pop %v685
      %v687 = vmul.f32 %v682, %v686
      %s688 = scalar_lea.vmem %s132, 48
      %v689 = vld [vmem:[%s688] sm:$0xff]
      %v690 = vld [vmem:[%s688 + $0x8] sm:$0xff]
      %v691 = vunpack.c.l.bf16 %v689
      %v692 = vunpack.c.h.bf16 %v689
      %v693 = vunpack.c.l.bf16 %v690
      %v694 = vunpack.c.h.bf16 %v690
      %v695 = vpack.c.bf16 %v687, %v687
      %696 = vmatprep.subr.bf16.mxu0 %v279
      %697 = vmatpush1.bf16.msra.mxu0 %v278
      %698 = vmatprep.subr.bf16.mxu0 %v283
      %699 = vmatpush1.bf16.msra.mxu0 %v282
      %700 = vmatprep.subr.bf16.mxu0 %v287
      %701 = vmatpush1.bf16.msra.mxu0 %v286
      %702 = vmatprep.subr.bf16.mxu0 %v291
      %703 = vmatpush1.bf16.msra.mxu0 %v290
      %704 = vmatprep.subr.bf16.mxu0 %v295
      %705 = vmatpush1.bf16.msra.mxu0 %v294
      %706 = vmatprep.subr.bf16.mxu0 %v299
      %707 = vmatpush1.bf16.msra.mxu0 %v298
      %708 = vmatprep.subr.bf16.mxu0 %v303
      %709 = vmatpush1.bf16.msra.mxu0 %v302
      %710 = vmatprep.subr.bf16.mxu0 %v307
      %711 = vmatpush1.bf16.msra.mxu0 %v306
      %712 = vmatprep.subr.bf16.mxu0 0
      %713 = vmatpush1.bf16.msra.mxu0 0
      %714 = vmatprep.subr.bf16.mxu0 0
      %715 = vmatpush1.bf16.msra.mxu0 0
      %716 = vmatprep.subr.bf16.mxu0 0
      %717 = vmatpush1.bf16.msra.mxu0 0
      %718 = vmatprep.subr.bf16.mxu0 0
      %719 = vmatpush1.bf16.msra.mxu0 0
      %720 = vmatprep.subr.bf16.mxu0 0
      %721 = vmatpush1.bf16.msra.mxu0 0
      %722 = vmatprep.subr.bf16.mxu0 0
      %723 = vmatpush1.bf16.msra.mxu0 0
      %724 = vmatprep.subr.bf16.mxu0 0
      %725 = vmatpush1.bf16.msra.mxu0 0
      %726 = vmatprep.subr.bf16.mxu0 0
      %727 = vmatpush1.bf16.msra.mxu0 0
      %728 = vmatprep.mubr.bf16.mxu0 0
      %729 = vmatmul.mubr.bf16.gmra.mrb[0].mxu0 %v695
      %v730 = vpop.f32.mrb[0].mxu0
      %v731 = vadd.f32 0.0, %v730
      %v732 = vpop.f32.mrb[0].mxu0
      %v733 = vadd.f32 0.0, %v732
      %v734 = vpop.f32.mrb[0].mxu0
      %v735 = vpop.f32.mrb[0].mxu0
      %736 = vdwg.mxu0
      %737 = vmatprep.subr.bf16.mxu0 %v281
      %738 = vmatpush1.bf16.msra.mxu0 %v280
      %739 = vmatprep.subr.bf16.mxu0 %v285
      %740 = vmatpush1.bf16.msra.mxu0 %v284
      %741 = vmatprep.subr.bf16.mxu0 %v289
      %742 = vmatpush1.bf16.msra.mxu0 %v288
      %743 = vmatprep.subr.bf16.mxu0 %v293
      %744 = vmatpush1.bf16.msra.mxu0 %v292
      %745 = vmatprep.subr.bf16.mxu0 %v297
      %746 = vmatpush1.bf16.msra.mxu0 %v296
      %747 = vmatprep.subr.bf16.mxu0 %v301
      %748 = vmatpush1.bf16.msra.mxu0 %v300
      %749 = vmatprep.subr.bf16.mxu0 %v305
      %750 = vmatpush1.bf16.msra.mxu0 %v304
      %751 = vmatprep.subr.bf16.mxu0 %v309
      %752 = vmatpush1.bf16.msra.mxu0 %v308
      %753 = vmatprep.subr.bf16.mxu0 0
      %754 = vmatpush1.bf16.msra.mxu0 0
      %755 = vmatprep.subr.bf16.mxu0 0
      %756 = vmatpush1.bf16.msra.mxu0 0
      %757 = vmatprep.subr.bf16.mxu0 0
      %758 = vmatpush1.bf16.msra.mxu0 0
      %759 = vmatprep.subr.bf16.mxu0 0
      %760 = vmatpush1.bf16.msra.mxu0 0
      %761 = vmatprep.subr.bf16.mxu0 0
      %762 = vmatpush1.bf16.msra.mxu0 0
      %763 = vmatprep.subr.bf16.mxu0 0
      %764 = vmatpush1.bf16.msra.mxu0 0
      %765 = vmatprep.subr.bf16.mxu0 0
      %766 = vmatpush1.bf16.msra.mxu0 0
      %767 = vmatprep.subr.bf16.mxu0 0
      %768 = vmatpush1.bf16.msra.mxu0 0
      %769 = vmatprep.mubr.bf16.mxu0 0
      %770 = vmatmul.mubr.bf16.gmra.mrb[0].mxu0 %v695
      %v771 = vpop.f32.mrb[0].mxu0
      %v772 = vadd.f32 0.0, %v771
      %v773 = vpop.f32.mrb[0].mxu0
      %v774 = vadd.f32 0.0, %v773
      %v775 = vpop.f32.mrb[0].mxu0
      %v776 = vpop.f32.mrb[0].mxu0
      %777 = vdwg.mxu0
      %v778 = vadd.f32 %v691, %v731
      %v779 = vadd.f32 %v692, %v733
      %v780 = vadd.f32 %v693, %v772
      %v781 = vadd.f32 %v694, %v774
      %v782 = vxor.u32 %v778, 2147483648
      %v783 = vmul.f32 %v782, 1.442695
      %v784 = vpow.pop %v783
      %v785 = vadd.f32 %v784, 1.0
      %v786 = vrcp.pop %v785
      %v787 = vmul.f32 1.0, %v786
      %v788 = vxor.u32 %v779, 2147483648
      %v789 = vmul.f32 %v788, 1.442695
      %v790 = vpow.pop %v789
      %v791 = vadd.f32 %v790, 1.0
      %v792 = vrcp.pop %v791
      %v793 = vmul.f32 1.0, %v792
      %v794 = vtanh.pop %v780
      %v795 = vxor.u32 %v781, 2147483648
      %v796 = vmul.f32 %v795, 1.442695
      %v797 = vpow.pop %v796
      %v798 = vadd.f32 %v797, 1.0
      %v799 = vrcp.pop %v798
      %v800 = vmul.f32 1.0, %v799
      %v801 = vmul.f32 %v793, %v685
      %v802 = vmul.f32 %v787, %v794
      %v803 = vadd.f32 %v801, %v802
      %v804 = vtanh.pop %v803
      %v805 = vmul.f32 %v800, %v804
      %s806 = scalar_lea.vmem %s132, 64
      %v807 = vld [vmem:[%s806] sm:$0xff]
      %v808 = vld [vmem:[%s806 + $0x8] sm:$0xff]
      %v809 = vunpack.c.l.bf16 %v807
      %v810 = vunpack.c.h.bf16 %v807
      %v811 = vunpack.c.l.bf16 %v808
      %v812 = vunpack.c.h.bf16 %v808
      %v813 = vpack.c.bf16 %v805, %v805
      %814 = vmatprep.subr.bf16.mxu0 %v279
      %815 = vmatpush1.bf16.msra.mxu0 %v278
      %816 = vmatprep.subr.bf16.mxu0 %v283
      %817 = vmatpush1.bf16.msra.mxu0 %v282
      %818 = vmatprep.subr.bf16.mxu0 %v287
      %819 = vmatpush1.bf16.msra.mxu0 %v286
      %820 = vmatprep.subr.bf16.mxu0 %v291
      %821 = vmatpush1.bf16.msra.mxu0 %v290
      %822 = vmatprep.subr.bf16.mxu0 %v295
      %823 = vmatpush1.bf16.msra.mxu0 %v294
      %824 = vmatprep.subr.bf16.mxu0 %v299
      %825 = vmatpush1.bf16.msra.mxu0 %v298
      %826 = vmatprep.subr.bf16.mxu0 %v303
      %827 = vmatpush1.bf16.msra.mxu0 %v302
      %828 = vmatprep.subr.bf16.mxu0 %v307
      %829 = vmatpush1.bf16.msra.mxu0 %v306
      %830 = vmatprep.subr.bf16.mxu0 0
      %831 = vmatpush1.bf16.msra.mxu0 0
      %832 = vmatprep.subr.bf16.mxu0 0
      %833 = vmatpush1.bf16.msra.mxu0 0
      %834 = vmatprep.subr.bf16.mxu0 0
      %835 = vmatpush1.bf16.msra.mxu0 0
      %836 = vmatprep.subr.bf16.mxu0 0
      %837 = vmatpush1.bf16.msra.mxu0 0
      %838 = vmatprep.subr.bf16.mxu0 0
      %839 = vmatpush1.bf16.msra.mxu0 0
      %840 = vmatprep.subr.bf16.mxu0 0
      %841 = vmatpush1.bf16.msra.mxu0 0
      %842 = vmatprep.subr.bf16.mxu0 0
      %843 = vmatpush1.bf16.msra.mxu0 0
      %844 = vmatprep.subr.bf16.mxu0 0
      %845 = vmatpush1.bf16.msra.mxu0 0
      %846 = vmatprep.mubr.bf16.mxu0 0
      %847 = vmatmul.mubr.bf16.gmra.mrb[0].mxu0 %v813
      %v848 = vpop.f32.mrb[0].mxu0
      %v849 = vadd.f32 0.0, %v848
      %v850 = vpop.f32.mrb[0].mxu0
      %v851 = vadd.f32 0.0, %v850
      %v852 = vpop.f32.mrb[0].mxu0
      %v853 = vpop.f32.mrb[0].mxu0
      %854 = vdwg.mxu0
      %855 = vmatprep.subr.bf16.mxu0 %v281
      %856 = vmatpush1.bf16.msra.mxu0 %v280
      %857 = vmatprep.subr.bf16.mxu0 %v285
      %858 = vmatpush1.bf16.msra.mxu0 %v284
      %859 = vmatprep.subr.bf16.mxu0 %v289
      %860 = vmatpush1.bf16.msra.mxu0 %v288
      %861 = vmatprep.subr.bf16.mxu0 %v293
      %862 = vmatpush1.bf16.msra.mxu0 %v292
      %863 = vmatprep.subr.bf16.mxu0 %v297
      %864 = vmatpush1.bf16.msra.mxu0 %v296
      %865 = vmatprep.subr.bf16.mxu0 %v301
      %866 = vmatpush1.bf16.msra.mxu0 %v300
      %867 = vmatprep.subr.bf16.mxu0 %v305
      %868 = vmatpush1.bf16.msra.mxu0 %v304
      %869 = vmatprep.subr.bf16.mxu0 %v309
      %870 = vmatpush1.bf16.msra.mxu0 %v308
      %871 = vmatprep.subr.bf16.mxu0 0
      %872 = vmatpush1.bf16.msra.mxu0 0
      %873 = vmatprep.subr.bf16.mxu0 0
      %874 = vmatpush1.bf16.msra.mxu0 0
      %875 = vmatprep.subr.bf16.mxu0 0
      %876 = vmatpush1.bf16.msra.mxu0 0
      %877 = vmatprep.subr.bf16.mxu0 0
      %878 = vmatpush1.bf16.msra.mxu0 0
      %879 = vmatprep.subr.bf16.mxu0 0
      %880 = vmatpush1.bf16.msra.mxu0 0
      %881 = vmatprep.subr.bf16.mxu0 0
      %882 = vmatpush1.bf16.msra.mxu0 0
      %883 = vmatprep.subr.bf16.mxu0 0
      %884 = vmatpush1.bf16.msra.mxu0 0
      %885 = vmatprep.subr.bf16.mxu0 0
      %886 = vmatpush1.bf16.msra.mxu0 0
      %887 = vmatprep.mubr.bf16.mxu0 0
      %888 = vmatmul.mubr.bf16.gmra.mrb[0].mxu0 %v813
      %v889 = vpop.f32.mrb[0].mxu0
      %v890 = vadd.f32 0.0, %v889
      %v891 = vpop.f32.mrb[0].mxu0
      %v892 = vadd.f32 0.0, %v891
      %v893 = vpop.f32.mrb[0].mxu0
      %v894 = vpop.f32.mrb[0].mxu0
      %895 = vdwg.mxu0
      %v896 = vadd.f32 %v809, %v849
      %v897 = vadd.f32 %v810, %v851
      %v898 = vadd.f32 %v811, %v890
      %v899 = vadd.f32 %v812, %v892
      %v900 = vxor.u32 %v896, 2147483648
      %v901 = vmul.f32 %v900, 1.442695
      %v902 = vpow.pop %v901
      %v903 = vadd.f32 %v902, 1.0
      %v904 = vrcp.pop %v903
      %v905 = vmul.f32 1.0, %v904
      %v906 = vxor.u32 %v897, 2147483648
      %v907 = vmul.f32 %v906, 1.442695
      %v908 = vpow.pop %v907
      %v909 = vadd.f32 %v908, 1.0
      %v910 = vrcp.pop %v909
      %v911 = vmul.f32 1.0, %v910
      %v912 = vtanh.pop %v898
      %v913 = vxor.u32 %v899, 2147483648
      %v914 = vmul.f32 %v913, 1.442695
      %v915 = vpow.pop %v914
      %v916 = vadd.f32 %v915, 1.0
      %v917 = vrcp.pop %v916
      %v918 = vmul.f32 1.0, %v917
      %v919 = vmul.f32 %v911, %v803
      %v920 = vmul.f32 %v905, %v912
      %v921 = vadd.f32 %v919, %v920
      %v922 = vtanh.pop %v921
      %v923 = vmul.f32 %v918, %v922
      %s924 = scalar_lea.vmem %s132, 80
      %v925 = vld [vmem:[%s924] sm:$0xff]
      %v926 = vld [vmem:[%s924 + $0x8] sm:$0xff]
      %v927 = vunpack.c.l.bf16 %v925
      %v928 = vunpack.c.h.bf16 %v925
      %v929 = vunpack.c.l.bf16 %v926
      %v930 = vunpack.c.h.bf16 %v926
      %v931 = vpack.c.bf16 %v923, %v923
      %932 = vmatprep.subr.bf16.mxu0 %v279
      %933 = vmatpush1.bf16.msra.mxu0 %v278
      %934 = vmatprep.subr.bf16.mxu0 %v283
      %935 = vmatpush1.bf16.msra.mxu0 %v282
      %936 = vmatprep.subr.bf16.mxu0 %v287
      %937 = vmatpush1.bf16.msra.mxu0 %v286
      %938 = vmatprep.subr.bf16.mxu0 %v291
      %939 = vmatpush1.bf16.msra.mxu0 %v290
      %940 = vmatprep.subr.bf16.mxu0 %v295
      %941 = vmatpush1.bf16.msra.mxu0 %v294
      %942 = vmatprep.subr.bf16.mxu0 %v299
      %943 = vmatpush1.bf16.msra.mxu0 %v298
      %944 = vmatprep.subr.bf16.mxu0 %v303
      %945 = vmatpush1.bf16.msra.mxu0 %v302
      %946 = vmatprep.subr.bf16.mxu0 %v307
      %947 = vmatpush1.bf16.msra.mxu0 %v306
      %948 = vmatprep.subr.bf16.mxu0 0
      %949 = vmatpush1.bf16.msra.mxu0 0
      %950 = vmatprep.subr.bf16.mxu0 0
      %951 = vmatpush1.bf16.msra.mxu0 0
      %952 = vmatprep.subr.bf16.mxu0 0
      %953 = vmatpush1.bf16.msra.mxu0 0
      %954 = vmatprep.subr.bf16.mxu0 0
      %955 = vmatpush1.bf16.msra.mxu0 0
      %956 = vmatprep.subr.bf16.mxu0 0
      %957 = vmatpush1.bf16.msra.mxu0 0
      %958 = vmatprep.subr.bf16.mxu0 0
      %959 = vmatpush1.bf16.msra.mxu0 0
      %960 = vmatprep.subr.bf16.mxu0 0
      %961 = vmatpush1.bf16.msra.mxu0 0
      %962 = vmatprep.subr.bf16.mxu0 0
      %963 = vmatpush1.bf16.msra.mxu0 0
      %964 = vmatprep.mubr.bf16.mxu0 0
      %965 = vmatmul.mubr.bf16.gmra.mrb[0].mxu0 %v931
      %v966 = vpop.f32.mrb[0].mxu0
      %v967 = vadd.f32 0.0, %v966
      %v968 = vpop.f32.mrb[0].mxu0
      %v969 = vadd.f32 0.0, %v968
      %v970 = vpop.f32.mrb[0].mxu0
      %v971 = vpop.f32.mrb[0].mxu0
      %972 = vdwg.mxu0
      %973 = vmatprep.subr.bf16.mxu0 %v281
      %974 = vmatpush1.bf16.msra.mxu0 %v280
      %975 = vmatprep.subr.bf16.mxu0 %v285
      %976 = vmatpush1.bf16.msra.mxu0 %v284
      %977 = vmatprep.subr.bf16.mxu0 %v289
      %978 = vmatpush1.bf16.msra.mxu0 %v288
      %979 = vmatprep.subr.bf16.mxu0 %v293
      %980 = vmatpush1.bf16.msra.mxu0 %v292
      %981 = vmatprep.subr.bf16.mxu0 %v297
      %982 = vmatpush1.bf16.msra.mxu0 %v296
      %983 = vmatprep.subr.bf16.mxu0 %v301
      %984 = vmatpush1.bf16.msra.mxu0 %v300
      %985 = vmatprep.subr.bf16.mxu0 %v305
      %986 = vmatpush1.bf16.msra.mxu0 %v304
      %987 = vmatprep.subr.bf16.mxu0 %v309
      %988 = vmatpush1.bf16.msra.mxu0 %v308
      %989 = vmatprep.subr.bf16.mxu0 0
      %990 = vmatpush1.bf16.msra.mxu0 0
      %991 = vmatprep.subr.bf16.mxu0 0
      %992 = vmatpush1.bf16.msra.mxu0 0
      %993 = vmatprep.subr.bf16.mxu0 0
      %994 = vmatpush1.bf16.msra.mxu0 0
      %995 = vmatprep.subr.bf16.mxu0 0
      %996 = vmatpush1.bf16.msra.mxu0 0
      %997 = vmatprep.subr.bf16.mxu0 0
      %998 = vmatpush1.bf16.msra.mxu0 0
      %999 = vmatprep.subr.bf16.mxu0 0
      %1000 = vmatpush1.bf16.msra.mxu0 0
      %1001 = vmatprep.subr.bf16.mxu0 0
      %1002 = vmatpush1.bf16.msra.mxu0 0
      %1003 = vmatprep.subr.bf16.mxu0 0
      %1004 = vmatpush1.bf16.msra.mxu0 0
      %1005 = vmatprep.mubr.bf16.mxu0 0
      %1006 = vmatmul.mubr.bf16.gmra.mrb[0].mxu0 %v931
      %v1007 = vpop.f32.mrb[0].mxu0
      %v1008 = vadd.f32 0.0, %v1007
      %v1009 = vpop.f32.mrb[0].mxu0
      %v1010 = vadd.f32 0.0, %v1009
      %v1011 = vpop.f32.mrb[0].mxu0
      %v1012 = vpop.f32.mrb[0].mxu0
      %1013 = vdwg.mxu0
      %v1014 = vadd.f32 %v927, %v967
      %v1015 = vadd.f32 %v928, %v969
      %v1016 = vadd.f32 %v929, %v1008
      %v1017 = vadd.f32 %v930, %v1010
      %v1018 = vxor.u32 %v1014, 2147483648
      %v1019 = vmul.f32 %v1018, 1.442695
      %v1020 = vpow.pop %v1019
      %v1021 = vadd.f32 %v1020, 1.0
      %v1022 = vrcp.pop %v1021
      %v1023 = vmul.f32 1.0, %v1022
      %v1024 = vxor.u32 %v1015, 2147483648
      %v1025 = vmul.f32 %v1024, 1.442695
      %v1026 = vpow.pop %v1025
      %v1027 = vadd.f32 %v1026, 1.0
      %v1028 = vrcp.pop %v1027
      %v1029 = vmul.f32 1.0, %v1028
      %v1030 = vtanh.pop %v1016
      %v1031 = vxor.u32 %v1017, 2147483648
      %v1032 = vmul.f32 %v1031, 1.442695
      %v1033 = vpow.pop %v1032
      %v1034 = vadd.f32 %v1033, 1.0
      %v1035 = vrcp.pop %v1034
      %v1036 = vmul.f32 1.0, %v1035
      %v1037 = vmul.f32 %v1029, %v921
      %v1038 = vmul.f32 %v1023, %v1030
      %v1039 = vadd.f32 %v1037, %v1038
      %v1040 = vtanh.pop %v1039
      %v1041 = vmul.f32 %v1036, %v1040
      %s1042 = scalar_lea.vmem %s132, 96
      %v1043 = vld [vmem:[%s1042] sm:$0xff]
      %v1044 = vld [vmem:[%s1042 + $0x8] sm:$0xff]
      %v1045 = vunpack.c.l.bf16 %v1043
      %v1046 = vunpack.c.h.bf16 %v1043
      %v1047 = vunpack.c.l.bf16 %v1044
      %v1048 = vunpack.c.h.bf16 %v1044
      %v1049 = vpack.c.bf16 %v1041, %v1041
      %1050 = vmatprep.subr.bf16.mxu0 %v279
      %1051 = vmatpush1.bf16.msra.mxu0 %v278
      %1052 = vmatprep.subr.bf16.mxu0 %v283
      %1053 = vmatpush1.bf16.msra.mxu0 %v282
      %1054 = vmatprep.subr.bf16.mxu0 %v287
      %1055 = vmatpush1.bf16.msra.mxu0 %v286
      %1056 = vmatprep.subr.bf16.mxu0 %v291
      %1057 = vmatpush1.bf16.msra.mxu0 %v290
      %1058 = vmatprep.subr.bf16.mxu0 %v295
      %1059 = vmatpush1.bf16.msra.mxu0 %v294
      %1060 = vmatprep.subr.bf16.mxu0 %v299
      %1061 = vmatpush1.bf16.msra.mxu0 %v298
      %1062 = vmatprep.subr.bf16.mxu0 %v303
      %1063 = vmatpush1.bf16.msra.mxu0 %v302
      %1064 = vmatprep.subr.bf16.mxu0 %v307
      %1065 = vmatpush1.bf16.msra.mxu0 %v306
      %1066 = vmatprep.subr.bf16.mxu0 0
      %1067 = vmatpush1.bf16.msra.mxu0 0
      %1068 = vmatprep.subr.bf16.mxu0 0
      %1069 = vmatpush1.bf16.msra.mxu0 0
      %1070 = vmatprep.subr.bf16.mxu0 0
      %1071 = vmatpush1.bf16.msra.mxu0 0
      %1072 = vmatprep.subr.bf16.mxu0 0
      %1073 = vmatpush1.bf16.msra.mxu0 0
      %1074 = vmatprep.subr.bf16.mxu0 0
      %1075 = vmatpush1.bf16.msra.mxu0 0
      %1076 = vmatprep.subr.bf16.mxu0 0
      %1077 = vmatpush1.bf16.msra.mxu0 0
      %1078 = vmatprep.subr.bf16.mxu0 0
      %1079 = vmatpush1.bf16.msra.mxu0 0
      %1080 = vmatprep.subr.bf16.mxu0 0
      %1081 = vmatpush1.bf16.msra.mxu0 0
      %1082 = vmatprep.mubr.bf16.mxu0 0
      %1083 = vmatmul.mubr.bf16.gmra.mrb[0].mxu0 %v1049
      %v1084 = vpop.f32.mrb[0].mxu0
      %v1085 = vadd.f32 0.0, %v1084
      %v1086 = vpop.f32.mrb[0].mxu0
      %v1087 = vadd.f32 0.0, %v1086
      %v1088 = vpop.f32.mrb[0].mxu0
      %v1089 = vpop.f32.mrb[0].mxu0
      %1090 = vdwg.mxu0
      %1091 = vmatprep.subr.bf16.mxu0 %v281
      %1092 = vmatpush1.bf16.msra.mxu0 %v280
      %1093 = vmatprep.subr.bf16.mxu0 %v285
      %1094 = vmatpush1.bf16.msra.mxu0 %v284
      %1095 = vmatprep.subr.bf16.mxu0 %v289
      %1096 = vmatpush1.bf16.msra.mxu0 %v288
      %1097 = vmatprep.subr.bf16.mxu0 %v293
      %1098 = vmatpush1.bf16.msra.mxu0 %v292
      %1099 = vmatprep.subr.bf16.mxu0 %v297
      %1100 = vmatpush1.bf16.msra.mxu0 %v296
      %1101 = vmatprep.subr.bf16.mxu0 %v301
      %1102 = vmatpush1.bf16.msra.mxu0 %v300
      %1103 = vmatprep.subr.bf16.mxu0 %v305
      %1104 = vmatpush1.bf16.msra.mxu0 %v304
      %1105 = vmatprep.subr.bf16.mxu0 %v309
      %1106 = vmatpush1.bf16.msra.mxu0 %v308
      %1107 = vmatprep.subr.bf16.mxu0 0
      %1108 = vmatpush1.bf16.msra.mxu0 0
      %1109 = vmatprep.subr.bf16.mxu0 0
      %1110 = vmatpush1.bf16.msra.mxu0 0
      %1111 = vmatprep.subr.bf16.mxu0 0
      %1112 = vmatpush1.bf16.msra.mxu0 0
      %1113 = vmatprep.subr.bf16.mxu0 0
      %1114 = vmatpush1.bf16.msra.mxu0 0
      %1115 = vmatprep.subr.bf16.mxu0 0
      %1116 = vmatpush1.bf16.msra.mxu0 0
      %1117 = vmatprep.subr.bf16.mxu0 0
      %1118 = vmatpush1.bf16.msra.mxu0 0
      %1119 = vmatprep.subr.bf16.mxu0 0
      %1120 = vmatpush1.bf16.msra.mxu0 0
      %1121 = vmatprep.subr.bf16.mxu0 0
      %1122 = vmatpush1.bf16.msra.mxu0 0
      %1123 = vmatprep.mubr.bf16.mxu0 0
      %1124 = vmatmul.mubr.bf16.gmra.mrb[0].mxu0 %v1049
      %v1125 = vpop.f32.mrb[0].mxu0
      %v1126 = vadd.f32 0.0, %v1125
      %v1127 = vpop.f32.mrb[0].mxu0
      %v1128 = vadd.f32 0.0, %v1127
      %v1129 = vpop.f32.mrb[0].mxu0
      %v1130 = vpop.f32.mrb[0].mxu0
      %1131 = vdwg.mxu0
      %v1132 = vadd.f32 %v1045, %v1085
      %v1133 = vadd.f32 %v1046, %v1087
      %v1134 = vadd.f32 %v1047, %v1126
      %v1135 = vadd.f32 %v1048, %v1128
      %v1136 = vxor.u32 %v1132, 2147483648
      %v1137 = vmul.f32 %v1136, 1.442695
      %v1138 = vpow.pop %v1137
      %v1139 = vadd.f32 %v1138, 1.0
      %v1140 = vrcp.pop %v1139
      %v1141 = vmul.f32 1.0, %v1140
      %v1142 = vxor.u32 %v1133, 2147483648
      %v1143 = vmul.f32 %v1142, 1.442695
      %v1144 = vpow.pop %v1143
      %v1145 = vadd.f32 %v1144, 1.0
      %v1146 = vrcp.pop %v1145
      %v1147 = vmul.f32 1.0, %v1146
      %v1148 = vtanh.pop %v1134
      %v1149 = vxor.u32 %v1135, 2147483648
      %v1150 = vmul.f32 %v1149, 1.442695
      %v1151 = vpow.pop %v1150
      %v1152 = vadd.f32 %v1151, 1.0
      %v1153 = vrcp.pop %v1152
      %v1154 = vmul.f32 1.0, %v1153
      %v1155 = vmul.f32 %v1147, %v1039
      %v1156 = vmul.f32 %v1141, %v1148
      %v1157 = vadd.f32 %v1155, %v1156
      %v1158 = vtanh.pop %v1157
      %v1159 = vmul.f32 %v1154, %v1158
      %s1160 = scalar_lea.vmem %s132, 112
      %v1161 = vld [vmem:[%s1160] sm:$0xff]
      %v1162 = vld [vmem:[%s1160 + $0x8] sm:$0xff]
      %v1163 = vunpack.c.l.bf16 %v1161
      %v1164 = vunpack.c.h.bf16 %v1161
      %v1165 = vunpack.c.l.bf16 %v1162
      %v1166 = vunpack.c.h.bf16 %v1162
      %v1167 = vpack.c.bf16 %v1159, %v1159
      %1168 = vmatprep.subr.bf16.mxu0 %v279
      %1169 = vmatpush1.bf16.msra.mxu0 %v278
      %1170 = vmatprep.subr.bf16.mxu0 %v283
      %1171 = vmatpush1.bf16.msra.mxu0 %v282
      %1172 = vmatprep.subr.bf16.mxu0 %v287
      %1173 = vmatpush1.bf16.msra.mxu0 %v286
      %1174 = vmatprep.subr.bf16.mxu0 %v291
      %1175 = vmatpush1.bf16.msra.mxu0 %v290
      %1176 = vmatprep.subr.bf16.mxu0 %v295
      %1177 = vmatpush1.bf16.msra.mxu0 %v294
      %1178 = vmatprep.subr.bf16.mxu0 %v299
      %1179 = vmatpush1.bf16.msra.mxu0 %v298
      %1180 = vmatprep.subr.bf16.mxu0 %v303
      %1181 = vmatpush1.bf16.msra.mxu0 %v302
      %1182 = vmatprep.subr.bf16.mxu0 %v307
      %1183 = vmatpush1.bf16.msra.mxu0 %v306
      %1184 = vmatprep.subr.bf16.mxu0 0
      %1185 = vmatpush1.bf16.msra.mxu0 0
      %1186 = vmatprep.subr.bf16.mxu0 0
      %1187 = vmatpush1.bf16.msra.mxu0 0
      %1188 = vmatprep.subr.bf16.mxu0 0
      %1189 = vmatpush1.bf16.msra.mxu0 0
      %1190 = vmatprep.subr.bf16.mxu0 0
      %1191 = vmatpush1.bf16.msra.mxu0 0
      %1192 = vmatprep.subr.bf16.mxu0 0
      %1193 = vmatpush1.bf16.msra.mxu0 0
      %1194 = vmatprep.subr.bf16.mxu0 0
      %1195 = vmatpush1.bf16.msra.mxu0 0
      %1196 = vmatprep.subr.bf16.mxu0 0
      %1197 = vmatpush1.bf16.msra.mxu0 0
      %1198 = vmatprep.subr.bf16.mxu0 0
      %1199 = vmatpush1.bf16.msra.mxu0 0
      %1200 = vmatprep.mubr.bf16.mxu0 0
      %1201 = vmatmul.mubr.bf16.gmra.mrb[0].mxu0 %v1167
      %v1202 = vpop.f32.mrb[0].mxu0
      %v1203 = vadd.f32 0.0, %v1202
      %v1204 = vpop.f32.mrb[0].mxu0
      %v1205 = vadd.f32 0.0, %v1204
      %v1206 = vpop.f32.mrb[0].mxu0
      %v1207 = vpop.f32.mrb[0].mxu0
      %1208 = vdwg.mxu0
      %1209 = vmatprep.subr.bf16.mxu0 %v281
      %1210 = vmatpush1.bf16.msra.mxu0 %v280
      %1211 = vmatprep.subr.bf16.mxu0 %v285
      %1212 = vmatpush1.bf16.msra.mxu0 %v284
      %1213 = vmatprep.subr.bf16.mxu0 %v289
      %1214 = vmatpush1.bf16.msra.mxu0 %v288
      %1215 = vmatprep.subr.bf16.mxu0 %v293
      %1216 = vmatpush1.bf16.msra.mxu0 %v292
      %1217 = vmatprep.subr.bf16.mxu0 %v297
      %1218 = vmatpush1.bf16.msra.mxu0 %v296
      %1219 = vmatprep.subr.bf16.mxu0 %v301
      %1220 = vmatpush1.bf16.msra.mxu0 %v300
      %1221 = vmatprep.subr.bf16.mxu0 %v305
      %1222 = vmatpush1.bf16.msra.mxu0 %v304
      %1223 = vmatprep.subr.bf16.mxu0 %v309
      %1224 = vmatpush1.bf16.msra.mxu0 %v308
      %1225 = vmatprep.subr.bf16.mxu0 0
      %1226 = vmatpush1.bf16.msra.mxu0 0
      %1227 = vmatprep.subr.bf16.mxu0 0
      %1228 = vmatpush1.bf16.msra.mxu0 0
      %1229 = vmatprep.subr.bf16.mxu0 0
      %1230 = vmatpush1.bf16.msra.mxu0 0
      %1231 = vmatprep.subr.bf16.mxu0 0
      %1232 = vmatpush1.bf16.msra.mxu0 0
      %1233 = vmatprep.subr.bf16.mxu0 0
      %1234 = vmatpush1.bf16.msra.mxu0 0
      %1235 = vmatprep.subr.bf16.mxu0 0
      %1236 = vmatpush1.bf16.msra.mxu0 0
      %1237 = vmatprep.subr.bf16.mxu0 0
      %1238 = vmatpush1.bf16.msra.mxu0 0
      %1239 = vmatprep.subr.bf16.mxu0 0
      %1240 = vmatpush1.bf16.msra.mxu0 0
      %1241 = vmatprep.mubr.bf16.mxu0 0
      %1242 = vmatmul.mubr.bf16.gmra.mrb[0].mxu0 %v1167
      %v1243 = vpop.f32.mrb[0].mxu0
      %v1244 = vadd.f32 0.0, %v1243
      %v1245 = vpop.f32.mrb[0].mxu0
      %v1246 = vadd.f32 0.0, %v1245
      %v1247 = vpop.f32.mrb[0].mxu0
      %v1248 = vpop.f32.mrb[0].mxu0
      %1249 = vdwg.mxu0
      %v1250 = vadd.f32 %v1163, %v1203
      %v1251 = vadd.f32 %v1164, %v1205
      %v1252 = vadd.f32 %v1165, %v1244
      %v1253 = vadd.f32 %v1166, %v1246
      %v1254 = vxor.u32 %v1250, 2147483648
      %v1255 = vmul.f32 %v1254, 1.442695
      %v1256 = vpow.pop %v1255
      %v1257 = vadd.f32 %v1256, 1.0
      %v1258 = vrcp.pop %v1257
      %v1259 = vmul.f32 1.0, %v1258
      %v1260 = vxor.u32 %v1251, 2147483648
      %v1261 = vmul.f32 %v1260, 1.442695
      %v1262 = vpow.pop %v1261
      %v1263 = vadd.f32 %v1262, 1.0
      %v1264 = vrcp.pop %v1263
      %v1265 = vmul.f32 1.0, %v1264
      %v1266 = vtanh.pop %v1252
      %v1267 = vxor.u32 %v1253, 2147483648
      %v1268 = vmul.f32 %v1267, 1.442695
      %v1269 = vpow.pop %v1268
      %v1270 = vadd.f32 %v1269, 1.0
      %v1271 = vrcp.pop %v1270
      %v1272 = vmul.f32 1.0, %v1271
      %v1273 = vmul.f32 %v1265, %v1157
      %v1274 = vmul.f32 %v1259, %v1266
      %v1275 = vadd.f32 %v1273, %v1274
      %v1276 = vtanh.pop %v1275
      %v1277 = vmul.f32 %v1272, %v1276
      %1278 = vst [vmem:[%s2] sm:$0xff] %v1277
      %1279 = vst [vmem:[#allocation2] sm:$0xff] %v1275
      // Predicated region
      $region33: #{simple_lstm_baseline.1} parent=27 // pred_check
        %p1280 = pneg %p73
      $region34: #{simple_lstm_baseline.1} parent=27 // pred_check_branch
        %1282 = sbr.rel (%p1280) target = $region36
      $region35: #{simple_lstm_baseline.1} parent=27 // pred_region
        _
      $region36: #{simple_lstm_baseline.1} parent=27 // pred_fallthru
        _
      // Predicated region
      $region37: #{simple_lstm_baseline.1} parent=27 // pred_check
        %p1283 = pneg %p73
      $region38: #{simple_lstm_baseline.1} parent=27 // pred_check_branch
        %1285 = sbr.rel (%p1283) target = $region40
      $region39: #{simple_lstm_baseline.1} parent=27 // pred_region
        _
      $region40: #{simple_lstm_baseline.1} parent=27 // pred_fallthru
        _
    $region28: #{simple_lstm_baseline.1} parent=5 // pred_fallthru
      _
    %p1286 = scmp.le.s32.totalorder 2, %s8
    // Predicated region
    $region41: #{simple_lstm_baseline.1} parent=5 // pred_check
      %p1287 = pneg %p1286
    $region42: #{simple_lstm_baseline.1} parent=5 // pred_check_branch
      %1289 = sbr.rel (%p1287) target = $region44
    $region43: #{simple_lstm_baseline.1} parent=5 // pred_region
      %s1290 = ssub.s32 %s8, 2
    $region44: #{simple_lstm_baseline.1} parent=5 // pred_fallthru
      _
  $region6: #{simple_lstm_baseline.1} parent=0 // loop_footer
    %s12 = sadd.s32 1, %s8
  $region7: #{simple_lstm_baseline.1} parent=0 // loop_footer_branch
    %7 = sbr.rel target = $region3
  $region8: #{simple_lstm_baseline.1} parent=0 // loop_exit
    _

</llo_original>
